<compile_context>
chip_gen: v7x
topology: tpu7x:2x2x1
jax: 0.10.0
libtpu: 0.0.40
codegen_flags: <defaults>
</compile_context>

<pallas_src>
import jax
import jax.numpy as jnp
from jax import lax
from jax.experimental import pallas as pl
from jax.experimental.pallas import tpu as pltpu


# ----------------------------- fused kernel ---------------------------------

def _encoder_kernel(x4_ref, w1_ref, b1_ref, w2_ref, b2_ref, wp_ref, bp_ref,
                    o_ref, h1_ref, p2_ref, flat_ref):
    # x4_ref : (1, 8, 8, 16)   mod-4 decomposed 32x32 padded image:
    #                          x4[r, c, g] = x_pad[4r + g//4, 4c + g%4]
    # w1_ref : (16, 12)        conv1 weight, row = kh*4 + kw
    # b1_ref : (1, 12)
    # w2_ref : (192, 24)       conv2 weight, row = (kh*4 + kw)*12 + ci
    # b2_ref : (1, 24)
    # wp_ref : (864, 128)      projector weight, rows permuted to flatten order
    #                          (oh*6 + ow)*24 + co, cols zero-padded 100 -> 128
    # bp_ref : (1, 128)
    # o_ref  : (1, 1, 128)
    # scratch:
    # h1_ref : (2, 2, 7, 7, 12)  conv1 output, parity-decomposed:
    #                            h1_ref[p, q, r, c, :] = relu(conv1)[2r+p, 2c+q, :]
    # p2_ref : (6, 6, 192)       conv2 im2col patches
    # flat_ref: (1, 864)         flattened conv2 output (projector input)

    w1 = w1_ref[...]                                   # (16, 12)
    b1 = b1_ref[...]                                   # (1, 12)
    w1_taps = [w1[t, :] for t in range(16)]            # hoisted weight rows

    # ---- conv1 (stride 2, pad 1) + ReLU, only the 14x14 kept positions ------
    for p in range(2):
        for q in range(2):
            acc = jnp.zeros((7, 7, 12), jnp.float32)
            for kh in range(4):
                for kw in range(4):
                    m = 2 * p + kh                     # row offset in x_pad (0..5)
                    n = 2 * q + kw                     # col offset in x_pad (0..5)
                    g = (m % 4) * 4 + (n % 4)
                    patch = x4_ref[0,
                                   m // 4:m // 4 + 7,
                                   n // 4:n // 4 + 7,
                                   g:g + 1]            # (7, 7, 1), contiguous
                    acc = acc + patch * w1_taps[kh * 4 + kw]   # -> (7, 7, 12)
            h1_ref[p, q] = jnp.maximum(acc + b1, 0.0)

    # ---- conv2 (stride 2, valid): im2col build, all contiguous slices -------
    for kh in range(4):
        for kw in range(4):
            t = kh * 4 + kw
            p2_ref[:, :, t * 12:(t + 1) * 12] = h1_ref[
                kh % 2, kw % 2,
                kh // 2:kh // 2 + 6,
                kw // 2:kw // 2 + 6, :]                # (6, 6, 12)

    w2 = w2_ref[...]                                   # (192, 24)
    b2 = b2_ref[...]                                   # (1, 24)

    # ---- conv2 MXU matmuls + flatten into the projector input vector --------
    for oh in range(6):
        row = jnp.dot(p2_ref[oh], w2,
                      preferred_element_type=jnp.float32) + b2     # (6, 24)
        for ow in range(6):
            s = (oh * 6 + ow) * 24
            flat_ref[:, s:s + 24] = row[ow:ow + 1, :]

    # ---- projector (flatten permutation folded into wp rows) ----------------
    o_ref[0] = jnp.dot(flat_ref[...], wp_ref[...],
                       preferred_element_type=jnp.float32) + bp_ref[...]


# ----------------------------- wrapper ---------------------------------------

def encoder_forward(x_nchw, kernel_params):
    """Equivalent of Encoder('mnist').forward(x) with y=None (cond_size=0)."""
    w1m, b1m, w2m, b2m, wpp, bpp = kernel_params
    B = x_nchw.shape[0]

    # Glue: NCHW -> padded 32x32 -> mod-4 row/col decomposition so every
    # stride-2 access inside the kernel is a contiguous slice.
    x = x_nchw[:, 0, :, :]                                    # (B, 28, 28)
    x = jnp.pad(x, ((0, 0), (1, 3), (1, 3)))                  # (B, 32, 32)
    x4 = x.reshape(B, 8, 4, 8, 4).transpose(0, 1, 3, 2, 4)    # (B, 8, 8, 4, 4)
    x4 = x4.reshape(B, 8, 8, 16)                              # g = mr*4 + mc

    out = pl.pallas_call(
        _encoder_kernel,
        out_shape=jax.ShapeDtypeStruct((B, 1, 128), jnp.float32),
        grid=(B,),
        in_specs=[
            pl.BlockSpec((1, 8, 8, 16), lambda b: (b, 0, 0, 0)),
            pl.BlockSpec((16, 12), lambda b: (0, 0)),
            pl.BlockSpec((1, 12), lambda b: (0, 0)),
            pl.BlockSpec((192, 24), lambda b: (0, 0)),
            pl.BlockSpec((1, 24), lambda b: (0, 0)),
            pl.BlockSpec((864, 128), lambda b: (0, 0)),
            pl.BlockSpec((1, 128), lambda b: (0, 0)),
        ],
        out_specs=pl.BlockSpec((1, 1, 128), lambda b: (b, 0, 0)),
        scratch_shapes=[
            pltpu.VMEM((2, 2, 7, 7, 12), jnp.float32),   # h1 (parity layout)
            pltpu.VMEM((6, 6, 192), jnp.float32),        # conv2 im2col patches
            pltpu.VMEM((1, 864), jnp.float32),           # flattened embedding
        ],
        compiler_params=pltpu.CompilerParams(
            dimension_semantics=("parallel",)),
    )(x4, w1m, b1m, w2m, b2m, wpp, bpp)

    return out[:, 0, :100]


# ----------------------------- params ----------------------------------------

def init_params(key):
    """Deterministic init mirroring the PyTorch parameter shapes (torch layout)."""
    ks = jax.random.split(key, 6)

    def u(k, shape, fan_in):
        bound = 1.0 / (fan_in ** 0.5)
        return jax.random.uniform(k, shape, jnp.float32, -bound, bound)

    w1 = u(ks[0], (12, 1, 4, 4), 1 * 4 * 4)      # conv1.weight (OIHW)
    b1 = u(ks[1], (12,), 1 * 4 * 4)              # conv1.bias
    w2 = u(ks[2], (24, 12, 4, 4), 12 * 4 * 4)    # conv2.weight (OIHW)
    b2 = u(ks[3], (24,), 12 * 4 * 4)             # conv2.bias
    wp = u(ks[4], (100, 864), 864)               # projector.weight
    bp = u(ks[5], (100,), 864)                   # projector.bias
    return (w1, b1, w2, b2, wp, bp)


def prepare_params(torch_params):
    """One-time conversion of torch-layout params to the kernel layouts."""
    w1, b1, w2, b2, wp, bp = torch_params
    # Conv weights OIHW -> matmul layouts.
    w1m = jnp.transpose(w1, (2, 3, 1, 0)).reshape(16, 12)      # row = kh*4+kw
    w2m = jnp.transpose(w2, (2, 3, 1, 0)).reshape(192, 24)     # row = (kh*4+kw)*12+ci
    # Projector: fold the (C,H,W) flatten order into the weight rows
    # (row = (oh*6+ow)*24 + co) and zero-pad the output dim 100 -> 128.
    wpp = jnp.transpose(wp.reshape(100, 24, 6, 6), (2, 3, 1, 0)).reshape(864, 100)
    wpp = jnp.pad(wpp, ((0, 0), (0, 28)))
    bpp = jnp.pad(bp, (0, 28)).reshape(1, 128)
    return (w1m, b1.reshape(1, 12), w2m, b2.reshape(1, 24), wpp, bpp)


# ----------------------------- reference --------------------------------------

def reference_forward(x_nchw, torch_params):
    w1, b1, w2, b2, wp, bp = torch_params
    x = jnp.transpose(x_nchw, (0, 2, 3, 1))
    w1h = jnp.transpose(w1, (2, 3, 1, 0))
    w2h = jnp.transpose(w2, (2, 3, 1, 0))
    y = lax.conv_general_dilated(x, w1h, (2, 2), ((1, 1), (1, 1)),
                                 dimension_numbers=("NHWC", "HWIO", "NHWC"),
                                 precision=lax.Precision.HIGHEST) + b1
    y = jnp.maximum(y, 0.0)
    y = lax.conv_general_dilated(y, w2h, (2, 2), "VALID",
                                 dimension_numbers=("NHWC", "HWIO", "NHWC"),
                                 precision=lax.Precision.HIGHEST) + b2
    flat = jnp.transpose(y, (0, 3, 1, 2)).reshape(x_nchw.shape[0], -1)
    return jnp.dot(flat, wp.T, precision=lax.Precision.HIGHEST) + bp


# ----------------------------- main --------------------------------------------

if __name__ == "__main__":
    key = jax.random.PRNGKey(0)
    kx, kp = jax.random.split(key)
    x = jax.random.normal(kx, (2, 1, 28, 28), jnp.float32)   # NCHW like PyTorch
    torch_params = init_params(kp)
    kernel_params = prepare_params(torch_params)

    out = jax.jit(encoder_forward)(x, kernel_params)
    out = jax.block_until_ready(out)
    assert out.shape == (2, 100), out.shape

    ref = reference_forward(x, torch_params)
    max_err = float(jnp.max(jnp.abs(out - ref)))
    if max_err > 2e-3:
        raise AssertionError(f"Pallas output mismatch, max abs err = {max_err}")

    print("KERNEL_OK")
</pallas_src>

<mosaic_0001>
module attributes {stable_mosaic.version = 11 : i64} {
  func.func @_encoder_kernel(%arg0: i32, %arg1: memref<1x8x8x16xf32, #tpu.memory_space<vmem>>, %arg2: memref<16x12xf32, #tpu.memory_space<vmem>>, %arg3: memref<1x12xf32, #tpu.memory_space<vmem>>, %arg4: memref<192x24xf32, #tpu.memory_space<vmem>>, %arg5: memref<1x24xf32, #tpu.memory_space<vmem>>, %arg6: memref<864x128xf32, #tpu.memory_space<vmem>>, %arg7: memref<1x128xf32, #tpu.memory_space<vmem>>, %arg8: memref<1x1x128xf32, #tpu.memory_space<vmem>>, %arg9: memref<2x2x7x7x12xf32, #tpu.memory_space<vmem>>, %arg10: memref<6x6x192xf32, #tpu.memory_space<vmem>>, %arg11: memref<1x864xf32, #tpu.memory_space<vmem>>) attributes {dimension_semantics = [#tpu.dimension_semantics<parallel>], iteration_bounds = array<i64: 2>, scalar_prefetch = 0 : i64, scratch_operands = 3 : i64, tpu.core_type = #tpu.core_type<tc>, window_params = [{transform_indices = @transform_0, window_bounds = array<i64: 1, 8, 8, 16>}, {pipeline_mode = #tpu.pipeline_mode<synchronous>, transform_indices = @transform_1, window_bounds = array<i64: 16, 12>}, {pipeline_mode = #tpu.pipeline_mode<synchronous>, transform_indices = @transform_2, window_bounds = array<i64: 1, 12>}, {pipeline_mode = #tpu.pipeline_mode<synchronous>, transform_indices = @transform_3, window_bounds = array<i64: 192, 24>}, {pipeline_mode = #tpu.pipeline_mode<synchronous>, transform_indices = @transform_4, window_bounds = array<i64: 1, 24>}, {pipeline_mode = #tpu.pipeline_mode<synchronous>, transform_indices = @transform_5, window_bounds = array<i64: 864, 128>}, {pipeline_mode = #tpu.pipeline_mode<synchronous>, transform_indices = @transform_6, window_bounds = array<i64: 1, 128>}, {transform_indices = @transform_7, window_bounds = array<i64: 1, 1, 128>}]} {
    %c0 = arith.constant 0 : index
    %c0_0 = arith.constant 0 : index
    %0 = vector.load %arg2[%c0, %c0_0] : memref<16x12xf32, #tpu.memory_space<vmem>>, vector<16x12xf32>
    %c0_1 = arith.constant 0 : index
    %c0_2 = arith.constant 0 : index
    %1 = vector.load %arg3[%c0_1, %c0_2] : memref<1x12xf32, #tpu.memory_space<vmem>>, vector<1x12xf32>
    %2 = vector.extract_strided_slice %0 {offsets = [0, 0], sizes = [1, 12], strides = [1, 1]} : vector<16x12xf32> to vector<1x12xf32>
    %3 = vector.shape_cast %2 : vector<1x12xf32> to vector<12xf32>
    %4 = vector.extract_strided_slice %0 {offsets = [1, 0], sizes = [1, 12], strides = [1, 1]} : vector<16x12xf32> to vector<1x12xf32>
    %5 = vector.shape_cast %4 : vector<1x12xf32> to vector<12xf32>
    %6 = vector.extract_strided_slice %0 {offsets = [2, 0], sizes = [1, 12], strides = [1, 1]} : vector<16x12xf32> to vector<1x12xf32>
    %7 = vector.shape_cast %6 : vector<1x12xf32> to vector<12xf32>
    %8 = vector.extract_strided_slice %0 {offsets = [3, 0], sizes = [1, 12], strides = [1, 1]} : vector<16x12xf32> to vector<1x12xf32>
    %9 = vector.shape_cast %8 : vector<1x12xf32> to vector<12xf32>
    %10 = vector.extract_strided_slice %0 {offsets = [4, 0], sizes = [1, 12], strides = [1, 1]} : vector<16x12xf32> to vector<1x12xf32>
    %11 = vector.shape_cast %10 : vector<1x12xf32> to vector<12xf32>
    %12 = vector.extract_strided_slice %0 {offsets = [5, 0], sizes = [1, 12], strides = [1, 1]} : vector<16x12xf32> to vector<1x12xf32>
    %13 = vector.shape_cast %12 : vector<1x12xf32> to vector<12xf32>
    %14 = vector.extract_strided_slice %0 {offsets = [6, 0], sizes = [1, 12], strides = [1, 1]} : vector<16x12xf32> to vector<1x12xf32>
    %15 = vector.shape_cast %14 : vector<1x12xf32> to vector<12xf32>
    %16 = vector.extract_strided_slice %0 {offsets = [7, 0], sizes = [1, 12], strides = [1, 1]} : vector<16x12xf32> to vector<1x12xf32>
    %17 = vector.shape_cast %16 : vector<1x12xf32> to vector<12xf32>
    %18 = vector.extract_strided_slice %0 {offsets = [8, 0], sizes = [1, 12], strides = [1, 1]} : vector<16x12xf32> to vector<1x12xf32>
    %19 = vector.shape_cast %18 : vector<1x12xf32> to vector<12xf32>
    %20 = vector.extract_strided_slice %0 {offsets = [9, 0], sizes = [1, 12], strides = [1, 1]} : vector<16x12xf32> to vector<1x12xf32>
    %21 = vector.shape_cast %20 : vector<1x12xf32> to vector<12xf32>
    %22 = vector.extract_strided_slice %0 {offsets = [10, 0], sizes = [1, 12], strides = [1, 1]} : vector<16x12xf32> to vector<1x12xf32>
    %23 = vector.shape_cast %22 : vector<1x12xf32> to vector<12xf32>
    %24 = vector.extract_strided_slice %0 {offsets = [11, 0], sizes = [1, 12], strides = [1, 1]} : vector<16x12xf32> to vector<1x12xf32>
    %25 = vector.shape_cast %24 : vector<1x12xf32> to vector<12xf32>
    %26 = vector.extract_strided_slice %0 {offsets = [12, 0], sizes = [1, 12], strides = [1, 1]} : vector<16x12xf32> to vector<1x12xf32>
    %27 = vector.shape_cast %26 : vector<1x12xf32> to vector<12xf32>
    %28 = vector.extract_strided_slice %0 {offsets = [13, 0], sizes = [1, 12], strides = [1, 1]} : vector<16x12xf32> to vector<1x12xf32>
    %29 = vector.shape_cast %28 : vector<1x12xf32> to vector<12xf32>
    %30 = vector.extract_strided_slice %0 {offsets = [14, 0], sizes = [1, 12], strides = [1, 1]} : vector<16x12xf32> to vector<1x12xf32>
    %31 = vector.shape_cast %30 : vector<1x12xf32> to vector<12xf32>
    %32 = vector.extract_strided_slice %0 {offsets = [15, 0], sizes = [1, 12], strides = [1, 1]} : vector<16x12xf32> to vector<1x12xf32>
    %33 = vector.shape_cast %32 : vector<1x12xf32> to vector<12xf32>
    %cst = arith.constant 0.000000e+00 : f32
    %34 = vector.broadcast %cst : f32 to vector<7x7x12xf32>
    %c0_3 = arith.constant 0 : index
    %c0_4 = arith.constant 0 : index
    %c0_5 = arith.constant 0 : index
    %c0_6 = arith.constant 0 : index
    %35 = vector.load %arg1[%c0_3, %c0_4, %c0_5, %c0_6] : memref<1x8x8x16xf32, #tpu.memory_space<vmem>>, vector<1x7x7x1xf32>
    %36 = vector.shape_cast %35 : vector<1x7x7x1xf32> to vector<7x7x1xf32>
    %37 = vector.shape_cast %3 : vector<12xf32> to vector<1x1x12xf32>
    %38 = vector.broadcast %36 : vector<7x7x1xf32> to vector<7x7x12xf32>
    %39 = vector.broadcast %37 : vector<1x1x12xf32> to vector<7x7x12xf32>
    %40 = arith.mulf %38, %39 : vector<7x7x12xf32>
    %41 = arith.addf %34, %40 : vector<7x7x12xf32>
    %c0_7 = arith.constant 0 : index
    %c0_8 = arith.constant 0 : index
    %c0_9 = arith.constant 0 : index
    %c1 = arith.constant 1 : index
    %42 = vector.load %arg1[%c0_7, %c0_8, %c0_9, %c1] : memref<1x8x8x16xf32, #tpu.memory_space<vmem>>, vector<1x7x7x1xf32>
    %43 = vector.shape_cast %42 : vector<1x7x7x1xf32> to vector<7x7x1xf32>
    %44 = vector.shape_cast %5 : vector<12xf32> to vector<1x1x12xf32>
    %45 = vector.broadcast %43 : vector<7x7x1xf32> to vector<7x7x12xf32>
    %46 = vector.broadcast %44 : vector<1x1x12xf32> to vector<7x7x12xf32>
    %47 = arith.mulf %45, %46 : vector<7x7x12xf32>
    %48 = arith.addf %41, %47 : vector<7x7x12xf32>
    %c0_10 = arith.constant 0 : index
    %c0_11 = arith.constant 0 : index
    %c0_12 = arith.constant 0 : index
    %c2 = arith.constant 2 : index
    %49 = vector.load %arg1[%c0_10, %c0_11, %c0_12, %c2] : memref<1x8x8x16xf32, #tpu.memory_space<vmem>>, vector<1x7x7x1xf32>
    %50 = vector.shape_cast %49 : vector<1x7x7x1xf32> to vector<7x7x1xf32>
    %51 = vector.shape_cast %7 : vector<12xf32> to vector<1x1x12xf32>
    %52 = vector.broadcast %50 : vector<7x7x1xf32> to vector<7x7x12xf32>
    %53 = vector.broadcast %51 : vector<1x1x12xf32> to vector<7x7x12xf32>
    %54 = arith.mulf %52, %53 : vector<7x7x12xf32>
    %55 = arith.addf %48, %54 : vector<7x7x12xf32>
    %c0_13 = arith.constant 0 : index
    %c0_14 = arith.constant 0 : index
    %c0_15 = arith.constant 0 : index
    %c3 = arith.constant 3 : index
    %56 = vector.load %arg1[%c0_13, %c0_14, %c0_15, %c3] : memref<1x8x8x16xf32, #tpu.memory_space<vmem>>, vector<1x7x7x1xf32>
    %57 = vector.shape_cast %56 : vector<1x7x7x1xf32> to vector<7x7x1xf32>
    %58 = vector.shape_cast %9 : vector<12xf32> to vector<1x1x12xf32>
    %59 = vector.broadcast %57 : vector<7x7x1xf32> to vector<7x7x12xf32>
    %60 = vector.broadcast %58 : vector<1x1x12xf32> to vector<7x7x12xf32>
    %61 = arith.mulf %59, %60 : vector<7x7x12xf32>
    %62 = arith.addf %55, %61 : vector<7x7x12xf32>
    %c0_16 = arith.constant 0 : index
    %c0_17 = arith.constant 0 : index
    %c0_18 = arith.constant 0 : index
    %c4 = arith.constant 4 : index
    %63 = vector.load %arg1[%c0_16, %c0_17, %c0_18, %c4] : memref<1x8x8x16xf32, #tpu.memory_space<vmem>>, vector<1x7x7x1xf32>
    %64 = vector.shape_cast %63 : vector<1x7x7x1xf32> to vector<7x7x1xf32>
    %65 = vector.shape_cast %11 : vector<12xf32> to vector<1x1x12xf32>
    %66 = vector.broadcast %64 : vector<7x7x1xf32> to vector<7x7x12xf32>
    %67 = vector.broadcast %65 : vector<1x1x12xf32> to vector<7x7x12xf32>
    %68 = arith.mulf %66, %67 : vector<7x7x12xf32>
    %69 = arith.addf %62, %68 : vector<7x7x12xf32>
    %c0_19 = arith.constant 0 : index
    %c0_20 = arith.constant 0 : index
    %c0_21 = arith.constant 0 : index
    %c5 = arith.constant 5 : index
    %70 = vector.load %arg1[%c0_19, %c0_20, %c0_21, %c5] : memref<1x8x8x16xf32, #tpu.memory_space<vmem>>, vector<1x7x7x1xf32>
    %71 = vector.shape_cast %70 : vector<1x7x7x1xf32> to vector<7x7x1xf32>
    %72 = vector.shape_cast %13 : vector<12xf32> to vector<1x1x12xf32>
    %73 = vector.broadcast %71 : vector<7x7x1xf32> to vector<7x7x12xf32>
    %74 = vector.broadcast %72 : vector<1x1x12xf32> to vector<7x7x12xf32>
    %75 = arith.mulf %73, %74 : vector<7x7x12xf32>
    %76 = arith.addf %69, %75 : vector<7x7x12xf32>
    %c0_22 = arith.constant 0 : index
    %c0_23 = arith.constant 0 : index
    %c0_24 = arith.constant 0 : index
    %c6 = arith.constant 6 : index
    %77 = vector.load %arg1[%c0_22, %c0_23, %c0_24, %c6] : memref<1x8x8x16xf32, #tpu.memory_space<vmem>>, vector<1x7x7x1xf32>
    %78 = vector.shape_cast %77 : vector<1x7x7x1xf32> to vector<7x7x1xf32>
    %79 = vector.shape_cast %15 : vector<12xf32> to vector<1x1x12xf32>
    %80 = vector.broadcast %78 : vector<7x7x1xf32> to vector<7x7x12xf32>
    %81 = vector.broadcast %79 : vector<1x1x12xf32> to vector<7x7x12xf32>
    %82 = arith.mulf %80, %81 : vector<7x7x12xf32>
    %83 = arith.addf %76, %82 : vector<7x7x12xf32>
    %c0_25 = arith.constant 0 : index
    %c0_26 = arith.constant 0 : index
    %c0_27 = arith.constant 0 : index
    %c7 = arith.constant 7 : index
    %84 = vector.load %arg1[%c0_25, %c0_26, %c0_27, %c7] : memref<1x8x8x16xf32, #tpu.memory_space<vmem>>, vector<1x7x7x1xf32>
    %85 = vector.shape_cast %84 : vector<1x7x7x1xf32> to vector<7x7x1xf32>
    %86 = vector.shape_cast %17 : vector<12xf32> to vector<1x1x12xf32>
    %87 = vector.broadcast %85 : vector<7x7x1xf32> to vector<7x7x12xf32>
    %88 = vector.broadcast %86 : vector<1x1x12xf32> to vector<7x7x12xf32>
    %89 = arith.mulf %87, %88 : vector<7x7x12xf32>
    %90 = arith.addf %83, %89 : vector<7x7x12xf32>
    %c0_28 = arith.constant 0 : index
    %c0_29 = arith.constant 0 : index
    %c0_30 = arith.constant 0 : index
    %c8 = arith.constant 8 : index
    %91 = vector.load %arg1[%c0_28, %c0_29, %c0_30, %c8] : memref<1x8x8x16xf32, #tpu.memory_space<vmem>>, vector<1x7x7x1xf32>
    %92 = vector.shape_cast %91 : vector<1x7x7x1xf32> to vector<7x7x1xf32>
    %93 = vector.shape_cast %19 : vector<12xf32> to vector<1x1x12xf32>
    %94 = vector.broadcast %92 : vector<7x7x1xf32> to vector<7x7x12xf32>
    %95 = vector.broadcast %93 : vector<1x1x12xf32> to vector<7x7x12xf32>
    %96 = arith.mulf %94, %95 : vector<7x7x12xf32>
    %97 = arith.addf %90, %96 : vector<7x7x12xf32>
    %c0_31 = arith.constant 0 : index
    %c0_32 = arith.constant 0 : index
    %c0_33 = arith.constant 0 : index
    %c9 = arith.constant 9 : index
    %98 = vector.load %arg1[%c0_31, %c0_32, %c0_33, %c9] : memref<1x8x8x16xf32, #tpu.memory_space<vmem>>, vector<1x7x7x1xf32>
    %99 = vector.shape_cast %98 : vector<1x7x7x1xf32> to vector<7x7x1xf32>
    %100 = vector.shape_cast %21 : vector<12xf32> to vector<1x1x12xf32>
    %101 = vector.broadcast %99 : vector<7x7x1xf32> to vector<7x7x12xf32>
    %102 = vector.broadcast %100 : vector<1x1x12xf32> to vector<7x7x12xf32>
    %103 = arith.mulf %101, %102 : vector<7x7x12xf32>
    %104 = arith.addf %97, %103 : vector<7x7x12xf32>
    %c0_34 = arith.constant 0 : index
    %c0_35 = arith.constant 0 : index
    %c0_36 = arith.constant 0 : index
    %c10 = arith.constant 10 : index
    %105 = vector.load %arg1[%c0_34, %c0_35, %c0_36, %c10] : memref<1x8x8x16xf32, #tpu.memory_space<vmem>>, vector<1x7x7x1xf32>
    %106 = vector.shape_cast %105 : vector<1x7x7x1xf32> to vector<7x7x1xf32>
    %107 = vector.shape_cast %23 : vector<12xf32> to vector<1x1x12xf32>
    %108 = vector.broadcast %106 : vector<7x7x1xf32> to vector<7x7x12xf32>
    %109 = vector.broadcast %107 : vector<1x1x12xf32> to vector<7x7x12xf32>
    %110 = arith.mulf %108, %109 : vector<7x7x12xf32>
    %111 = arith.addf %104, %110 : vector<7x7x12xf32>
    %c0_37 = arith.constant 0 : index
    %c0_38 = arith.constant 0 : index
    %c0_39 = arith.constant 0 : index
    %c11 = arith.constant 11 : index
    %112 = vector.load %arg1[%c0_37, %c0_38, %c0_39, %c11] : memref<1x8x8x16xf32, #tpu.memory_space<vmem>>, vector<1x7x7x1xf32>
    %113 = vector.shape_cast %112 : vector<1x7x7x1xf32> to vector<7x7x1xf32>
    %114 = vector.shape_cast %25 : vector<12xf32> to vector<1x1x12xf32>
    %115 = vector.broadcast %113 : vector<7x7x1xf32> to vector<7x7x12xf32>
    %116 = vector.broadcast %114 : vector<1x1x12xf32> to vector<7x7x12xf32>
    %117 = arith.mulf %115, %116 : vector<7x7x12xf32>
    %118 = arith.addf %111, %117 : vector<7x7x12xf32>
    %c0_40 = arith.constant 0 : index
    %c0_41 = arith.constant 0 : index
    %c0_42 = arith.constant 0 : index
    %c12 = arith.constant 12 : index
    %119 = vector.load %arg1[%c0_40, %c0_41, %c0_42, %c12] : memref<1x8x8x16xf32, #tpu.memory_space<vmem>>, vector<1x7x7x1xf32>
    %120 = vector.shape_cast %119 : vector<1x7x7x1xf32> to vector<7x7x1xf32>
    %121 = vector.shape_cast %27 : vector<12xf32> to vector<1x1x12xf32>
    %122 = vector.broadcast %120 : vector<7x7x1xf32> to vector<7x7x12xf32>
    %123 = vector.broadcast %121 : vector<1x1x12xf32> to vector<7x7x12xf32>
    %124 = arith.mulf %122, %123 : vector<7x7x12xf32>
    %125 = arith.addf %118, %124 : vector<7x7x12xf32>
    %c0_43 = arith.constant 0 : index
    %c0_44 = arith.constant 0 : index
    %c0_45 = arith.constant 0 : index
    %c13 = arith.constant 13 : index
    %126 = vector.load %arg1[%c0_43, %c0_44, %c0_45, %c13] : memref<1x8x8x16xf32, #tpu.memory_space<vmem>>, vector<1x7x7x1xf32>
    %127 = vector.shape_cast %126 : vector<1x7x7x1xf32> to vector<7x7x1xf32>
    %128 = vector.shape_cast %29 : vector<12xf32> to vector<1x1x12xf32>
    %129 = vector.broadcast %127 : vector<7x7x1xf32> to vector<7x7x12xf32>
    %130 = vector.broadcast %128 : vector<1x1x12xf32> to vector<7x7x12xf32>
    %131 = arith.mulf %129, %130 : vector<7x7x12xf32>
    %132 = arith.addf %125, %131 : vector<7x7x12xf32>
    %c0_46 = arith.constant 0 : index
    %c0_47 = arith.constant 0 : index
    %c0_48 = arith.constant 0 : index
    %c14 = arith.constant 14 : index
    %133 = vector.load %arg1[%c0_46, %c0_47, %c0_48, %c14] : memref<1x8x8x16xf32, #tpu.memory_space<vmem>>, vector<1x7x7x1xf32>
    %134 = vector.shape_cast %133 : vector<1x7x7x1xf32> to vector<7x7x1xf32>
    %135 = vector.shape_cast %31 : vector<12xf32> to vector<1x1x12xf32>
    %136 = vector.broadcast %134 : vector<7x7x1xf32> to vector<7x7x12xf32>
    %137 = vector.broadcast %135 : vector<1x1x12xf32> to vector<7x7x12xf32>
    %138 = arith.mulf %136, %137 : vector<7x7x12xf32>
    %139 = arith.addf %132, %138 : vector<7x7x12xf32>
    %c0_49 = arith.constant 0 : index
    %c0_50 = arith.constant 0 : index
    %c0_51 = arith.constant 0 : index
    %c15 = arith.constant 15 : index
    %140 = vector.load %arg1[%c0_49, %c0_50, %c0_51, %c15] : memref<1x8x8x16xf32, #tpu.memory_space<vmem>>, vector<1x7x7x1xf32>
    %141 = vector.shape_cast %140 : vector<1x7x7x1xf32> to vector<7x7x1xf32>
    %142 = vector.shape_cast %33 : vector<12xf32> to vector<1x1x12xf32>
    %143 = vector.broadcast %141 : vector<7x7x1xf32> to vector<7x7x12xf32>
    %144 = vector.broadcast %142 : vector<1x1x12xf32> to vector<7x7x12xf32>
    %145 = arith.mulf %143, %144 : vector<7x7x12xf32>
    %146 = arith.addf %139, %145 : vector<7x7x12xf32>
    %147 = vector.shape_cast %1 : vector<1x12xf32> to vector<1x1x12xf32>
    %148 = vector.broadcast %147 : vector<1x1x12xf32> to vector<7x7x12xf32>
    %149 = arith.addf %146, %148 : vector<7x7x12xf32>
    %cst_52 = arith.constant 0.000000e+00 : f32
    %150 = vector.broadcast %cst_52 : f32 to vector<7x7x12xf32>
    %151 = arith.maximumf %149, %150 : vector<7x7x12xf32>
    %c0_53 = arith.constant 0 : index
    %c0_54 = arith.constant 0 : index
    %c0_55 = arith.constant 0 : index
    %c0_56 = arith.constant 0 : index
    %c0_57 = arith.constant 0 : index
    %152 = vector.load %arg9[%c0_53, %c0_54, %c0_55, %c0_56, %c0_57] : memref<2x2x7x7x12xf32, #tpu.memory_space<vmem>>, vector<1x1x7x7x12xf32>
    %153 = vector.shape_cast %152 : vector<1x1x7x7x12xf32> to vector<7x7x12xf32>
    %154 = vector.shape_cast %151 : vector<7x7x12xf32> to vector<1x1x7x7x12xf32>
    tpu.vector_store %arg9[%c0_53, %c0_54, %c0_55, %c0_56, %c0_57], %154 {strides = array<i32>} : memref<2x2x7x7x12xf32, #tpu.memory_space<vmem>>, vector<1x1x7x7x12xf32>,
    %cst_58 = arith.constant 0.000000e+00 : f32
    %155 = vector.broadcast %cst_58 : f32 to vector<7x7x12xf32>
    %c0_59 = arith.constant 0 : index
    %c0_60 = arith.constant 0 : index
    %c0_61 = arith.constant 0 : index
    %c2_62 = arith.constant 2 : index
    %156 = vector.load %arg1[%c0_59, %c0_60, %c0_61, %c2_62] : memref<1x8x8x16xf32, #tpu.memory_space<vmem>>, vector<1x7x7x1xf32>
    %157 = vector.shape_cast %156 : vector<1x7x7x1xf32> to vector<7x7x1xf32>
    %158 = vector.shape_cast %3 : vector<12xf32> to vector<1x1x12xf32>
    %159 = vector.broadcast %157 : vector<7x7x1xf32> to vector<7x7x12xf32>
    %160 = vector.broadcast %158 : vector<1x1x12xf32> to vector<7x7x12xf32>
    %161 = arith.mulf %159, %160 : vector<7x7x12xf32>
    %162 = arith.addf %155, %161 : vector<7x7x12xf32>
    %c0_63 = arith.constant 0 : index
    %c0_64 = arith.constant 0 : index
    %c0_65 = arith.constant 0 : index
    %c3_66 = arith.constant 3 : index
    %163 = vector.load %arg1[%c0_63, %c0_64, %c0_65, %c3_66] : memref<1x8x8x16xf32, #tpu.memory_space<vmem>>, vector<1x7x7x1xf32>
    %164 = vector.shape_cast %163 : vector<1x7x7x1xf32> to vector<7x7x1xf32>
    %165 = vector.shape_cast %5 : vector<12xf32> to vector<1x1x12xf32>
    %166 = vector.broadcast %164 : vector<7x7x1xf32> to vector<7x7x12xf32>
    %167 = vector.broadcast %165 : vector<1x1x12xf32> to vector<7x7x12xf32>
    %168 = arith.mulf %166, %167 : vector<7x7x12xf32>
    %169 = arith.addf %162, %168 : vector<7x7x12xf32>
    %c0_67 = arith.constant 0 : index
    %c0_68 = arith.constant 0 : index
    %c1_69 = arith.constant 1 : index
    %c0_70 = arith.constant 0 : index
    %170 = vector.load %arg1[%c0_67, %c0_68, %c1_69, %c0_70] : memref<1x8x8x16xf32, #tpu.memory_space<vmem>>, vector<1x7x7x1xf32>
    %171 = vector.shape_cast %170 : vector<1x7x7x1xf32> to vector<7x7x1xf32>
    %172 = vector.shape_cast %7 : vector<12xf32> to vector<1x1x12xf32>
    %173 = vector.broadcast %171 : vector<7x7x1xf32> to vector<7x7x12xf32>
    %174 = vector.broadcast %172 : vector<1x1x12xf32> to vector<7x7x12xf32>
    %175 = arith.mulf %173, %174 : vector<7x7x12xf32>
    %176 = arith.addf %169, %175 : vector<7x7x12xf32>
    %c0_71 = arith.constant 0 : index
    %c0_72 = arith.constant 0 : index
    %c1_73 = arith.constant 1 : index
    %c1_74 = arith.constant 1 : index
    %177 = vector.load %arg1[%c0_71, %c0_72, %c1_73, %c1_74] : memref<1x8x8x16xf32, #tpu.memory_space<vmem>>, vector<1x7x7x1xf32>
    %178 = vector.shape_cast %177 : vector<1x7x7x1xf32> to vector<7x7x1xf32>
    %179 = vector.shape_cast %9 : vector<12xf32> to vector<1x1x12xf32>
    %180 = vector.broadcast %178 : vector<7x7x1xf32> to vector<7x7x12xf32>
    %181 = vector.broadcast %179 : vector<1x1x12xf32> to vector<7x7x12xf32>
    %182 = arith.mulf %180, %181 : vector<7x7x12xf32>
    %183 = arith.addf %176, %182 : vector<7x7x12xf32>
    %c0_75 = arith.constant 0 : index
    %c0_76 = arith.constant 0 : index
    %c0_77 = arith.constant 0 : index
    %c6_78 = arith.constant 6 : index
    %184 = vector.load %arg1[%c0_75, %c0_76, %c0_77, %c6_78] : memref<1x8x8x16xf32, #tpu.memory_space<vmem>>, vector<1x7x7x1xf32>
    %185 = vector.shape_cast %184 : vector<1x7x7x1xf32> to vector<7x7x1xf32>
    %186 = vector.shape_cast %11 : vector<12xf32> to vector<1x1x12xf32>
    %187 = vector.broadcast %185 : vector<7x7x1xf32> to vector<7x7x12xf32>
    %188 = vector.broadcast %186 : vector<1x1x12xf32> to vector<7x7x12xf32>
    %189 = arith.mulf %187, %188 : vector<7x7x12xf32>
    %190 = arith.addf %183, %189 : vector<7x7x12xf32>
    %c0_79 = arith.constant 0 : index
    %c0_80 = arith.constant 0 : index
    %c0_81 = arith.constant 0 : index
    %c7_82 = arith.constant 7 : index
    %191 = vector.load %arg1[%c0_79, %c0_80, %c0_81, %c7_82] : memref<1x8x8x16xf32, #tpu.memory_space<vmem>>, vector<1x7x7x1xf32>
    %192 = vector.shape_cast %191 : vector<1x7x7x1xf32> to vector<7x7x1xf32>
    %193 = vector.shape_cast %13 : vector<12xf32> to vector<1x1x12xf32>
    %194 = vector.broadcast %192 : vector<7x7x1xf32> to vector<7x7x12xf32>
    %195 = vector.broadcast %193 : vector<1x1x12xf32> to vector<7x7x12xf32>
    %196 = arith.mulf %194, %195 : vector<7x7x12xf32>
    %197 = arith.addf %190, %196 : vector<7x7x12xf32>
    %c0_83 = arith.constant 0 : index
    %c0_84 = arith.constant 0 : index
    %c1_85 = arith.constant 1 : index
    %c4_86 = arith.constant 4 : index
    %198 = vector.load %arg1[%c0_83, %c0_84, %c1_85, %c4_86] : memref<1x8x8x16xf32, #tpu.memory_space<vmem>>, vector<1x7x7x1xf32>
    %199 = vector.shape_cast %198 : vector<1x7x7x1xf32> to vector<7x7x1xf32>
    %200 = vector.shape_cast %15 : vector<12xf32> to vector<1x1x12xf32>
    %201 = vector.broadcast %199 : vector<7x7x1xf32> to vector<7x7x12xf32>
    %202 = vector.broadcast %200 : vector<1x1x12xf32> to vector<7x7x12xf32>
    %203 = arith.mulf %201, %202 : vector<7x7x12xf32>
    %204 = arith.addf %197, %203 : vector<7x7x12xf32>
    %c0_87 = arith.constant 0 : index
    %c0_88 = arith.constant 0 : index
    %c1_89 = arith.constant 1 : index
    %c5_90 = arith.constant 5 : index
    %205 = vector.load %arg1[%c0_87, %c0_88, %c1_89, %c5_90] : memref<1x8x8x16xf32, #tpu.memory_space<vmem>>, vector<1x7x7x1xf32>
    %206 = vector.shape_cast %205 : vector<1x7x7x1xf32> to vector<7x7x1xf32>
    %207 = vector.shape_cast %17 : vector<12xf32> to vector<1x1x12xf32>
    %208 = vector.broadcast %206 : vector<7x7x1xf32> to vector<7x7x12xf32>
    %209 = vector.broadcast %207 : vector<1x1x12xf32> to vector<7x7x12xf32>
    %210 = arith.mulf %208, %209 : vector<7x7x12xf32>
    %211 = arith.addf %204, %210 : vector<7x7x12xf32>
    %c0_91 = arith.constant 0 : index
    %c0_92 = arith.constant 0 : index
    %c0_93 = arith.constant 0 : index
    %c10_94 = arith.constant 10 : index
    %212 = vector.load %arg1[%c0_91, %c0_92, %c0_93, %c10_94] : memref<1x8x8x16xf32, #tpu.memory_space<vmem>>, vector<1x7x7x1xf32>
    %213 = vector.shape_cast %212 : vector<1x7x7x1xf32> to vector<7x7x1xf32>
    %214 = vector.shape_cast %19 : vector<12xf32> to vector<1x1x12xf32>
    %215 = vector.broadcast %213 : vector<7x7x1xf32> to vector<7x7x12xf32>
    %216 = vector.broadcast %214 : vector<1x1x12xf32> to vector<7x7x12xf32>
    %217 = arith.mulf %215, %216 : vector<7x7x12xf32>
    %218 = arith.addf %211, %217 : vector<7x7x12xf32>
    %c0_95 = arith.constant 0 : index
    %c0_96 = arith.constant 0 : index
    %c0_97 = arith.constant 0 : index
    %c11_98 = arith.constant 11 : index
    %219 = vector.load %arg1[%c0_95, %c0_96, %c0_97, %c11_98] : memref<1x8x8x16xf32, #tpu.memory_space<vmem>>, vector<1x7x7x1xf32>
    %220 = vector.shape_cast %219 : vector<1x7x7x1xf32> to vector<7x7x1xf32>
    %221 = vector.shape_cast %21 : vector<12xf32> to vector<1x1x12xf32>
    %222 = vector.broadcast %220 : vector<7x7x1xf32> to vector<7x7x12xf32>
    %223 = vector.broadcast %221 : vector<1x1x12xf32> to vector<7x7x12xf32>
    %224 = arith.mulf %222, %223 : vector<7x7x12xf32>
    %225 = arith.addf %218, %224 : vector<7x7x12xf32>
    %c0_99 = arith.constant 0 : index
    %c0_100 = arith.constant 0 : index
    %c1_101 = arith.constant 1 : index
    %c8_102 = arith.constant 8 : index
    %226 = vector.load %arg1[%c0_99, %c0_100, %c1_101, %c8_102] : memref<1x8x8x16xf32, #tpu.memory_space<vmem>>, vector<1x7x7x1xf32>
    %227 = vector.shape_cast %226 : vector<1x7x7x1xf32> to vector<7x7x1xf32>
    %228 = vector.shape_cast %23 : vector<12xf32> to vector<1x1x12xf32>
    %229 = vector.broadcast %227 : vector<7x7x1xf32> to vector<7x7x12xf32>
    %230 = vector.broadcast %228 : vector<1x1x12xf32> to vector<7x7x12xf32>
    %231 = arith.mulf %229, %230 : vector<7x7x12xf32>
    %232 = arith.addf %225, %231 : vector<7x7x12xf32>
    %c0_103 = arith.constant 0 : index
    %c0_104 = arith.constant 0 : index
    %c1_105 = arith.constant 1 : index
    %c9_106 = arith.constant 9 : index
    %233 = vector.load %arg1[%c0_103, %c0_104, %c1_105, %c9_106] : memref<1x8x8x16xf32, #tpu.memory_space<vmem>>, vector<1x7x7x1xf32>
    %234 = vector.shape_cast %233 : vector<1x7x7x1xf32> to vector<7x7x1xf32>
    %235 = vector.shape_cast %25 : vector<12xf32> to vector<1x1x12xf32>
    %236 = vector.broadcast %234 : vector<7x7x1xf32> to vector<7x7x12xf32>
    %237 = vector.broadcast %235 : vector<1x1x12xf32> to vector<7x7x12xf32>
    %238 = arith.mulf %236, %237 : vector<7x7x12xf32>
    %239 = arith.addf %232, %238 : vector<7x7x12xf32>
    %c0_107 = arith.constant 0 : index
    %c0_108 = arith.constant 0 : index
    %c0_109 = arith.constant 0 : index
    %c14_110 = arith.constant 14 : index
    %240 = vector.load %arg1[%c0_107, %c0_108, %c0_109, %c14_110] : memref<1x8x8x16xf32, #tpu.memory_space<vmem>>, vector<1x7x7x1xf32>
    %241 = vector.shape_cast %240 : vector<1x7x7x1xf32> to vector<7x7x1xf32>
    %242 = vector.shape_cast %27 : vector<12xf32> to vector<1x1x12xf32>
    %243 = vector.broadcast %241 : vector<7x7x1xf32> to vector<7x7x12xf32>
    %244 = vector.broadcast %242 : vector<1x1x12xf32> to vector<7x7x12xf32>
    %245 = arith.mulf %243, %244 : vector<7x7x12xf32>
    %246 = arith.addf %239, %245 : vector<7x7x12xf32>
    %c0_111 = arith.constant 0 : index
    %c0_112 = arith.constant 0 : index
    %c0_113 = arith.constant 0 : index
    %c15_114 = arith.constant 15 : index
    %247 = vector.load %arg1[%c0_111, %c0_112, %c0_113, %c15_114] : memref<1x8x8x16xf32, #tpu.memory_space<vmem>>, vector<1x7x7x1xf32>
    %248 = vector.shape_cast %247 : vector<1x7x7x1xf32> to vector<7x7x1xf32>
    %249 = vector.shape_cast %29 : vector<12xf32> to vector<1x1x12xf32>
    %250 = vector.broadcast %248 : vector<7x7x1xf32> to vector<7x7x12xf32>
    %251 = vector.broadcast %249 : vector<1x1x12xf32> to vector<7x7x12xf32>
    %252 = arith.mulf %250, %251 : vector<7x7x12xf32>
    %253 = arith.addf %246, %252 : vector<7x7x12xf32>
    %c0_115 = arith.constant 0 : index
    %c0_116 = arith.constant 0 : index
    %c1_117 = arith.constant 1 : index
    %c12_118 = arith.constant 12 : index
    %254 = vector.load %arg1[%c0_115, %c0_116, %c1_117, %c12_118] : memref<1x8x8x16xf32, #tpu.memory_space<vmem>>, vector<1x7x7x1xf32>
    %255 = vector.shape_cast %254 : vector<1x7x7x1xf32> to vector<7x7x1xf32>
    %256 = vector.shape_cast %31 : vector<12xf32> to vector<1x1x12xf32>
    %257 = vector.broadcast %255 : vector<7x7x1xf32> to vector<7x7x12xf32>
    %258 = vector.broadcast %256 : vector<1x1x12xf32> to vector<7x7x12xf32>
    %259 = arith.mulf %257, %258 : vector<7x7x12xf32>
    %260 = arith.addf %253, %259 : vector<7x7x12xf32>
    %c0_119 = arith.constant 0 : index
    %c0_120 = arith.constant 0 : index
    %c1_121 = arith.constant 1 : index
    %c13_122 = arith.constant 13 : index
    %261 = vector.load %arg1[%c0_119, %c0_120, %c1_121, %c13_122] : memref<1x8x8x16xf32, #tpu.memory_space<vmem>>, vector<1x7x7x1xf32>
    %262 = vector.shape_cast %261 : vector<1x7x7x1xf32> to vector<7x7x1xf32>
    %263 = vector.shape_cast %33 : vector<12xf32> to vector<1x1x12xf32>
    %264 = vector.broadcast %262 : vector<7x7x1xf32> to vector<7x7x12xf32>
    %265 = vector.broadcast %263 : vector<1x1x12xf32> to vector<7x7x12xf32>
    %266 = arith.mulf %264, %265 : vector<7x7x12xf32>
    %267 = arith.addf %260, %266 : vector<7x7x12xf32>
    %268 = vector.shape_cast %1 : vector<1x12xf32> to vector<1x1x12xf32>
    %269 = vector.broadcast %268 : vector<1x1x12xf32> to vector<7x7x12xf32>
    %270 = arith.addf %267, %269 : vector<7x7x12xf32>
    %cst_123 = arith.constant 0.000000e+00 : f32
    %271 = vector.broadcast %cst_123 : f32 to vector<7x7x12xf32>
    %272 = arith.maximumf %270, %271 : vector<7x7x12xf32>
    %c0_124 = arith.constant 0 : index
    %c1_125 = arith.constant 1 : index
    %c0_126 = arith.constant 0 : index
    %c0_127 = arith.constant 0 : index
    %c0_128 = arith.constant 0 : index
    %273 = vector.load %arg9[%c0_124, %c1_125, %c0_126, %c0_127, %c0_128] : memref<2x2x7x7x12xf32, #tpu.memory_space<vmem>>, vector<1x1x7x7x12xf32>
    %274 = vector.shape_cast %273 : vector<1x1x7x7x12xf32> to vector<7x7x12xf32>
    %275 = vector.shape_cast %272 : vector<7x7x12xf32> to vector<1x1x7x7x12xf32>
    tpu.vector_store %arg9[%c0_124, %c1_125, %c0_126, %c0_127, %c0_128], %275 {strides = array<i32>} : memref<2x2x7x7x12xf32, #tpu.memory_space<vmem>>, vector<1x1x7x7x12xf32>,
    %cst_129 = arith.constant 0.000000e+00 : f32
    %276 = vector.broadcast %cst_129 : f32 to vector<7x7x12xf32>
    %c0_130 = arith.constant 0 : index
    %c0_131 = arith.constant 0 : index
    %c0_132 = arith.constant 0 : index
    %c8_133 = arith.constant 8 : index
    %277 = vector.load %arg1[%c0_130, %c0_131, %c0_132, %c8_133] : memref<1x8x8x16xf32, #tpu.memory_space<vmem>>, vector<1x7x7x1xf32>
    %278 = vector.shape_cast %277 : vector<1x7x7x1xf32> to vector<7x7x1xf32>
    %279 = vector.shape_cast %3 : vector<12xf32> to vector<1x1x12xf32>
    %280 = vector.broadcast %278 : vector<7x7x1xf32> to vector<7x7x12xf32>
    %281 = vector.broadcast %279 : vector<1x1x12xf32> to vector<7x7x12xf32>
    %282 = arith.mulf %280, %281 : vector<7x7x12xf32>
    %283 = arith.addf %276, %282 : vector<7x7x12xf32>
    %c0_134 = arith.constant 0 : index
    %c0_135 = arith.constant 0 : index
    %c0_136 = arith.constant 0 : index
    %c9_137 = arith.constant 9 : index
    %284 = vector.load %arg1[%c0_134, %c0_135, %c0_136, %c9_137] : memref<1x8x8x16xf32, #tpu.memory_space<vmem>>, vector<1x7x7x1xf32>
    %285 = vector.shape_cast %284 : vector<1x7x7x1xf32> to vector<7x7x1xf32>
    %286 = vector.shape_cast %5 : vector<12xf32> to vector<1x1x12xf32>
    %287 = vector.broadcast %285 : vector<7x7x1xf32> to vector<7x7x12xf32>
    %288 = vector.broadcast %286 : vector<1x1x12xf32> to vector<7x7x12xf32>
    %289 = arith.mulf %287, %288 : vector<7x7x12xf32>
    %290 = arith.addf %283, %289 : vector<7x7x12xf32>
    %c0_138 = arith.constant 0 : index
    %c0_139 = arith.constant 0 : index
    %c0_140 = arith.constant 0 : index
    %c10_141 = arith.constant 10 : index
    %291 = vector.load %arg1[%c0_138, %c0_139, %c0_140, %c10_141] : memref<1x8x8x16xf32, #tpu.memory_space<vmem>>, vector<1x7x7x1xf32>
    %292 = vector.shape_cast %291 : vector<1x7x7x1xf32> to vector<7x7x1xf32>
    %293 = vector.shape_cast %7 : vector<12xf32> to vector<1x1x12xf32>
    %294 = vector.broadcast %292 : vector<7x7x1xf32> to vector<7x7x12xf32>
    %295 = vector.broadcast %293 : vector<1x1x12xf32> to vector<7x7x12xf32>
    %296 = arith.mulf %294, %295 : vector<7x7x12xf32>
    %297 = arith.addf %290, %296 : vector<7x7x12xf32>
    %c0_142 = arith.constant 0 : index
    %c0_143 = arith.constant 0 : index
    %c0_144 = arith.constant 0 : index
    %c11_145 = arith.constant 11 : index
    %298 = vector.load %arg1[%c0_142, %c0_143, %c0_144, %c11_145] : memref<1x8x8x16xf32, #tpu.memory_space<vmem>>, vector<1x7x7x1xf32>
    %299 = vector.shape_cast %298 : vector<1x7x7x1xf32> to vector<7x7x1xf32>
    %300 = vector.shape_cast %9 : vector<12xf32> to vector<1x1x12xf32>
    %301 = vector.broadcast %299 : vector<7x7x1xf32> to vector<7x7x12xf32>
    %302 = vector.broadcast %300 : vector<1x1x12xf32> to vector<7x7x12xf32>
    %303 = arith.mulf %301, %302 : vector<7x7x12xf32>
    %304 = arith.addf %297, %303 : vector<7x7x12xf32>
    %c0_146 = arith.constant 0 : index
    %c0_147 = arith.constant 0 : index
    %c0_148 = arith.constant 0 : index
    %c12_149 = arith.constant 12 : index
    %305 = vector.load %arg1[%c0_146, %c0_147, %c0_148, %c12_149] : memref<1x8x8x16xf32, #tpu.memory_space<vmem>>, vector<1x7x7x1xf32>
    %306 = vector.shape_cast %305 : vector<1x7x7x1xf32> to vector<7x7x1xf32>
    %307 = vector.shape_cast %11 : vector<12xf32> to vector<1x1x12xf32>
    %308 = vector.broadcast %306 : vector<7x7x1xf32> to vector<7x7x12xf32>
    %309 = vector.broadcast %307 : vector<1x1x12xf32> to vector<7x7x12xf32>
    %310 = arith.mulf %308, %309 : vector<7x7x12xf32>
    %311 = arith.addf %304, %310 : vector<7x7x12xf32>
    %c0_150 = arith.constant 0 : index
    %c0_151 = arith.constant 0 : index
    %c0_152 = arith.constant 0 : index
    %c13_153 = arith.constant 13 : index
    %312 = vector.load %arg1[%c0_150, %c0_151, %c0_152, %c13_153] : memref<1x8x8x16xf32, #tpu.memory_space<vmem>>, vector<1x7x7x1xf32>
    %313 = vector.shape_cast %312 : vector<1x7x7x1xf32> to vector<7x7x1xf32>
    %314 = vector.shape_cast %13 : vector<12xf32> to vector<1x1x12xf32>
    %315 = vector.broadcast %313 : vector<7x7x1xf32> to vector<7x7x12xf32>
    %316 = vector.broadcast %314 : vector<1x1x12xf32> to vector<7x7x12xf32>
    %317 = arith.mulf %315, %316 : vector<7x7x12xf32>
    %318 = arith.addf %311, %317 : vector<7x7x12xf32>
    %c0_154 = arith.constant 0 : index
    %c0_155 = arith.constant 0 : index
    %c0_156 = arith.constant 0 : index
    %c14_157 = arith.constant 14 : index
    %319 = vector.load %arg1[%c0_154, %c0_155, %c0_156, %c14_157] : memref<1x8x8x16xf32, #tpu.memory_space<vmem>>, vector<1x7x7x1xf32>
    %320 = vector.shape_cast %319 : vector<1x7x7x1xf32> to vector<7x7x1xf32>
    %321 = vector.shape_cast %15 : vector<12xf32> to vector<1x1x12xf32>
    %322 = vector.broadcast %320 : vector<7x7x1xf32> to vector<7x7x12xf32>
    %323 = vector.broadcast %321 : vector<1x1x12xf32> to vector<7x7x12xf32>
    %324 = arith.mulf %322, %323 : vector<7x7x12xf32>
    %325 = arith.addf %318, %324 : vector<7x7x12xf32>
    %c0_158 = arith.constant 0 : index
    %c0_159 = arith.constant 0 : index
    %c0_160 = arith.constant 0 : index
    %c15_161 = arith.constant 15 : index
    %326 = vector.load %arg1[%c0_158, %c0_159, %c0_160, %c15_161] : memref<1x8x8x16xf32, #tpu.memory_space<vmem>>, vector<1x7x7x1xf32>
    %327 = vector.shape_cast %326 : vector<1x7x7x1xf32> to vector<7x7x1xf32>
    %328 = vector.shape_cast %17 : vector<12xf32> to vector<1x1x12xf32>
    %329 = vector.broadcast %327 : vector<7x7x1xf32> to vector<7x7x12xf32>
    %330 = vector.broadcast %328 : vector<1x1x12xf32> to vector<7x7x12xf32>
    %331 = arith.mulf %329, %330 : vector<7x7x12xf32>
    %332 = arith.addf %325, %331 : vector<7x7x12xf32>
    %c0_162 = arith.constant 0 : index
    %c1_163 = arith.constant 1 : index
    %c0_164 = arith.constant 0 : index
    %c0_165 = arith.constant 0 : index
    %333 = vector.load %arg1[%c0_162, %c1_163, %c0_164, %c0_165] : memref<1x8x8x16xf32, #tpu.memory_space<vmem>>, vector<1x7x7x1xf32>
    %334 = vector.shape_cast %333 : vector<1x7x7x1xf32> to vector<7x7x1xf32>
    %335 = vector.shape_cast %19 : vector<12xf32> to vector<1x1x12xf32>
    %336 = vector.broadcast %334 : vector<7x7x1xf32> to vector<7x7x12xf32>
    %337 = vector.broadcast %335 : vector<1x1x12xf32> to vector<7x7x12xf32>
    %338 = arith.mulf %336, %337 : vector<7x7x12xf32>
    %339 = arith.addf %332, %338 : vector<7x7x12xf32>
    %c0_166 = arith.constant 0 : index
    %c1_167 = arith.constant 1 : index
    %c0_168 = arith.constant 0 : index
    %c1_169 = arith.constant 1 : index
    %340 = vector.load %arg1[%c0_166, %c1_167, %c0_168, %c1_169] : memref<1x8x8x16xf32, #tpu.memory_space<vmem>>, vector<1x7x7x1xf32>
    %341 = vector.shape_cast %340 : vector<1x7x7x1xf32> to vector<7x7x1xf32>
    %342 = vector.shape_cast %21 : vector<12xf32> to vector<1x1x12xf32>
    %343 = vector.broadcast %341 : vector<7x7x1xf32> to vector<7x7x12xf32>
    %344 = vector.broadcast %342 : vector<1x1x12xf32> to vector<7x7x12xf32>
    %345 = arith.mulf %343, %344 : vector<7x7x12xf32>
    %346 = arith.addf %339, %345 : vector<7x7x12xf32>
    %c0_170 = arith.constant 0 : index
    %c1_171 = arith.constant 1 : index
    %c0_172 = arith.constant 0 : index
    %c2_173 = arith.constant 2 : index
    %347 = vector.load %arg1[%c0_170, %c1_171, %c0_172, %c2_173] : memref<1x8x8x16xf32, #tpu.memory_space<vmem>>, vector<1x7x7x1xf32>
    %348 = vector.shape_cast %347 : vector<1x7x7x1xf32> to vector<7x7x1xf32>
    %349 = vector.shape_cast %23 : vector<12xf32> to vector<1x1x12xf32>
    %350 = vector.broadcast %348 : vector<7x7x1xf32> to vector<7x7x12xf32>
    %351 = vector.broadcast %349 : vector<1x1x12xf32> to vector<7x7x12xf32>
    %352 = arith.mulf %350, %351 : vector<7x7x12xf32>
    %353 = arith.addf %346, %352 : vector<7x7x12xf32>
    %c0_174 = arith.constant 0 : index
    %c1_175 = arith.constant 1 : index
    %c0_176 = arith.constant 0 : index
    %c3_177 = arith.constant 3 : index
    %354 = vector.load %arg1[%c0_174, %c1_175, %c0_176, %c3_177] : memref<1x8x8x16xf32, #tpu.memory_space<vmem>>, vector<1x7x7x1xf32>
    %355 = vector.shape_cast %354 : vector<1x7x7x1xf32> to vector<7x7x1xf32>
    %356 = vector.shape_cast %25 : vector<12xf32> to vector<1x1x12xf32>
    %357 = vector.broadcast %355 : vector<7x7x1xf32> to vector<7x7x12xf32>
    %358 = vector.broadcast %356 : vector<1x1x12xf32> to vector<7x7x12xf32>
    %359 = arith.mulf %357, %358 : vector<7x7x12xf32>
    %360 = arith.addf %353, %359 : vector<7x7x12xf32>
    %c0_178 = arith.constant 0 : index
    %c1_179 = arith.constant 1 : index
    %c0_180 = arith.constant 0 : index
    %c4_181 = arith.constant 4 : index
    %361 = vector.load %arg1[%c0_178, %c1_179, %c0_180, %c4_181] : memref<1x8x8x16xf32, #tpu.memory_space<vmem>>, vector<1x7x7x1xf32>
    %362 = vector.shape_cast %361 : vector<1x7x7x1xf32> to vector<7x7x1xf32>
    %363 = vector.shape_cast %27 : vector<12xf32> to vector<1x1x12xf32>
    %364 = vector.broadcast %362 : vector<7x7x1xf32> to vector<7x7x12xf32>
    %365 = vector.broadcast %363 : vector<1x1x12xf32> to vector<7x7x12xf32>
    %366 = arith.mulf %364, %365 : vector<7x7x12xf32>
    %367 = arith.addf %360, %366 : vector<7x7x12xf32>
    %c0_182 = arith.constant 0 : index
    %c1_183 = arith.constant 1 : index
    %c0_184 = arith.constant 0 : index
    %c5_185 = arith.constant 5 : index
    %368 = vector.load %arg1[%c0_182, %c1_183, %c0_184, %c5_185] : memref<1x8x8x16xf32, #tpu.memory_space<vmem>>, vector<1x7x7x1xf32>
    %369 = vector.shape_cast %368 : vector<1x7x7x1xf32> to vector<7x7x1xf32>
    %370 = vector.shape_cast %29 : vector<12xf32> to vector<1x1x12xf32>
    %371 = vector.broadcast %369 : vector<7x7x1xf32> to vector<7x7x12xf32>
    %372 = vector.broadcast %370 : vector<1x1x12xf32> to vector<7x7x12xf32>
    %373 = arith.mulf %371, %372 : vector<7x7x12xf32>
    %374 = arith.addf %367, %373 : vector<7x7x12xf32>
    %c0_186 = arith.constant 0 : index
    %c1_187 = arith.constant 1 : index
    %c0_188 = arith.constant 0 : index
    %c6_189 = arith.constant 6 : index
    %375 = vector.load %arg1[%c0_186, %c1_187, %c0_188, %c6_189] : memref<1x8x8x16xf32, #tpu.memory_space<vmem>>, vector<1x7x7x1xf32>
    %376 = vector.shape_cast %375 : vector<1x7x7x1xf32> to vector<7x7x1xf32>
    %377 = vector.shape_cast %31 : vector<12xf32> to vector<1x1x12xf32>
    %378 = vector.broadcast %376 : vector<7x7x1xf32> to vector<7x7x12xf32>
    %379 = vector.broadcast %377 : vector<1x1x12xf32> to vector<7x7x12xf32>
    %380 = arith.mulf %378, %379 : vector<7x7x12xf32>
    %381 = arith.addf %374, %380 : vector<7x7x12xf32>
    %c0_190 = arith.constant 0 : index
    %c1_191 = arith.constant 1 : index
    %c0_192 = arith.constant 0 : index
    %c7_193 = arith.constant 7 : index
    %382 = vector.load %arg1[%c0_190, %c1_191, %c0_192, %c7_193] : memref<1x8x8x16xf32, #tpu.memory_space<vmem>>, vector<1x7x7x1xf32>
    %383 = vector.shape_cast %382 : vector<1x7x7x1xf32> to vector<7x7x1xf32>
    %384 = vector.shape_cast %33 : vector<12xf32> to vector<1x1x12xf32>
    %385 = vector.broadcast %383 : vector<7x7x1xf32> to vector<7x7x12xf32>
    %386 = vector.broadcast %384 : vector<1x1x12xf32> to vector<7x7x12xf32>
    %387 = arith.mulf %385, %386 : vector<7x7x12xf32>
    %388 = arith.addf %381, %387 : vector<7x7x12xf32>
    %389 = vector.shape_cast %1 : vector<1x12xf32> to vector<1x1x12xf32>
    %390 = vector.broadcast %389 : vector<1x1x12xf32> to vector<7x7x12xf32>
    %391 = arith.addf %388, %390 : vector<7x7x12xf32>
    %cst_194 = arith.constant 0.000000e+00 : f32
    %392 = vector.broadcast %cst_194 : f32 to vector<7x7x12xf32>
    %393 = arith.maximumf %391, %392 : vector<7x7x12xf32>
    %c1_195 = arith.constant 1 : index
    %c0_196 = arith.constant 0 : index
    %c0_197 = arith.constant 0 : index
    %c0_198 = arith.constant 0 : index
    %c0_199 = arith.constant 0 : index
    %394 = vector.load %arg9[%c1_195, %c0_196, %c0_197, %c0_198, %c0_199] : memref<2x2x7x7x12xf32, #tpu.memory_space<vmem>>, vector<1x1x7x7x12xf32>
    %395 = vector.shape_cast %394 : vector<1x1x7x7x12xf32> to vector<7x7x12xf32>
    %396 = vector.shape_cast %393 : vector<7x7x12xf32> to vector<1x1x7x7x12xf32>
    tpu.vector_store %arg9[%c1_195, %c0_196, %c0_197, %c0_198, %c0_199], %396 {strides = array<i32>} : memref<2x2x7x7x12xf32, #tpu.memory_space<vmem>>, vector<1x1x7x7x12xf32>,
    %cst_200 = arith.constant 0.000000e+00 : f32
    %397 = vector.broadcast %cst_200 : f32 to vector<7x7x12xf32>
    %c0_201 = arith.constant 0 : index
    %c0_202 = arith.constant 0 : index
    %c0_203 = arith.constant 0 : index
    %c10_204 = arith.constant 10 : index
    %398 = vector.load %arg1[%c0_201, %c0_202, %c0_203, %c10_204] : memref<1x8x8x16xf32, #tpu.memory_space<vmem>>, vector<1x7x7x1xf32>
    %399 = vector.shape_cast %398 : vector<1x7x7x1xf32> to vector<7x7x1xf32>
    %400 = vector.shape_cast %3 : vector<12xf32> to vector<1x1x12xf32>
    %401 = vector.broadcast %399 : vector<7x7x1xf32> to vector<7x7x12xf32>
    %402 = vector.broadcast %400 : vector<1x1x12xf32> to vector<7x7x12xf32>
    %403 = arith.mulf %401, %402 : vector<7x7x12xf32>
    %404 = arith.addf %397, %403 : vector<7x7x12xf32>
    %c0_205 = arith.constant 0 : index
    %c0_206 = arith.constant 0 : index
    %c0_207 = arith.constant 0 : index
    %c11_208 = arith.constant 11 : index
    %405 = vector.load %arg1[%c0_205, %c0_206, %c0_207, %c11_208] : memref<1x8x8x16xf32, #tpu.memory_space<vmem>>, vector<1x7x7x1xf32>
    %406 = vector.shape_cast %405 : vector<1x7x7x1xf32> to vector<7x7x1xf32>
    %407 = vector.shape_cast %5 : vector<12xf32> to vector<1x1x12xf32>
    %408 = vector.broadcast %406 : vector<7x7x1xf32> to vector<7x7x12xf32>
    %409 = vector.broadcast %407 : vector<1x1x12xf32> to vector<7x7x12xf32>
    %410 = arith.mulf %408, %409 : vector<7x7x12xf32>
    %411 = arith.addf %404, %410 : vector<7x7x12xf32>
    %c0_209 = arith.constant 0 : index
    %c0_210 = arith.constant 0 : index
    %c1_211 = arith.constant 1 : index
    %c8_212 = arith.constant 8 : index
    %412 = vector.load %arg1[%c0_209, %c0_210, %c1_211, %c8_212] : memref<1x8x8x16xf32, #tpu.memory_space<vmem>>, vector<1x7x7x1xf32>
    %413 = vector.shape_cast %412 : vector<1x7x7x1xf32> to vector<7x7x1xf32>
    %414 = vector.shape_cast %7 : vector<12xf32> to vector<1x1x12xf32>
    %415 = vector.broadcast %413 : vector<7x7x1xf32> to vector<7x7x12xf32>
    %416 = vector.broadcast %414 : vector<1x1x12xf32> to vector<7x7x12xf32>
    %417 = arith.mulf %415, %416 : vector<7x7x12xf32>
    %418 = arith.addf %411, %417 : vector<7x7x12xf32>
    %c0_213 = arith.constant 0 : index
    %c0_214 = arith.constant 0 : index
    %c1_215 = arith.constant 1 : index
    %c9_216 = arith.constant 9 : index
    %419 = vector.load %arg1[%c0_213, %c0_214, %c1_215, %c9_216] : memref<1x8x8x16xf32, #tpu.memory_space<vmem>>, vector<1x7x7x1xf32>
    %420 = vector.shape_cast %419 : vector<1x7x7x1xf32> to vector<7x7x1xf32>
    %421 = vector.shape_cast %9 : vector<12xf32> to vector<1x1x12xf32>
    %422 = vector.broadcast %420 : vector<7x7x1xf32> to vector<7x7x12xf32>
    %423 = vector.broadcast %421 : vector<1x1x12xf32> to vector<7x7x12xf32>
    %424 = arith.mulf %422, %423 : vector<7x7x12xf32>
    %425 = arith.addf %418, %424 : vector<7x7x12xf32>
    %c0_217 = arith.constant 0 : index
    %c0_218 = arith.constant 0 : index
    %c0_219 = arith.constant 0 : index
    %c14_220 = arith.constant 14 : index
    %426 = vector.load %arg1[%c0_217, %c0_218, %c0_219, %c14_220] : memref<1x8x8x16xf32, #tpu.memory_space<vmem>>, vector<1x7x7x1xf32>
    %427 = vector.shape_cast %426 : vector<1x7x7x1xf32> to vector<7x7x1xf32>
    %428 = vector.shape_cast %11 : vector<12xf32> to vector<1x1x12xf32>
    %429 = vector.broadcast %427 : vector<7x7x1xf32> to vector<7x7x12xf32>
    %430 = vector.broadcast %428 : vector<1x1x12xf32> to vector<7x7x12xf32>
    %431 = arith.mulf %429, %430 : vector<7x7x12xf32>
    %432 = arith.addf %425, %431 : vector<7x7x12xf32>
    %c0_221 = arith.constant 0 : index
    %c0_222 = arith.constant 0 : index
    %c0_223 = arith.constant 0 : index
    %c15_224 = arith.constant 15 : index
    %433 = vector.load %arg1[%c0_221, %c0_222, %c0_223, %c15_224] : memref<1x8x8x16xf32, #tpu.memory_space<vmem>>, vector<1x7x7x1xf32>
    %434 = vector.shape_cast %433 : vector<1x7x7x1xf32> to vector<7x7x1xf32>
    %435 = vector.shape_cast %13 : vector<12xf32> to vector<1x1x12xf32>
    %436 = vector.broadcast %434 : vector<7x7x1xf32> to vector<7x7x12xf32>
    %437 = vector.broadcast %435 : vector<1x1x12xf32> to vector<7x7x12xf32>
    %438 = arith.mulf %436, %437 : vector<7x7x12xf32>
    %439 = arith.addf %432, %438 : vector<7x7x12xf32>
    %c0_225 = arith.constant 0 : index
    %c0_226 = arith.constant 0 : index
    %c1_227 = arith.constant 1 : index
    %c12_228 = arith.constant 12 : index
    %440 = vector.load %arg1[%c0_225, %c0_226, %c1_227, %c12_228] : memref<1x8x8x16xf32, #tpu.memory_space<vmem>>, vector<1x7x7x1xf32>
    %441 = vector.shape_cast %440 : vector<1x7x7x1xf32> to vector<7x7x1xf32>
    %442 = vector.shape_cast %15 : vector<12xf32> to vector<1x1x12xf32>
    %443 = vector.broadcast %441 : vector<7x7x1xf32> to vector<7x7x12xf32>
    %444 = vector.broadcast %442 : vector<1x1x12xf32> to vector<7x7x12xf32>
    %445 = arith.mulf %443, %444 : vector<7x7x12xf32>
    %446 = arith.addf %439, %445 : vector<7x7x12xf32>
    %c0_229 = arith.constant 0 : index
    %c0_230 = arith.constant 0 : index
    %c1_231 = arith.constant 1 : index
    %c13_232 = arith.constant 13 : index
    %447 = vector.load %arg1[%c0_229, %c0_230, %c1_231, %c13_232] : memref<1x8x8x16xf32, #tpu.memory_space<vmem>>, vector<1x7x7x1xf32>
    %448 = vector.shape_cast %447 : vector<1x7x7x1xf32> to vector<7x7x1xf32>
    %449 = vector.shape_cast %17 : vector<12xf32> to vector<1x1x12xf32>
    %450 = vector.broadcast %448 : vector<7x7x1xf32> to vector<7x7x12xf32>
    %451 = vector.broadcast %449 : vector<1x1x12xf32> to vector<7x7x12xf32>
    %452 = arith.mulf %450, %451 : vector<7x7x12xf32>
    %453 = arith.addf %446, %452 : vector<7x7x12xf32>
    %c0_233 = arith.constant 0 : index
    %c1_234 = arith.constant 1 : index
    %c0_235 = arith.constant 0 : index
    %c2_236 = arith.constant 2 : index
    %454 = vector.load %arg1[%c0_233, %c1_234, %c0_235, %c2_236] : memref<1x8x8x16xf32, #tpu.memory_space<vmem>>, vector<1x7x7x1xf32>
    %455 = vector.shape_cast %454 : vector<1x7x7x1xf32> to vector<7x7x1xf32>
    %456 = vector.shape_cast %19 : vector<12xf32> to vector<1x1x12xf32>
    %457 = vector.broadcast %455 : vector<7x7x1xf32> to vector<7x7x12xf32>
    %458 = vector.broadcast %456 : vector<1x1x12xf32> to vector<7x7x12xf32>
    %459 = arith.mulf %457, %458 : vector<7x7x12xf32>
    %460 = arith.addf %453, %459 : vector<7x7x12xf32>
    %c0_237 = arith.constant 0 : index
    %c1_238 = arith.constant 1 : index
    %c0_239 = arith.constant 0 : index
    %c3_240 = arith.constant 3 : index
    %461 = vector.load %arg1[%c0_237, %c1_238, %c0_239, %c3_240] : memref<1x8x8x16xf32, #tpu.memory_space<vmem>>, vector<1x7x7x1xf32>
    %462 = vector.shape_cast %461 : vector<1x7x7x1xf32> to vector<7x7x1xf32>
    %463 = vector.shape_cast %21 : vector<12xf32> to vector<1x1x12xf32>
    %464 = vector.broadcast %462 : vector<7x7x1xf32> to vector<7x7x12xf32>
    %465 = vector.broadcast %463 : vector<1x1x12xf32> to vector<7x7x12xf32>
    %466 = arith.mulf %464, %465 : vector<7x7x12xf32>
    %467 = arith.addf %460, %466 : vector<7x7x12xf32>
    %c0_241 = arith.constant 0 : index
    %c1_242 = arith.constant 1 : index
    %c1_243 = arith.constant 1 : index
    %c0_244 = arith.constant 0 : index
    %468 = vector.load %arg1[%c0_241, %c1_242, %c1_243, %c0_244] : memref<1x8x8x16xf32, #tpu.memory_space<vmem>>, vector<1x7x7x1xf32>
    %469 = vector.shape_cast %468 : vector<1x7x7x1xf32> to vector<7x7x1xf32>
    %470 = vector.shape_cast %23 : vector<12xf32> to vector<1x1x12xf32>
    %471 = vector.broadcast %469 : vector<7x7x1xf32> to vector<7x7x12xf32>
    %472 = vector.broadcast %470 : vector<1x1x12xf32> to vector<7x7x12xf32>
    %473 = arith.mulf %471, %472 : vector<7x7x12xf32>
    %474 = arith.addf %467, %473 : vector<7x7x12xf32>
    %c0_245 = arith.constant 0 : index
    %c1_246 = arith.constant 1 : index
    %c1_247 = arith.constant 1 : index
    %c1_248 = arith.constant 1 : index
    %475 = vector.load %arg1[%c0_245, %c1_246, %c1_247, %c1_248] : memref<1x8x8x16xf32, #tpu.memory_space<vmem>>, vector<1x7x7x1xf32>
    %476 = vector.shape_cast %475 : vector<1x7x7x1xf32> to vector<7x7x1xf32>
    %477 = vector.shape_cast %25 : vector<12xf32> to vector<1x1x12xf32>
    %478 = vector.broadcast %476 : vector<7x7x1xf32> to vector<7x7x12xf32>
    %479 = vector.broadcast %477 : vector<1x1x12xf32> to vector<7x7x12xf32>
    %480 = arith.mulf %478, %479 : vector<7x7x12xf32>
    %481 = arith.addf %474, %480 : vector<7x7x12xf32>
    %c0_249 = arith.constant 0 : index
    %c1_250 = arith.constant 1 : index
    %c0_251 = arith.constant 0 : index
    %c6_252 = arith.constant 6 : index
    %482 = vector.load %arg1[%c0_249, %c1_250, %c0_251, %c6_252] : memref<1x8x8x16xf32, #tpu.memory_space<vmem>>, vector<1x7x7x1xf32>
    %483 = vector.shape_cast %482 : vector<1x7x7x1xf32> to vector<7x7x1xf32>
    %484 = vector.shape_cast %27 : vector<12xf32> to vector<1x1x12xf32>
    %485 = vector.broadcast %483 : vector<7x7x1xf32> to vector<7x7x12xf32>
    %486 = vector.broadcast %484 : vector<1x1x12xf32> to vector<7x7x12xf32>
    %487 = arith.mulf %485, %486 : vector<7x7x12xf32>
    %488 = arith.addf %481, %487 : vector<7x7x12xf32>
    %c0_253 = arith.constant 0 : index
    %c1_254 = arith.constant 1 : index
    %c0_255 = arith.constant 0 : index
    %c7_256 = arith.constant 7 : index
    %489 = vector.load %arg1[%c0_253, %c1_254, %c0_255, %c7_256] : memref<1x8x8x16xf32, #tpu.memory_space<vmem>>, vector<1x7x7x1xf32>
    %490 = vector.shape_cast %489 : vector<1x7x7x1xf32> to vector<7x7x1xf32>
    %491 = vector.shape_cast %29 : vector<12xf32> to vector<1x1x12xf32>
    %492 = vector.broadcast %490 : vector<7x7x1xf32> to vector<7x7x12xf32>
    %493 = vector.broadcast %491 : vector<1x1x12xf32> to vector<7x7x12xf32>
    %494 = arith.mulf %492, %493 : vector<7x7x12xf32>
    %495 = arith.addf %488, %494 : vector<7x7x12xf32>
    %c0_257 = arith.constant 0 : index
    %c1_258 = arith.constant 1 : index
    %c1_259 = arith.constant 1 : index
    %c4_260 = arith.constant 4 : index
    %496 = vector.load %arg1[%c0_257, %c1_258, %c1_259, %c4_260] : memref<1x8x8x16xf32, #tpu.memory_space<vmem>>, vector<1x7x7x1xf32>
    %497 = vector.shape_cast %496 : vector<1x7x7x1xf32> to vector<7x7x1xf32>
    %498 = vector.shape_cast %31 : vector<12xf32> to vector<1x1x12xf32>
    %499 = vector.broadcast %497 : vector<7x7x1xf32> to vector<7x7x12xf32>
    %500 = vector.broadcast %498 : vector<1x1x12xf32> to vector<7x7x12xf32>
    %501 = arith.mulf %499, %500 : vector<7x7x12xf32>
    %502 = arith.addf %495, %501 : vector<7x7x12xf32>
    %c0_261 = arith.constant 0 : index
    %c1_262 = arith.constant 1 : index
    %c1_263 = arith.constant 1 : index
    %c5_264 = arith.constant 5 : index
    %503 = vector.load %arg1[%c0_261, %c1_262, %c1_263, %c5_264] : memref<1x8x8x16xf32, #tpu.memory_space<vmem>>, vector<1x7x7x1xf32>
    %504 = vector.shape_cast %503 : vector<1x7x7x1xf32> to vector<7x7x1xf32>
    %505 = vector.shape_cast %33 : vector<12xf32> to vector<1x1x12xf32>
    %506 = vector.broadcast %504 : vector<7x7x1xf32> to vector<7x7x12xf32>
    %507 = vector.broadcast %505 : vector<1x1x12xf32> to vector<7x7x12xf32>
    %508 = arith.mulf %506, %507 : vector<7x7x12xf32>
    %509 = arith.addf %502, %508 : vector<7x7x12xf32>
    %510 = vector.shape_cast %1 : vector<1x12xf32> to vector<1x1x12xf32>
    %511 = vector.broadcast %510 : vector<1x1x12xf32> to vector<7x7x12xf32>
    %512 = arith.addf %509, %511 : vector<7x7x12xf32>
    %cst_265 = arith.constant 0.000000e+00 : f32
    %513 = vector.broadcast %cst_265 : f32 to vector<7x7x12xf32>
    %514 = arith.maximumf %512, %513 : vector<7x7x12xf32>
    %c1_266 = arith.constant 1 : index
    %c1_267 = arith.constant 1 : index
    %c0_268 = arith.constant 0 : index
    %c0_269 = arith.constant 0 : index
    %c0_270 = arith.constant 0 : index
    %515 = vector.load %arg9[%c1_266, %c1_267, %c0_268, %c0_269, %c0_270] : memref<2x2x7x7x12xf32, #tpu.memory_space<vmem>>, vector<1x1x7x7x12xf32>
    %516 = vector.shape_cast %515 : vector<1x1x7x7x12xf32> to vector<7x7x12xf32>
    %517 = vector.shape_cast %514 : vector<7x7x12xf32> to vector<1x1x7x7x12xf32>
    tpu.vector_store %arg9[%c1_266, %c1_267, %c0_268, %c0_269, %c0_270], %517 {strides = array<i32>} : memref<2x2x7x7x12xf32, #tpu.memory_space<vmem>>, vector<1x1x7x7x12xf32>,
    %c0_271 = arith.constant 0 : index
    %c0_272 = arith.constant 0 : index
    %c0_273 = arith.constant 0 : index
    %c0_274 = arith.constant 0 : index
    %c0_275 = arith.constant 0 : index
    %518 = vector.load %arg9[%c0_271, %c0_272, %c0_273, %c0_274, %c0_275] : memref<2x2x7x7x12xf32, #tpu.memory_space<vmem>>, vector<1x1x6x6x12xf32>
    %519 = vector.shape_cast %518 : vector<1x1x6x6x12xf32> to vector<6x6x12xf32>
    %c0_276 = arith.constant 0 : index
    %c0_277 = arith.constant 0 : index
    %c0_278 = arith.constant 0 : index
    %520 = vector.load %arg10[%c0_276, %c0_277, %c0_278] : memref<6x6x192xf32, #tpu.memory_space<vmem>>, vector<6x6x12xf32>
    tpu.vector_store %arg10[%c0_276, %c0_277, %c0_278], %519 {strides = array<i32>} : memref<6x6x192xf32, #tpu.memory_space<vmem>>, vector<6x6x12xf32>,
    %c0_279 = arith.constant 0 : index
    %c1_280 = arith.constant 1 : index
    %c0_281 = arith.constant 0 : index
    %c0_282 = arith.constant 0 : index
    %c0_283 = arith.constant 0 : index
    %521 = vector.load %arg9[%c0_279, %c1_280, %c0_281, %c0_282, %c0_283] : memref<2x2x7x7x12xf32, #tpu.memory_space<vmem>>, vector<1x1x6x6x12xf32>
    %522 = vector.shape_cast %521 : vector<1x1x6x6x12xf32> to vector<6x6x12xf32>
    %c0_284 = arith.constant 0 : index
    %c0_285 = arith.constant 0 : index
    %c12_286 = arith.constant 12 : index
    %523 = vector.load %arg10[%c0_284, %c0_285, %c12_286] : memref<6x6x192xf32, #tpu.memory_space<vmem>>, vector<6x6x12xf32>
    tpu.vector_store %arg10[%c0_284, %c0_285, %c12_286], %522 {strides = array<i32>} : memref<6x6x192xf32, #tpu.memory_space<vmem>>, vector<6x6x12xf32>,
    %c0_287 = arith.constant 0 : index
    %c0_288 = arith.constant 0 : index
    %c0_289 = arith.constant 0 : index
    %c1_290 = arith.constant 1 : index
    %c0_291 = arith.constant 0 : index
    %524 = vector.load %arg9[%c0_287, %c0_288, %c0_289, %c1_290, %c0_291] : memref<2x2x7x7x12xf32, #tpu.memory_space<vmem>>, vector<1x1x6x6x12xf32>
    %525 = vector.shape_cast %524 : vector<1x1x6x6x12xf32> to vector<6x6x12xf32>
    %c0_292 = arith.constant 0 : index
    %c0_293 = arith.constant 0 : index
    %c24 = arith.constant 24 : index
    %526 = vector.load %arg10[%c0_292, %c0_293, %c24] : memref<6x6x192xf32, #tpu.memory_space<vmem>>, vector<6x6x12xf32>
    tpu.vector_store %arg10[%c0_292, %c0_293, %c24], %525 {strides = array<i32>} : memref<6x6x192xf32, #tpu.memory_space<vmem>>, vector<6x6x12xf32>,
    %c0_294 = arith.constant 0 : index
    %c1_295 = arith.constant 1 : index
    %c0_296 = arith.constant 0 : index
    %c1_297 = arith.constant 1 : index
    %c0_298 = arith.constant 0 : index
    %527 = vector.load %arg9[%c0_294, %c1_295, %c0_296, %c1_297, %c0_298] : memref<2x2x7x7x12xf32, #tpu.memory_space<vmem>>, vector<1x1x6x6x12xf32>
    %528 = vector.shape_cast %527 : vector<1x1x6x6x12xf32> to vector<6x6x12xf32>
    %c0_299 = arith.constant 0 : index
    %c0_300 = arith.constant 0 : index
    %c36 = arith.constant 36 : index
    %529 = vector.load %arg10[%c0_299, %c0_300, %c36] : memref<6x6x192xf32, #tpu.memory_space<vmem>>, vector<6x6x12xf32>
    tpu.vector_store %arg10[%c0_299, %c0_300, %c36], %528 {strides = array<i32>} : memref<6x6x192xf32, #tpu.memory_space<vmem>>, vector<6x6x12xf32>,
    %c1_301 = arith.constant 1 : index
    %c0_302 = arith.constant 0 : index
    %c0_303 = arith.constant 0 : index
    %c0_304 = arith.constant 0 : index
    %c0_305 = arith.constant 0 : index
    %530 = vector.load %arg9[%c1_301, %c0_302, %c0_303, %c0_304, %c0_305] : memref<2x2x7x7x12xf32, #tpu.memory_space<vmem>>, vector<1x1x6x6x12xf32>
    %531 = vector.shape_cast %530 : vector<1x1x6x6x12xf32> to vector<6x6x12xf32>
    %c0_306 = arith.constant 0 : index
    %c0_307 = arith.constant 0 : index
    %c48 = arith.constant 48 : index
    %532 = vector.load %arg10[%c0_306, %c0_307, %c48] : memref<6x6x192xf32, #tpu.memory_space<vmem>>, vector<6x6x12xf32>
    tpu.vector_store %arg10[%c0_306, %c0_307, %c48], %531 {strides = array<i32>} : memref<6x6x192xf32, #tpu.memory_space<vmem>>, vector<6x6x12xf32>,
    %c1_308 = arith.constant 1 : index
    %c1_309 = arith.constant 1 : index
    %c0_310 = arith.constant 0 : index
    %c0_311 = arith.constant 0 : index
    %c0_312 = arith.constant 0 : index
    %533 = vector.load %arg9[%c1_308, %c1_309, %c0_310, %c0_311, %c0_312] : memref<2x2x7x7x12xf32, #tpu.memory_space<vmem>>, vector<1x1x6x6x12xf32>
    %534 = vector.shape_cast %533 : vector<1x1x6x6x12xf32> to vector<6x6x12xf32>
    %c0_313 = arith.constant 0 : index
    %c0_314 = arith.constant 0 : index
    %c60 = arith.constant 60 : index
    %535 = vector.load %arg10[%c0_313, %c0_314, %c60] : memref<6x6x192xf32, #tpu.memory_space<vmem>>, vector<6x6x12xf32>
    tpu.vector_store %arg10[%c0_313, %c0_314, %c60], %534 {strides = array<i32>} : memref<6x6x192xf32, #tpu.memory_space<vmem>>, vector<6x6x12xf32>,
    %c1_315 = arith.constant 1 : index
    %c0_316 = arith.constant 0 : index
    %c0_317 = arith.constant 0 : index
    %c1_318 = arith.constant 1 : index
    %c0_319 = arith.constant 0 : index
    %536 = vector.load %arg9[%c1_315, %c0_316, %c0_317, %c1_318, %c0_319] : memref<2x2x7x7x12xf32, #tpu.memory_space<vmem>>, vector<1x1x6x6x12xf32>
    %537 = vector.shape_cast %536 : vector<1x1x6x6x12xf32> to vector<6x6x12xf32>
    %c0_320 = arith.constant 0 : index
    %c0_321 = arith.constant 0 : index
    %c72 = arith.constant 72 : index
    %538 = vector.load %arg10[%c0_320, %c0_321, %c72] : memref<6x6x192xf32, #tpu.memory_space<vmem>>, vector<6x6x12xf32>
    tpu.vector_store %arg10[%c0_320, %c0_321, %c72], %537 {strides = array<i32>} : memref<6x6x192xf32, #tpu.memory_space<vmem>>, vector<6x6x12xf32>,
    %c1_322 = arith.constant 1 : index
    %c1_323 = arith.constant 1 : index
    %c0_324 = arith.constant 0 : index
    %c1_325 = arith.constant 1 : index
    %c0_326 = arith.constant 0 : index
    %539 = vector.load %arg9[%c1_322, %c1_323, %c0_324, %c1_325, %c0_326] : memref<2x2x7x7x12xf32, #tpu.memory_space<vmem>>, vector<1x1x6x6x12xf32>
    %540 = vector.shape_cast %539 : vector<1x1x6x6x12xf32> to vector<6x6x12xf32>
    %c0_327 = arith.constant 0 : index
    %c0_328 = arith.constant 0 : index
    %c84 = arith.constant 84 : index
    %541 = vector.load %arg10[%c0_327, %c0_328, %c84] : memref<6x6x192xf32, #tpu.memory_space<vmem>>, vector<6x6x12xf32>
    tpu.vector_store %arg10[%c0_327, %c0_328, %c84], %540 {strides = array<i32>} : memref<6x6x192xf32, #tpu.memory_space<vmem>>, vector<6x6x12xf32>,
    %c0_329 = arith.constant 0 : index
    %c0_330 = arith.constant 0 : index
    %c1_331 = arith.constant 1 : index
    %c0_332 = arith.constant 0 : index
    %c0_333 = arith.constant 0 : index
    %542 = vector.load %arg9[%c0_329, %c0_330, %c1_331, %c0_332, %c0_333] : memref<2x2x7x7x12xf32, #tpu.memory_space<vmem>>, vector<1x1x6x6x12xf32>
    %543 = vector.shape_cast %542 : vector<1x1x6x6x12xf32> to vector<6x6x12xf32>
    %c0_334 = arith.constant 0 : index
    %c0_335 = arith.constant 0 : index
    %c96 = arith.constant 96 : index
    %544 = vector.load %arg10[%c0_334, %c0_335, %c96] : memref<6x6x192xf32, #tpu.memory_space<vmem>>, vector<6x6x12xf32>
    tpu.vector_store %arg10[%c0_334, %c0_335, %c96], %543 {strides = array<i32>} : memref<6x6x192xf32, #tpu.memory_space<vmem>>, vector<6x6x12xf32>,
    %c0_336 = arith.constant 0 : index
    %c1_337 = arith.constant 1 : index
    %c1_338 = arith.constant 1 : index
    %c0_339 = arith.constant 0 : index
    %c0_340 = arith.constant 0 : index
    %545 = vector.load %arg9[%c0_336, %c1_337, %c1_338, %c0_339, %c0_340] : memref<2x2x7x7x12xf32, #tpu.memory_space<vmem>>, vector<1x1x6x6x12xf32>
    %546 = vector.shape_cast %545 : vector<1x1x6x6x12xf32> to vector<6x6x12xf32>
    %c0_341 = arith.constant 0 : index
    %c0_342 = arith.constant 0 : index
    %c108 = arith.constant 108 : index
    %547 = vector.load %arg10[%c0_341, %c0_342, %c108] : memref<6x6x192xf32, #tpu.memory_space<vmem>>, vector<6x6x12xf32>
    tpu.vector_store %arg10[%c0_341, %c0_342, %c108], %546 {strides = array<i32>} : memref<6x6x192xf32, #tpu.memory_space<vmem>>, vector<6x6x12xf32>,
    %c0_343 = arith.constant 0 : index
    %c0_344 = arith.constant 0 : index
    %c1_345 = arith.constant 1 : index
    %c1_346 = arith.constant 1 : index
    %c0_347 = arith.constant 0 : index
    %548 = vector.load %arg9[%c0_343, %c0_344, %c1_345, %c1_346, %c0_347] : memref<2x2x7x7x12xf32, #tpu.memory_space<vmem>>, vector<1x1x6x6x12xf32>
    %549 = vector.shape_cast %548 : vector<1x1x6x6x12xf32> to vector<6x6x12xf32>
    %c0_348 = arith.constant 0 : index
    %c0_349 = arith.constant 0 : index
    %c120 = arith.constant 120 : index
    %550 = vector.load %arg10[%c0_348, %c0_349, %c120] : memref<6x6x192xf32, #tpu.memory_space<vmem>>, vector<6x6x12xf32>
    tpu.vector_store %arg10[%c0_348, %c0_349, %c120], %549 {strides = array<i32>} : memref<6x6x192xf32, #tpu.memory_space<vmem>>, vector<6x6x12xf32>,
    %c0_350 = arith.constant 0 : index
    %c1_351 = arith.constant 1 : index
    %c1_352 = arith.constant 1 : index
    %c1_353 = arith.constant 1 : index
    %c0_354 = arith.constant 0 : index
    %551 = vector.load %arg9[%c0_350, %c1_351, %c1_352, %c1_353, %c0_354] : memref<2x2x7x7x12xf32, #tpu.memory_space<vmem>>, vector<1x1x6x6x12xf32>
    %552 = vector.shape_cast %551 : vector<1x1x6x6x12xf32> to vector<6x6x12xf32>
    %c0_355 = arith.constant 0 : index
    %c0_356 = arith.constant 0 : index
    %c132 = arith.constant 132 : index
    %553 = vector.load %arg10[%c0_355, %c0_356, %c132] : memref<6x6x192xf32, #tpu.memory_space<vmem>>, vector<6x6x12xf32>
    tpu.vector_store %arg10[%c0_355, %c0_356, %c132], %552 {strides = array<i32>} : memref<6x6x192xf32, #tpu.memory_space<vmem>>, vector<6x6x12xf32>,
    %c1_357 = arith.constant 1 : index
    %c0_358 = arith.constant 0 : index
    %c1_359 = arith.constant 1 : index
    %c0_360 = arith.constant 0 : index
    %c0_361 = arith.constant 0 : index
    %554 = vector.load %arg9[%c1_357, %c0_358, %c1_359, %c0_360, %c0_361] : memref<2x2x7x7x12xf32, #tpu.memory_space<vmem>>, vector<1x1x6x6x12xf32>
    %555 = vector.shape_cast %554 : vector<1x1x6x6x12xf32> to vector<6x6x12xf32>
    %c0_362 = arith.constant 0 : index
    %c0_363 = arith.constant 0 : index
    %c144 = arith.constant 144 : index
    %556 = vector.load %arg10[%c0_362, %c0_363, %c144] : memref<6x6x192xf32, #tpu.memory_space<vmem>>, vector<6x6x12xf32>
    tpu.vector_store %arg10[%c0_362, %c0_363, %c144], %555 {strides = array<i32>} : memref<6x6x192xf32, #tpu.memory_space<vmem>>, vector<6x6x12xf32>,
    %c1_364 = arith.constant 1 : index
    %c1_365 = arith.constant 1 : index
    %c1_366 = arith.constant 1 : index
    %c0_367 = arith.constant 0 : index
    %c0_368 = arith.constant 0 : index
    %557 = vector.load %arg9[%c1_364, %c1_365, %c1_366, %c0_367, %c0_368] : memref<2x2x7x7x12xf32, #tpu.memory_space<vmem>>, vector<1x1x6x6x12xf32>
    %558 = vector.shape_cast %557 : vector<1x1x6x6x12xf32> to vector<6x6x12xf32>
    %c0_369 = arith.constant 0 : index
    %c0_370 = arith.constant 0 : index
    %c156 = arith.constant 156 : index
    %559 = vector.load %arg10[%c0_369, %c0_370, %c156] : memref<6x6x192xf32, #tpu.memory_space<vmem>>, vector<6x6x12xf32>
    tpu.vector_store %arg10[%c0_369, %c0_370, %c156], %558 {strides = array<i32>} : memref<6x6x192xf32, #tpu.memory_space<vmem>>, vector<6x6x12xf32>,
    %c1_371 = arith.constant 1 : index
    %c0_372 = arith.constant 0 : index
    %c1_373 = arith.constant 1 : index
    %c1_374 = arith.constant 1 : index
    %c0_375 = arith.constant 0 : index
    %560 = vector.load %arg9[%c1_371, %c0_372, %c1_373, %c1_374, %c0_375] : memref<2x2x7x7x12xf32, #tpu.memory_space<vmem>>, vector<1x1x6x6x12xf32>
    %561 = vector.shape_cast %560 : vector<1x1x6x6x12xf32> to vector<6x6x12xf32>
    %c0_376 = arith.constant 0 : index
    %c0_377 = arith.constant 0 : index
    %c168 = arith.constant 168 : index
    %562 = vector.load %arg10[%c0_376, %c0_377, %c168] : memref<6x6x192xf32, #tpu.memory_space<vmem>>, vector<6x6x12xf32>
    tpu.vector_store %arg10[%c0_376, %c0_377, %c168], %561 {strides = array<i32>} : memref<6x6x192xf32, #tpu.memory_space<vmem>>, vector<6x6x12xf32>,
    %c1_378 = arith.constant 1 : index
    %c1_379 = arith.constant 1 : index
    %c1_380 = arith.constant 1 : index
    %c1_381 = arith.constant 1 : index
    %c0_382 = arith.constant 0 : index
    %563 = vector.load %arg9[%c1_378, %c1_379, %c1_380, %c1_381, %c0_382] : memref<2x2x7x7x12xf32, #tpu.memory_space<vmem>>, vector<1x1x6x6x12xf32>
    %564 = vector.shape_cast %563 : vector<1x1x6x6x12xf32> to vector<6x6x12xf32>
    %c0_383 = arith.constant 0 : index
    %c0_384 = arith.constant 0 : index
    %c180 = arith.constant 180 : index
    %565 = vector.load %arg10[%c0_383, %c0_384, %c180] : memref<6x6x192xf32, #tpu.memory_space<vmem>>, vector<6x6x12xf32>
    tpu.vector_store %arg10[%c0_383, %c0_384, %c180], %564 {strides = array<i32>} : memref<6x6x192xf32, #tpu.memory_space<vmem>>, vector<6x6x12xf32>,
    %c0_385 = arith.constant 0 : index
    %c0_386 = arith.constant 0 : index
    %566 = vector.load %arg4[%c0_385, %c0_386] : memref<192x24xf32, #tpu.memory_space<vmem>>, vector<192x24xf32>
    %c0_387 = arith.constant 0 : index
    %c0_388 = arith.constant 0 : index
    %567 = vector.load %arg5[%c0_387, %c0_388] : memref<1x24xf32, #tpu.memory_space<vmem>>, vector<1x24xf32>
    %c0_389 = arith.constant 0 : index
    %c0_390 = arith.constant 0 : index
    %c0_391 = arith.constant 0 : index
    %568 = vector.load %arg10[%c0_389, %c0_390, %c0_391] : memref<6x6x192xf32, #tpu.memory_space<vmem>>, vector<1x6x192xf32>
    %569 = vector.shape_cast %568 : vector<1x6x192xf32> to vector<6x192xf32>
    %cst_392 = arith.constant dense<0.000000e+00> : vector<6x24xf32>
    %570 = tpu.matmul %569, %566, %cst_392 {dimension_numbers = #tpu.dot_dimension_numbers<[1], [0], [0], [1], [0, 0, 1, 1], [], []>} : vector<6x192xf32>, vector<192x24xf32>, vector<6x24xf32> -> vector<6x24xf32>
    %571 = vector.broadcast %567 : vector<1x24xf32> to vector<6x24xf32>
    %572 = arith.addf %570, %571 : vector<6x24xf32>
    %573 = vector.extract_strided_slice %572 {offsets = [0, 0], sizes = [1, 24], strides = [1, 1]} : vector<6x24xf32> to vector<1x24xf32>
    %c0_393 = arith.constant 0 : index
    %c0_394 = arith.constant 0 : index
    %574 = vector.load %arg11[%c0_393, %c0_394] : memref<1x864xf32, #tpu.memory_space<vmem>>, vector<1x24xf32>
    tpu.vector_store %arg11[%c0_393, %c0_394], %573 {strides = array<i32>} : memref<1x864xf32, #tpu.memory_space<vmem>>, vector<1x24xf32>,
    %575 = vector.extract_strided_slice %572 {offsets = [1, 0], sizes = [1, 24], strides = [1, 1]} : vector<6x24xf32> to vector<1x24xf32>
    %c0_395 = arith.constant 0 : index
    %c24_396 = arith.constant 24 : index
    %576 = vector.load %arg11[%c0_395, %c24_396] : memref<1x864xf32, #tpu.memory_space<vmem>>, vector<1x24xf32>
    tpu.vector_store %arg11[%c0_395, %c24_396], %575 {strides = array<i32>} : memref<1x864xf32, #tpu.memory_space<vmem>>, vector<1x24xf32>,
    %577 = vector.extract_strided_slice %572 {offsets = [2, 0], sizes = [1, 24], strides = [1, 1]} : vector<6x24xf32> to vector<1x24xf32>
    %c0_397 = arith.constant 0 : index
    %c48_398 = arith.constant 48 : index
    %578 = vector.load %arg11[%c0_397, %c48_398] : memref<1x864xf32, #tpu.memory_space<vmem>>, vector<1x24xf32>
    tpu.vector_store %arg11[%c0_397, %c48_398], %577 {strides = array<i32>} : memref<1x864xf32, #tpu.memory_space<vmem>>, vector<1x24xf32>,
    %579 = vector.extract_strided_slice %572 {offsets = [3, 0], sizes = [1, 24], strides = [1, 1]} : vector<6x24xf32> to vector<1x24xf32>
    %c0_399 = arith.constant 0 : index
    %c72_400 = arith.constant 72 : index
    %580 = vector.load %arg11[%c0_399, %c72_400] : memref<1x864xf32, #tpu.memory_space<vmem>>, vector<1x24xf32>
    tpu.vector_store %arg11[%c0_399, %c72_400], %579 {strides = array<i32>} : memref<1x864xf32, #tpu.memory_space<vmem>>, vector<1x24xf32>,
    %581 = vector.extract_strided_slice %572 {offsets = [4, 0], sizes = [1, 24], strides = [1, 1]} : vector<6x24xf32> to vector<1x24xf32>
    %c0_401 = arith.constant 0 : index
    %c96_402 = arith.constant 96 : index
    %582 = vector.load %arg11[%c0_401, %c96_402] : memref<1x864xf32, #tpu.memory_space<vmem>>, vector<1x24xf32>
    tpu.vector_store %arg11[%c0_401, %c96_402], %581 {strides = array<i32>} : memref<1x864xf32, #tpu.memory_space<vmem>>, vector<1x24xf32>,
    %583 = vector.extract_strided_slice %572 {offsets = [5, 0], sizes = [1, 24], strides = [1, 1]} : vector<6x24xf32> to vector<1x24xf32>
    %c0_403 = arith.constant 0 : index
    %c120_404 = arith.constant 120 : index
    %584 = vector.load %arg11[%c0_403, %c120_404] : memref<1x864xf32, #tpu.memory_space<vmem>>, vector<1x24xf32>
    tpu.vector_store %arg11[%c0_403, %c120_404], %583 {strides = array<i32>} : memref<1x864xf32, #tpu.memory_space<vmem>>, vector<1x24xf32>,
    %c1_405 = arith.constant 1 : index
    %c0_406 = arith.constant 0 : index
    %c0_407 = arith.constant 0 : index
    %585 = vector.load %arg10[%c1_405, %c0_406, %c0_407] : memref<6x6x192xf32, #tpu.memory_space<vmem>>, vector<1x6x192xf32>
    %586 = vector.shape_cast %585 : vector<1x6x192xf32> to vector<6x192xf32>
    %cst_408 = arith.constant dense<0.000000e+00> : vector<6x24xf32>
    %587 = tpu.matmul %586, %566, %cst_408 {dimension_numbers = #tpu.dot_dimension_numbers<[1], [0], [0], [1], [0, 0, 1, 1], [], []>} : vector<6x192xf32>, vector<192x24xf32>, vector<6x24xf32> -> vector<6x24xf32>
    %588 = vector.broadcast %567 : vector<1x24xf32> to vector<6x24xf32>
    %589 = arith.addf %587, %588 : vector<6x24xf32>
    %590 = vector.extract_strided_slice %589 {offsets = [0, 0], sizes = [1, 24], strides = [1, 1]} : vector<6x24xf32> to vector<1x24xf32>
    %c0_409 = arith.constant 0 : index
    %c144_410 = arith.constant 144 : index
    %591 = vector.load %arg11[%c0_409, %c144_410] : memref<1x864xf32, #tpu.memory_space<vmem>>, vector<1x24xf32>
    tpu.vector_store %arg11[%c0_409, %c144_410], %590 {strides = array<i32>} : memref<1x864xf32, #tpu.memory_space<vmem>>, vector<1x24xf32>,
    %592 = vector.extract_strided_slice %589 {offsets = [1, 0], sizes = [1, 24], strides = [1, 1]} : vector<6x24xf32> to vector<1x24xf32>
    %c0_411 = arith.constant 0 : index
    %c168_412 = arith.constant 168 : index
    %593 = vector.load %arg11[%c0_411, %c168_412] : memref<1x864xf32, #tpu.memory_space<vmem>>, vector<1x24xf32>
    tpu.vector_store %arg11[%c0_411, %c168_412], %592 {strides = array<i32>} : memref<1x864xf32, #tpu.memory_space<vmem>>, vector<1x24xf32>,
    %594 = vector.extract_strided_slice %589 {offsets = [2, 0], sizes = [1, 24], strides = [1, 1]} : vector<6x24xf32> to vector<1x24xf32>
    %c0_413 = arith.constant 0 : index
    %c192 = arith.constant 192 : index
    %595 = vector.load %arg11[%c0_413, %c192] : memref<1x864xf32, #tpu.memory_space<vmem>>, vector<1x24xf32>
    tpu.vector_store %arg11[%c0_413, %c192], %594 {strides = array<i32>} : memref<1x864xf32, #tpu.memory_space<vmem>>, vector<1x24xf32>,
    %596 = vector.extract_strided_slice %589 {offsets = [3, 0], sizes = [1, 24], strides = [1, 1]} : vector<6x24xf32> to vector<1x24xf32>
    %c0_414 = arith.constant 0 : index
    %c216 = arith.constant 216 : index
    %597 = vector.load %arg11[%c0_414, %c216] : memref<1x864xf32, #tpu.memory_space<vmem>>, vector<1x24xf32>
    tpu.vector_store %arg11[%c0_414, %c216], %596 {strides = array<i32>} : memref<1x864xf32, #tpu.memory_space<vmem>>, vector<1x24xf32>,
    %598 = vector.extract_strided_slice %589 {offsets = [4, 0], sizes = [1, 24], strides = [1, 1]} : vector<6x24xf32> to vector<1x24xf32>
    %c0_415 = arith.constant 0 : index
    %c240 = arith.constant 240 : index
    %599 = vector.load %arg11[%c0_415, %c240] : memref<1x864xf32, #tpu.memory_space<vmem>>, vector<1x24xf32>
    tpu.vector_store %arg11[%c0_415, %c240], %598 {strides = array<i32>} : memref<1x864xf32, #tpu.memory_space<vmem>>, vector<1x24xf32>,
    %600 = vector.extract_strided_slice %589 {offsets = [5, 0], sizes = [1, 24], strides = [1, 1]} : vector<6x24xf32> to vector<1x24xf32>
    %c0_416 = arith.constant 0 : index
    %c264 = arith.constant 264 : index
    %601 = vector.load %arg11[%c0_416, %c264] : memref<1x864xf32, #tpu.memory_space<vmem>>, vector<1x24xf32>
    tpu.vector_store %arg11[%c0_416, %c264], %600 {strides = array<i32>} : memref<1x864xf32, #tpu.memory_space<vmem>>, vector<1x24xf32>,
    %c2_417 = arith.constant 2 : index
    %c0_418 = arith.constant 0 : index
    %c0_419 = arith.constant 0 : index
    %602 = vector.load %arg10[%c2_417, %c0_418, %c0_419] : memref<6x6x192xf32, #tpu.memory_space<vmem>>, vector<1x6x192xf32>
    %603 = vector.shape_cast %602 : vector<1x6x192xf32> to vector<6x192xf32>
    %cst_420 = arith.constant dense<0.000000e+00> : vector<6x24xf32>
    %604 = tpu.matmul %603, %566, %cst_420 {dimension_numbers = #tpu.dot_dimension_numbers<[1], [0], [0], [1], [0, 0, 1, 1], [], []>} : vector<6x192xf32>, vector<192x24xf32>, vector<6x24xf32> -> vector<6x24xf32>
    %605 = vector.broadcast %567 : vector<1x24xf32> to vector<6x24xf32>
    %606 = arith.addf %604, %605 : vector<6x24xf32>
    %607 = vector.extract_strided_slice %606 {offsets = [0, 0], sizes = [1, 24], strides = [1, 1]} : vector<6x24xf32> to vector<1x24xf32>
    %c0_421 = arith.constant 0 : index
    %c288 = arith.constant 288 : index
    %608 = vector.load %arg11[%c0_421, %c288] : memref<1x864xf32, #tpu.memory_space<vmem>>, vector<1x24xf32>
    tpu.vector_store %arg11[%c0_421, %c288], %607 {strides = array<i32>} : memref<1x864xf32, #tpu.memory_space<vmem>>, vector<1x24xf32>,
    %609 = vector.extract_strided_slice %606 {offsets = [1, 0], sizes = [1, 24], strides = [1, 1]} : vector<6x24xf32> to vector<1x24xf32>
    %c0_422 = arith.constant 0 : index
    %c312 = arith.constant 312 : index
    %610 = vector.load %arg11[%c0_422, %c312] : memref<1x864xf32, #tpu.memory_space<vmem>>, vector<1x24xf32>
    tpu.vector_store %arg11[%c0_422, %c312], %609 {strides = array<i32>} : memref<1x864xf32, #tpu.memory_space<vmem>>, vector<1x24xf32>,
    %611 = vector.extract_strided_slice %606 {offsets = [2, 0], sizes = [1, 24], strides = [1, 1]} : vector<6x24xf32> to vector<1x24xf32>
    %c0_423 = arith.constant 0 : index
    %c336 = arith.constant 336 : index
    %612 = vector.load %arg11[%c0_423, %c336] : memref<1x864xf32, #tpu.memory_space<vmem>>, vector<1x24xf32>
    tpu.vector_store %arg11[%c0_423, %c336], %611 {strides = array<i32>} : memref<1x864xf32, #tpu.memory_space<vmem>>, vector<1x24xf32>,
    %613 = vector.extract_strided_slice %606 {offsets = [3, 0], sizes = [1, 24], strides = [1, 1]} : vector<6x24xf32> to vector<1x24xf32>
    %c0_424 = arith.constant 0 : index
    %c360 = arith.constant 360 : index
    %614 = vector.load %arg11[%c0_424, %c360] : memref<1x864xf32, #tpu.memory_space<vmem>>, vector<1x24xf32>
    tpu.vector_store %arg11[%c0_424, %c360], %613 {strides = array<i32>} : memref<1x864xf32, #tpu.memory_space<vmem>>, vector<1x24xf32>,
    %615 = vector.extract_strided_slice %606 {offsets = [4, 0], sizes = [1, 24], strides = [1, 1]} : vector<6x24xf32> to vector<1x24xf32>
    %c0_425 = arith.constant 0 : index
    %c384 = arith.constant 384 : index
    %616 = vector.load %arg11[%c0_425, %c384] : memref<1x864xf32, #tpu.memory_space<vmem>>, vector<1x24xf32>
    tpu.vector_store %arg11[%c0_425, %c384], %615 {strides = array<i32>} : memref<1x864xf32, #tpu.memory_space<vmem>>, vector<1x24xf32>,
    %617 = vector.extract_strided_slice %606 {offsets = [5, 0], sizes = [1, 24], strides = [1, 1]} : vector<6x24xf32> to vector<1x24xf32>
    %c0_426 = arith.constant 0 : index
    %c408 = arith.constant 408 : index
    %618 = vector.load %arg11[%c0_426, %c408] : memref<1x864xf32, #tpu.memory_space<vmem>>, vector<1x24xf32>
    tpu.vector_store %arg11[%c0_426, %c408], %617 {strides = array<i32>} : memref<1x864xf32, #tpu.memory_space<vmem>>, vector<1x24xf32>,
    %c3_427 = arith.constant 3 : index
    %c0_428 = arith.constant 0 : index
    %c0_429 = arith.constant 0 : index
    %619 = vector.load %arg10[%c3_427, %c0_428, %c0_429] : memref<6x6x192xf32, #tpu.memory_space<vmem>>, vector<1x6x192xf32>
    %620 = vector.shape_cast %619 : vector<1x6x192xf32> to vector<6x192xf32>
    %cst_430 = arith.constant dense<0.000000e+00> : vector<6x24xf32>
    %621 = tpu.matmul %620, %566, %cst_430 {dimension_numbers = #tpu.dot_dimension_numbers<[1], [0], [0], [1], [0, 0, 1, 1], [], []>} : vector<6x192xf32>, vector<192x24xf32>, vector<6x24xf32> -> vector<6x24xf32>
    %622 = vector.broadcast %567 : vector<1x24xf32> to vector<6x24xf32>
    %623 = arith.addf %621, %622 : vector<6x24xf32>
    %624 = vector.extract_strided_slice %623 {offsets = [0, 0], sizes = [1, 24], strides = [1, 1]} : vector<6x24xf32> to vector<1x24xf32>
    %c0_431 = arith.constant 0 : index
    %c432 = arith.constant 432 : index
    %625 = vector.load %arg11[%c0_431, %c432] : memref<1x864xf32, #tpu.memory_space<vmem>>, vector<1x24xf32>
    tpu.vector_store %arg11[%c0_431, %c432], %624 {strides = array<i32>} : memref<1x864xf32, #tpu.memory_space<vmem>>, vector<1x24xf32>,
    %626 = vector.extract_strided_slice %623 {offsets = [1, 0], sizes = [1, 24], strides = [1, 1]} : vector<6x24xf32> to vector<1x24xf32>
    %c0_432 = arith.constant 0 : index
    %c456 = arith.constant 456 : index
    %627 = vector.load %arg11[%c0_432, %c456] : memref<1x864xf32, #tpu.memory_space<vmem>>, vector<1x24xf32>
    tpu.vector_store %arg11[%c0_432, %c456], %626 {strides = array<i32>} : memref<1x864xf32, #tpu.memory_space<vmem>>, vector<1x24xf32>,
    %628 = vector.extract_strided_slice %623 {offsets = [2, 0], sizes = [1, 24], strides = [1, 1]} : vector<6x24xf32> to vector<1x24xf32>
    %c0_433 = arith.constant 0 : index
    %c480 = arith.constant 480 : index
    %629 = vector.load %arg11[%c0_433, %c480] : memref<1x864xf32, #tpu.memory_space<vmem>>, vector<1x24xf32>
    tpu.vector_store %arg11[%c0_433, %c480], %628 {strides = array<i32>} : memref<1x864xf32, #tpu.memory_space<vmem>>, vector<1x24xf32>,
    %630 = vector.extract_strided_slice %623 {offsets = [3, 0], sizes = [1, 24], strides = [1, 1]} : vector<6x24xf32> to vector<1x24xf32>
    %c0_434 = arith.constant 0 : index
    %c504 = arith.constant 504 : index
    %631 = vector.load %arg11[%c0_434, %c504] : memref<1x864xf32, #tpu.memory_space<vmem>>, vector<1x24xf32>
    tpu.vector_store %arg11[%c0_434, %c504], %630 {strides = array<i32>} : memref<1x864xf32, #tpu.memory_space<vmem>>, vector<1x24xf32>,
    %632 = vector.extract_strided_slice %623 {offsets = [4, 0], sizes = [1, 24], strides = [1, 1]} : vector<6x24xf32> to vector<1x24xf32>
    %c0_435 = arith.constant 0 : index
    %c528 = arith.constant 528 : index
    %633 = vector.load %arg11[%c0_435, %c528] : memref<1x864xf32, #tpu.memory_space<vmem>>, vector<1x24xf32>
    tpu.vector_store %arg11[%c0_435, %c528], %632 {strides = array<i32>} : memref<1x864xf32, #tpu.memory_space<vmem>>, vector<1x24xf32>,
    %634 = vector.extract_strided_slice %623 {offsets = [5, 0], sizes = [1, 24], strides = [1, 1]} : vector<6x24xf32> to vector<1x24xf32>
    %c0_436 = arith.constant 0 : index
    %c552 = arith.constant 552 : index
    %635 = vector.load %arg11[%c0_436, %c552] : memref<1x864xf32, #tpu.memory_space<vmem>>, vector<1x24xf32>
    tpu.vector_store %arg11[%c0_436, %c552], %634 {strides = array<i32>} : memref<1x864xf32, #tpu.memory_space<vmem>>, vector<1x24xf32>,
    %c4_437 = arith.constant 4 : index
    %c0_438 = arith.constant 0 : index
    %c0_439 = arith.constant 0 : index
    %636 = vector.load %arg10[%c4_437, %c0_438, %c0_439] : memref<6x6x192xf32, #tpu.memory_space<vmem>>, vector<1x6x192xf32>
    %637 = vector.shape_cast %636 : vector<1x6x192xf32> to vector<6x192xf32>
    %cst_440 = arith.constant dense<0.000000e+00> : vector<6x24xf32>
    %638 = tpu.matmul %637, %566, %cst_440 {dimension_numbers = #tpu.dot_dimension_numbers<[1], [0], [0], [1], [0, 0, 1, 1], [], []>} : vector<6x192xf32>, vector<192x24xf32>, vector<6x24xf32> -> vector<6x24xf32>
    %639 = vector.broadcast %567 : vector<1x24xf32> to vector<6x24xf32>
    %640 = arith.addf %638, %639 : vector<6x24xf32>
    %641 = vector.extract_strided_slice %640 {offsets = [0, 0], sizes = [1, 24], strides = [1, 1]} : vector<6x24xf32> to vector<1x24xf32>
    %c0_441 = arith.constant 0 : index
    %c576 = arith.constant 576 : index
    %642 = vector.load %arg11[%c0_441, %c576] : memref<1x864xf32, #tpu.memory_space<vmem>>, vector<1x24xf32>
    tpu.vector_store %arg11[%c0_441, %c576], %641 {strides = array<i32>} : memref<1x864xf32, #tpu.memory_space<vmem>>, vector<1x24xf32>,
    %643 = vector.extract_strided_slice %640 {offsets = [1, 0], sizes = [1, 24], strides = [1, 1]} : vector<6x24xf32> to vector<1x24xf32>
    %c0_442 = arith.constant 0 : index
    %c600 = arith.constant 600 : index
    %644 = vector.load %arg11[%c0_442, %c600] : memref<1x864xf32, #tpu.memory_space<vmem>>, vector<1x24xf32>
    tpu.vector_store %arg11[%c0_442, %c600], %643 {strides = array<i32>} : memref<1x864xf32, #tpu.memory_space<vmem>>, vector<1x24xf32>,
    %645 = vector.extract_strided_slice %640 {offsets = [2, 0], sizes = [1, 24], strides = [1, 1]} : vector<6x24xf32> to vector<1x24xf32>
    %c0_443 = arith.constant 0 : index
    %c624 = arith.constant 624 : index
    %646 = vector.load %arg11[%c0_443, %c624] : memref<1x864xf32, #tpu.memory_space<vmem>>, vector<1x24xf32>
    tpu.vector_store %arg11[%c0_443, %c624], %645 {strides = array<i32>} : memref<1x864xf32, #tpu.memory_space<vmem>>, vector<1x24xf32>,
    %647 = vector.extract_strided_slice %640 {offsets = [3, 0], sizes = [1, 24], strides = [1, 1]} : vector<6x24xf32> to vector<1x24xf32>
    %c0_444 = arith.constant 0 : index
    %c648 = arith.constant 648 : index
    %648 = vector.load %arg11[%c0_444, %c648] : memref<1x864xf32, #tpu.memory_space<vmem>>, vector<1x24xf32>
    tpu.vector_store %arg11[%c0_444, %c648], %647 {strides = array<i32>} : memref<1x864xf32, #tpu.memory_space<vmem>>, vector<1x24xf32>,
    %649 = vector.extract_strided_slice %640 {offsets = [4, 0], sizes = [1, 24], strides = [1, 1]} : vector<6x24xf32> to vector<1x24xf32>
    %c0_445 = arith.constant 0 : index
    %c672 = arith.constant 672 : index
    %650 = vector.load %arg11[%c0_445, %c672] : memref<1x864xf32, #tpu.memory_space<vmem>>, vector<1x24xf32>
    tpu.vector_store %arg11[%c0_445, %c672], %649 {strides = array<i32>} : memref<1x864xf32, #tpu.memory_space<vmem>>, vector<1x24xf32>,
    %651 = vector.extract_strided_slice %640 {offsets = [5, 0], sizes = [1, 24], strides = [1, 1]} : vector<6x24xf32> to vector<1x24xf32>
    %c0_446 = arith.constant 0 : index
    %c696 = arith.constant 696 : index
    %652 = vector.load %arg11[%c0_446, %c696] : memref<1x864xf32, #tpu.memory_space<vmem>>, vector<1x24xf32>
    tpu.vector_store %arg11[%c0_446, %c696], %651 {strides = array<i32>} : memref<1x864xf32, #tpu.memory_space<vmem>>, vector<1x24xf32>,
    %c5_447 = arith.constant 5 : index
    %c0_448 = arith.constant 0 : index
    %c0_449 = arith.constant 0 : index
    %653 = vector.load %arg10[%c5_447, %c0_448, %c0_449] : memref<6x6x192xf32, #tpu.memory_space<vmem>>, vector<1x6x192xf32>
    %654 = vector.shape_cast %653 : vector<1x6x192xf32> to vector<6x192xf32>
    %cst_450 = arith.constant dense<0.000000e+00> : vector<6x24xf32>
    %655 = tpu.matmul %654, %566, %cst_450 {dimension_numbers = #tpu.dot_dimension_numbers<[1], [0], [0], [1], [0, 0, 1, 1], [], []>} : vector<6x192xf32>, vector<192x24xf32>, vector<6x24xf32> -> vector<6x24xf32>
    %656 = vector.broadcast %567 : vector<1x24xf32> to vector<6x24xf32>
    %657 = arith.addf %655, %656 : vector<6x24xf32>
    %658 = vector.extract_strided_slice %657 {offsets = [0, 0], sizes = [1, 24], strides = [1, 1]} : vector<6x24xf32> to vector<1x24xf32>
    %c0_451 = arith.constant 0 : index
    %c720 = arith.constant 720 : index
    %659 = vector.load %arg11[%c0_451, %c720] : memref<1x864xf32, #tpu.memory_space<vmem>>, vector<1x24xf32>
    tpu.vector_store %arg11[%c0_451, %c720], %658 {strides = array<i32>} : memref<1x864xf32, #tpu.memory_space<vmem>>, vector<1x24xf32>,
    %660 = vector.extract_strided_slice %657 {offsets = [1, 0], sizes = [1, 24], strides = [1, 1]} : vector<6x24xf32> to vector<1x24xf32>
    %c0_452 = arith.constant 0 : index
    %c744 = arith.constant 744 : index
    %661 = vector.load %arg11[%c0_452, %c744] : memref<1x864xf32, #tpu.memory_space<vmem>>, vector<1x24xf32>
    tpu.vector_store %arg11[%c0_452, %c744], %660 {strides = array<i32>} : memref<1x864xf32, #tpu.memory_space<vmem>>, vector<1x24xf32>,
    %662 = vector.extract_strided_slice %657 {offsets = [2, 0], sizes = [1, 24], strides = [1, 1]} : vector<6x24xf32> to vector<1x24xf32>
    %c0_453 = arith.constant 0 : index
    %c768 = arith.constant 768 : index
    %663 = vector.load %arg11[%c0_453, %c768] : memref<1x864xf32, #tpu.memory_space<vmem>>, vector<1x24xf32>
    tpu.vector_store %arg11[%c0_453, %c768], %662 {strides = array<i32>} : memref<1x864xf32, #tpu.memory_space<vmem>>, vector<1x24xf32>,
    %664 = vector.extract_strided_slice %657 {offsets = [3, 0], sizes = [1, 24], strides = [1, 1]} : vector<6x24xf32> to vector<1x24xf32>
    %c0_454 = arith.constant 0 : index
    %c792 = arith.constant 792 : index
    %665 = vector.load %arg11[%c0_454, %c792] : memref<1x864xf32, #tpu.memory_space<vmem>>, vector<1x24xf32>
    tpu.vector_store %arg11[%c0_454, %c792], %664 {strides = array<i32>} : memref<1x864xf32, #tpu.memory_space<vmem>>, vector<1x24xf32>,
    %666 = vector.extract_strided_slice %657 {offsets = [4, 0], sizes = [1, 24], strides = [1, 1]} : vector<6x24xf32> to vector<1x24xf32>
    %c0_455 = arith.constant 0 : index
    %c816 = arith.constant 816 : index
    %667 = vector.load %arg11[%c0_455, %c816] : memref<1x864xf32, #tpu.memory_space<vmem>>, vector<1x24xf32>
    tpu.vector_store %arg11[%c0_455, %c816], %666 {strides = array<i32>} : memref<1x864xf32, #tpu.memory_space<vmem>>, vector<1x24xf32>,
    %668 = vector.extract_strided_slice %657 {offsets = [5, 0], sizes = [1, 24], strides = [1, 1]} : vector<6x24xf32> to vector<1x24xf32>
    %c0_456 = arith.constant 0 : index
    %c840 = arith.constant 840 : index
    %669 = vector.load %arg11[%c0_456, %c840] : memref<1x864xf32, #tpu.memory_space<vmem>>, vector<1x24xf32>
    tpu.vector_store %arg11[%c0_456, %c840], %668 {strides = array<i32>} : memref<1x864xf32, #tpu.memory_space<vmem>>, vector<1x24xf32>,
    %c0_457 = arith.constant 0 : index
    %c0_458 = arith.constant 0 : index
    %670 = vector.load %arg11[%c0_457, %c0_458] : memref<1x864xf32, #tpu.memory_space<vmem>>, vector<1x864xf32>
    %c0_459 = arith.constant 0 : index
    %c0_460 = arith.constant 0 : index
    %671 = vector.load %arg6[%c0_459, %c0_460] : memref<864x128xf32, #tpu.memory_space<vmem>>, vector<864x128xf32>
    %cst_461 = arith.constant dense<0.000000e+00> : vector<1x128xf32>
    %672 = tpu.matmul %670, %671, %cst_461 {dimension_numbers = #tpu.dot_dimension_numbers<[1], [0], [0], [1], [0, 0, 1, 1], [], []>} : vector<1x864xf32>, vector<864x128xf32>, vector<1x128xf32> -> vector<1x128xf32>
    %c0_462 = arith.constant 0 : index
    %c0_463 = arith.constant 0 : index
    %673 = vector.load %arg7[%c0_462, %c0_463] : memref<1x128xf32, #tpu.memory_space<vmem>>, vector<1x128xf32>
    %674 = arith.addf %672, %673 : vector<1x128xf32>
    %c0_464 = arith.constant 0 : index
    %c0_465 = arith.constant 0 : index
    %c0_466 = arith.constant 0 : index
    %675 = vector.load %arg8[%c0_464, %c0_465, %c0_466] : memref<1x1x128xf32, #tpu.memory_space<vmem>>, vector<1x1x128xf32>
    %676 = vector.shape_cast %675 : vector<1x1x128xf32> to vector<1x128xf32>
    %677 = vector.shape_cast %674 : vector<1x128xf32> to vector<1x1x128xf32>
    tpu.vector_store %arg8[%c0_464, %c0_465, %c0_466], %677 {strides = array<i32>} : memref<1x1x128xf32, #tpu.memory_space<vmem>>, vector<1x1x128xf32>,
    return
  }
  func.func @transform_0(%arg0: i32) -> (i32, i32, i32, i32) {
    %c0_i32 = arith.constant 0 : i32
    %c0_i32_0 = arith.constant 0 : i32
    %c0_i32_1 = arith.constant 0 : i32
    %c0_i32_2 = arith.constant 0 : i32
    return %arg0, %c0_i32, %c0_i32_0, %c0_i32_1 : i32, i32, i32, i32
  }
  func.func @transform_1(%arg0: i32) -> (i32, i32) {
    %c0_i32 = arith.constant 0 : i32
    %c0_i32_0 = arith.constant 0 : i32
    %c0_i32_1 = arith.constant 0 : i32
    return %c0_i32, %c0_i32_0 : i32, i32
  }
  func.func @transform_2(%arg0: i32) -> (i32, i32) {
    %c0_i32 = arith.constant 0 : i32
    %c0_i32_0 = arith.constant 0 : i32
    %c0_i32_1 = arith.constant 0 : i32
    return %c0_i32, %c0_i32_0 : i32, i32
  }
  func.func @transform_3(%arg0: i32) -> (i32, i32) {
    %c0_i32 = arith.constant 0 : i32
    %c0_i32_0 = arith.constant 0 : i32
    %c0_i32_1 = arith.constant 0 : i32
    return %c0_i32, %c0_i32_0 : i32, i32
  }
  func.func @transform_4(%arg0: i32) -> (i32, i32) {
    %c0_i32 = arith.constant 0 : i32
    %c0_i32_0 = arith.constant 0 : i32
    %c0_i32_1 = arith.constant 0 : i32
    return %c0_i32, %c0_i32_0 : i32, i32
  }
  func.func @transform_5(%arg0: i32) -> (i32, i32) {
    %c0_i32 = arith.constant 0 : i32
    %c0_i32_0 = arith.constant 0 : i32
    %c0_i32_1 = arith.constant 0 : i32
    return %c0_i32, %c0_i32_0 : i32, i32
  }
  func.func @transform_6(%arg0: i32) -> (i32, i32) {
    %c0_i32 = arith.constant 0 : i32
    %c0_i32_0 = arith.constant 0 : i32
    %c0_i32_1 = arith.constant 0 : i32
    return %c0_i32, %c0_i32_0 : i32, i32
  }
  func.func @transform_7(%arg0: i32) -> (i32, i32, i32) {
    %c0_i32 = arith.constant 0 : i32
    %c0_i32_0 = arith.constant 0 : i32
    %c0_i32_1 = arith.constant 0 : i32
    return %arg0, %c0_i32, %c0_i32_0 : i32, i32, i32
  }
}

</mosaic_0001>

<llo_original>
// kernel: encoder_forward.1
$region0: #{encoder_forward.1}
  #allocation0 [shape = 'u32[]', space=smem, size = 0x4, offset = 0x4, fixed_abs, tag = 'smem constant byte address 0x4 - core index']
  #allocation1 [shape = 'u32[144,128]{1,0:T(1,128)}', space=vmem, size = 0x12000, scoped, tag = 'internal scratch']
  #allocation2 [shape = 'f32[2,2,7,7,12]{4,3,2,1,0:T(8,128)}', space=vmem, size = 0x1c000, scoped, tag = 'scratch operand']
  #allocation3 [shape = 'f32[6,6,192]{2,1,0:T(8,128)}', space=vmem, size = 0xc000, scoped, tag = 'scratch operand']
  #allocation4 [shape = 'f32[1,864]{1,0:T(1,128)}', space=vmem, size = 0xe00, scoped, tag = 'scratch operand']
  %s0 = inlined_call_operand.vmem [shape: f32[2,8,8,16], index: 0, kind: input, shape index: {}]
  %s1 = inlined_call_operand.vmem [shape: f32[16,12], index: 1, kind: input, shape index: {}]
  %s2 = inlined_call_operand.vmem [shape: f32[1,12], index: 2, kind: input, shape index: {}]
  %s3 = inlined_call_operand.vmem [shape: f32[192,24], index: 3, kind: input, shape index: {}]
  %s4 = inlined_call_operand.vmem [shape: f32[1,24], index: 4, kind: input, shape index: {}]
  %s5 = inlined_call_operand.vmem [shape: f32[864,128], index: 5, kind: input, shape index: {}]
  %s6 = inlined_call_operand.vmem [shape: f32[1,128], index: 6, kind: input, shape index: {}]
  %s7 = inlined_call_operand.hbm [shape: f32[2,1,128], index: 7, kind: output, shape index: {}]
  %s8 = sld [smem:[#allocation0]]
  $region61: #{encoder_forward.1} parent=0
    _
  %s10 = ssub.s32 1, %s8
  %s11 = scalar_select 0, %s10, %s8
  $region1: #{encoder_forward.1} parent=0
    #allocation5 [shape = 'u8[1024]{0}', space=vmem, size = 0x400, scoped, tag = 'output window, operand 0']
    #allocation6 [shape = 's32[2]{0}', space=sflag, size = 0x8, scoped, tag = 'scoped memory for encoder_forward.1']
    %12 = vsyncpa [#allocation6], 0
    %s13 = scalar_lea.sflag [#allocation6], 1
    %14 = vsyncpa %s13, 0
    loop: start=0, step=1, limit=4
    $region2: #{encoder_forward.1} parent=1 // loop_pre_header
      _
    $region3: #{encoder_forward.1} parent=1 // loop_header
      %s16 = sphi 0, %s20
      %p17 = scmp.ge.s32.totalorder %s16, 4
      %s26 = sphi 0, %s28
      %s29 = sphi 0, %s26
      %s30 = sphi 0, %s29
      %s46 = sphi 0, %s30
      %s50 = sphi 0, %s50
      %s52 = sphi 0, %s50
      %s53 = sphi 0, %s52
      %s67 = sphi 0, %s53
      %s71 = sphi 0, %s71
      %s73 = sphi 0, %s71
      %s74 = sphi 0, %s73
      %s88 = sphi 0, %s74
      %s92 = sphi 0, %s92
      %s94 = sphi 0, %s92
      %s95 = sphi 0, %s94
      %s109 = sphi 0, %s95
      %s113 = sphi 0, %s113
      %s115 = sphi 0, %s113
      %s116 = sphi 0, %s115
      %s130 = sphi 0, %s116
      %s134 = sphi 0, %s134
      %s136 = sphi 0, %s134
      %s137 = sphi 0, %s136
      %s151 = sphi 0, %s137
      %s155 = sphi 0, %s155
      %s157 = sphi 0, %s155
      %s158 = sphi 0, %s157
      %s172 = sphi 0, %s158
      %s178 = sphi 0, %s180
      %s181 = sphi 0, %s178
      %s182 = sphi 0, %s181
      %s198 = sphi 0, %s182
    $region4: #{encoder_forward.1} parent=1 // loop_header_branch
      %19 = sbr.rel (%p17) target = $region8
    $region5: #{encoder_forward.1} parent=1 // loop_body
      %s21 = ssub.s32 %s16, 1
      %s22 = ssub.s32 %s16, 2
      %s23 = sadd.s32 %s16, 1
      %s24 = ssub.s32 %s16, %s23
      %p25 = scmp.eq.s32.totalorder %s24, 0
      %s27 = sadd.s32 %s26, 1
      %s28 = scalar_select %p25, %s26, %s27
      %p31 = pneg %p25
      %p32 = scmp.eq.s32.totalorder %s16, 1
      %p33 = por %p31, %p32
      %p34 = scmp.ne.s32.totalorder %s26, %s29
      %p35 = scmp.eq.s32.totalorder %s16, 0
      %p36 = por %p34, %p35
      %p37 = scmp.ne.s32.totalorder %s26, %s29
      %p38 = scmp.eq.s32.totalorder %s21, 1
      %p39 = por %p37, %p38
      %p40 = scmp.ne.s32.totalorder %s29, %s30
      %p41 = scmp.eq.s32.totalorder %s21, 0
      %p42 = por %p40, %p41
      %p43 = scmp.ne.s32.totalorder %s29, %s30
      %p44 = scmp.eq.s32.totalorder %s22, 1
      %p45 = por %p43, %p44
      %p47 = scmp.ne.s32.totalorder %s30, %s46
      %p48 = scmp.eq.s32.totalorder %s22, 0
      %p49 = por %p47, %p48
      %s51 = sadd.s32 %s50, 1
      %p54 = scmp.eq.s32.totalorder %s16, 1
      %p55 = scmp.ne.s32.totalorder %s50, %s52
      %p56 = scmp.eq.s32.totalorder %s16, 0
      %p57 = por %p55, %p56
      %p58 = scmp.ne.s32.totalorder %s50, %s52
      %p59 = scmp.eq.s32.totalorder %s21, 1
      %p60 = por %p58, %p59
      %p61 = scmp.ne.s32.totalorder %s52, %s53
      %p62 = scmp.eq.s32.totalorder %s21, 0
      %p63 = por %p61, %p62
      %p64 = scmp.ne.s32.totalorder %s52, %s53
      %p65 = scmp.eq.s32.totalorder %s22, 1
      %p66 = por %p64, %p65
      %p68 = scmp.ne.s32.totalorder %s53, %s67
      %p69 = scmp.eq.s32.totalorder %s22, 0
      %p70 = por %p68, %p69
      %s72 = sadd.s32 %s71, 1
      %p75 = scmp.eq.s32.totalorder %s16, 1
      %p76 = scmp.ne.s32.totalorder %s71, %s73
      %p77 = scmp.eq.s32.totalorder %s16, 0
      %p78 = por %p76, %p77
      %p79 = scmp.ne.s32.totalorder %s71, %s73
      %p80 = scmp.eq.s32.totalorder %s21, 1
      %p81 = por %p79, %p80
      %p82 = scmp.ne.s32.totalorder %s73, %s74
      %p83 = scmp.eq.s32.totalorder %s21, 0
      %p84 = por %p82, %p83
      %p85 = scmp.ne.s32.totalorder %s73, %s74
      %p86 = scmp.eq.s32.totalorder %s22, 1
      %p87 = por %p85, %p86
      %p89 = scmp.ne.s32.totalorder %s74, %s88
      %p90 = scmp.eq.s32.totalorder %s22, 0
      %p91 = por %p89, %p90
      %s93 = sadd.s32 %s92, 1
      %p96 = scmp.eq.s32.totalorder %s16, 1
      %p97 = scmp.ne.s32.totalorder %s92, %s94
      %p98 = scmp.eq.s32.totalorder %s16, 0
      %p99 = por %p97, %p98
      %p100 = scmp.ne.s32.totalorder %s92, %s94
      %p101 = scmp.eq.s32.totalorder %s21, 1
      %p102 = por %p100, %p101
      %p103 = scmp.ne.s32.totalorder %s94, %s95
      %p104 = scmp.eq.s32.totalorder %s21, 0
      %p105 = por %p103, %p104
      %p106 = scmp.ne.s32.totalorder %s94, %s95
      %p107 = scmp.eq.s32.totalorder %s22, 1
      %p108 = por %p106, %p107
      %p110 = scmp.ne.s32.totalorder %s95, %s109
      %p111 = scmp.eq.s32.totalorder %s22, 0
      %p112 = por %p110, %p111
      %s114 = sadd.s32 %s113, 1
      %p117 = scmp.eq.s32.totalorder %s16, 1
      %p118 = scmp.ne.s32.totalorder %s113, %s115
      %p119 = scmp.eq.s32.totalorder %s16, 0
      %p120 = por %p118, %p119
      %p121 = scmp.ne.s32.totalorder %s113, %s115
      %p122 = scmp.eq.s32.totalorder %s21, 1
      %p123 = por %p121, %p122
      %p124 = scmp.ne.s32.totalorder %s115, %s116
      %p125 = scmp.eq.s32.totalorder %s21, 0
      %p126 = por %p124, %p125
      %p127 = scmp.ne.s32.totalorder %s115, %s116
      %p128 = scmp.eq.s32.totalorder %s22, 1
      %p129 = por %p127, %p128
      %p131 = scmp.ne.s32.totalorder %s116, %s130
      %p132 = scmp.eq.s32.totalorder %s22, 0
      %p133 = por %p131, %p132
      %s135 = sadd.s32 %s134, 1
      %p138 = scmp.eq.s32.totalorder %s16, 1
      %p139 = scmp.ne.s32.totalorder %s134, %s136
      %p140 = scmp.eq.s32.totalorder %s16, 0
      %p141 = por %p139, %p140
      %p142 = scmp.ne.s32.totalorder %s134, %s136
      %p143 = scmp.eq.s32.totalorder %s21, 1
      %p144 = por %p142, %p143
      %p145 = scmp.ne.s32.totalorder %s136, %s137
      %p146 = scmp.eq.s32.totalorder %s21, 0
      %p147 = por %p145, %p146
      %p148 = scmp.ne.s32.totalorder %s136, %s137
      %p149 = scmp.eq.s32.totalorder %s22, 1
      %p150 = por %p148, %p149
      %p152 = scmp.ne.s32.totalorder %s137, %s151
      %p153 = scmp.eq.s32.totalorder %s22, 0
      %p154 = por %p152, %p153
      %s156 = sadd.s32 %s155, 1
      %p159 = scmp.eq.s32.totalorder %s16, 1
      %p160 = scmp.ne.s32.totalorder %s155, %s157
      %p161 = scmp.eq.s32.totalorder %s16, 0
      %p162 = por %p160, %p161
      %p163 = scmp.ne.s32.totalorder %s155, %s157
      %p164 = scmp.eq.s32.totalorder %s21, 1
      %p165 = por %p163, %p164
      %p166 = scmp.ne.s32.totalorder %s157, %s158
      %p167 = scmp.eq.s32.totalorder %s21, 0
      %p168 = por %p166, %p167
      %p169 = scmp.ne.s32.totalorder %s157, %s158
      %p170 = scmp.eq.s32.totalorder %s22, 1
      %p171 = por %p169, %p170
      %p173 = scmp.ne.s32.totalorder %s158, %s172
      %p174 = scmp.eq.s32.totalorder %s22, 0
      %p175 = por %p173, %p174
      %s176 = ssub.s32 %s16, %s23
      %p177 = scmp.eq.s32.totalorder %s176, 0
      %s179 = sadd.s32 %s178, 1
      %s180 = scalar_select %p177, %s178, %s179
      %p183 = pneg %p177
      %p184 = scmp.eq.s32.totalorder %s16, 1
      %p185 = por %p183, %p184
      %p186 = scmp.ne.s32.totalorder %s178, %s181
      %p187 = scmp.eq.s32.totalorder %s16, 0
      %p188 = por %p186, %p187
      %p189 = scmp.ne.s32.totalorder %s178, %s181
      %p190 = scmp.eq.s32.totalorder %s21, 1
      %p191 = por %p189, %p190
      %p192 = scmp.ne.s32.totalorder %s181, %s182
      %p193 = scmp.eq.s32.totalorder %s21, 0
      %p194 = por %p192, %p193
      %p195 = scmp.ne.s32.totalorder %s181, %s182
      %p196 = scmp.eq.s32.totalorder %s22, 1
      %p197 = por %p195, %p196
      %p199 = scmp.ne.s32.totalorder %s182, %s198
      %p200 = scmp.eq.s32.totalorder %s22, 0
      %p201 = por %p199, %p200
      %p202 = scmp.le.s32.totalorder 1, %s16
      %p203 = scmp.lt.s32.totalorder %s16, 3
      %p204 = pnand %p202, %p203
      %p205 = pneg %p204
      // Predicated region
      $region9: #{encoder_forward.1} parent=5 // pred_check
        _
      $region10: #{encoder_forward.1} parent=5 // pred_check_branch
        %207 = sbr.rel (%p204) target = $region12
      $region11: #{encoder_forward.1} parent=5 // pred_region
        %s208 = ssub.s32 %s16, 1
        // Predicated region
        $region13: #{encoder_forward.1} parent=11 // pred_check
          %p209 = pneg %p63
        $region14: #{encoder_forward.1} parent=11 // pred_check_branch
          %211 = sbr.rel (%p209) target = $region16
        $region15: #{encoder_forward.1} parent=11 // pred_region
          _
        $region16: #{encoder_forward.1} parent=11 // pred_fallthru
          _
        // Predicated region
        $region17: #{encoder_forward.1} parent=11 // pred_check
          %p212 = pneg %p84
        $region18: #{encoder_forward.1} parent=11 // pred_check_branch
          %214 = sbr.rel (%p212) target = $region20
        $region19: #{encoder_forward.1} parent=11 // pred_region
          _
        $region20: #{encoder_forward.1} parent=11 // pred_fallthru
          _
        // Predicated region
        $region21: #{encoder_forward.1} parent=11 // pred_check
          %p215 = pneg %p105
        $region22: #{encoder_forward.1} parent=11 // pred_check_branch
          %217 = sbr.rel (%p215) target = $region24
        $region23: #{encoder_forward.1} parent=11 // pred_region
          _
        $region24: #{encoder_forward.1} parent=11 // pred_fallthru
          _
        // Predicated region
        $region25: #{encoder_forward.1} parent=11 // pred_check
          %p218 = pneg %p126
        $region26: #{encoder_forward.1} parent=11 // pred_check_branch
          %220 = sbr.rel (%p218) target = $region28
        $region27: #{encoder_forward.1} parent=11 // pred_region
          _
        $region28: #{encoder_forward.1} parent=11 // pred_fallthru
          _
        // Predicated region
        $region29: #{encoder_forward.1} parent=11 // pred_check
          %p221 = pneg %p147
        $region30: #{encoder_forward.1} parent=11 // pred_check_branch
          %223 = sbr.rel (%p221) target = $region32
        $region31: #{encoder_forward.1} parent=11 // pred_region
          _
        $region32: #{encoder_forward.1} parent=11 // pred_fallthru
          _
        // Predicated region
        $region33: #{encoder_forward.1} parent=11 // pred_check
          %p224 = pneg %p168
        $region34: #{encoder_forward.1} parent=11 // pred_check_branch
          %226 = sbr.rel (%p224) target = $region36
        $region35: #{encoder_forward.1} parent=11 // pred_region
          _
        $region36: #{encoder_forward.1} parent=11 // pred_fallthru
          _
      $region12: #{encoder_forward.1} parent=5 // pred_fallthru
        _
      %p227 = scmp.lt.s32.totalorder %s16, 2
      // Predicated region
      $region37: #{encoder_forward.1} parent=5 // pred_check
        %p228 = pneg %p227
      $region38: #{encoder_forward.1} parent=5 // pred_check_branch
        %230 = sbr.rel (%p228) target = $region40
      $region39: #{encoder_forward.1} parent=5 // pred_region
        // Predicated region
        $region41: #{encoder_forward.1} parent=39 // pred_check
          %p231 = pneg %p36
        $region42: #{encoder_forward.1} parent=39 // pred_check_branch
          %233 = sbr.rel (%p231) target = $region44
        $region43: #{encoder_forward.1} parent=39 // pred_region
          %p234 = scmp.lt.s32.totalorder %s16, 1
          %s235 = scalar_select %p234, %s16, 1
          %s236 = smul.addr %s235, 8
          %s237 = smul.addr %s236, 8
          %s238 = scalar_lea.vmem %s0, %s237
        $region44: #{encoder_forward.1} parent=39 // pred_fallthru
          _
      $region40: #{encoder_forward.1} parent=5 // pred_fallthru
        _
      %p239 = scmp.le.s32.totalorder 1, %s16
      %p240 = scmp.lt.s32.totalorder %s16, 3
      %p241 = pnand %p239, %p240
      %p242 = pneg %p241
      // Predicated region
      $region45: #{encoder_forward.1} parent=5 // pred_check
        _
      $region46: #{encoder_forward.1} parent=5 // pred_check_branch
        %244 = sbr.rel (%p241) target = $region48
      $region47: #{encoder_forward.1} parent=5 // pred_region
        %s245 = ssub.s32 %s16, 1
        %p246 = scmp.lt.s32.totalorder %s21, 1
        %s247 = scalar_select %p246, %s21, 1
        %s248 = smul.addr %s247, 8
        %s249 = smul.addr %s248, 8
        %s250 = scalar_lea.vmem %s0, %s249
        %p251 = pneg %p42
        %p252 = pneg %p39
        %p253 = pneg %p63
        %p254 = pneg %p60
        %p255 = pneg %p84
        %p256 = pneg %p81
        %p257 = pneg %p105
        %p258 = pneg %p102
        %p259 = pneg %p126
        %p260 = pneg %p123
        %p261 = pneg %p147
        %p262 = pneg %p144
        %p263 = pneg %p168
        %p264 = pneg %p165
        %p265 = pneg %p194
        %p266 = pneg %p191
        %s267 = sand.u32 %s181, 1
        %s268 = scalar_lea.sflag [#allocation6], %s267
        %s269 = sand.u32 %s181, 1
        %s270 = scalar_lea.vmem [#allocation5], %s269
        %p271 = scmp.lt.s32.totalorder %s21, 1
        %s272 = scalar_select %p271, %s21, 1
        %s273 = smul.addr %s272, 8
        %s274 = smul.addr %s273, 8
        %s275 = scalar_lea.vmem %s0, %s274
        %v276 = vld [vmem:[%s1] sm:$0xff]
        %v277 = vld [vmem:[%s1 + $0x8] sm:$0xff]
        %v278 = vld [vmem:[%s2] sm:$0x1]
        %v279 = vld [vmem:[%s275] sm:$0x7f]
        %v280 = vld [vmem:[%s275 + $0x8] sm:$0x7f]
        %v281 = vld [vmem:[%s275 + $0x10] sm:$0x7f]
        %v282 = vld [vmem:[%s275 + $0x18] sm:$0x7f]
        %v283 = vld [vmem:[%s275 + $0x20] sm:$0x7f]
        %v284 = vld [vmem:[%s275 + $0x28] sm:$0x7f]
        %v285 = vld [vmem:[%s275 + $0x30] sm:$0x7f]
        %287 = vset.pattern.permute.xlu0 0
        %288 = vperm.xlu0 %287, %v279
        %v289 = vpop.permute.xlu0 %288
        %292 = vset.pattern.permute.xlu0 0
        %293 = vperm.xlu0 %292, %v280
        %v294 = vpop.permute.xlu0 %293
        %297 = vset.pattern.permute.xlu0 0
        %298 = vperm.xlu0 %297, %v281
        %v299 = vpop.permute.xlu0 %298
        %302 = vset.pattern.permute.xlu0 0
        %303 = vperm.xlu0 %302, %v282
        %v304 = vpop.permute.xlu0 %303
        %307 = vset.pattern.permute.xlu0 0
        %308 = vperm.xlu0 %307, %v283
        %v309 = vpop.permute.xlu0 %308
        %312 = vset.pattern.permute.xlu0 0
        %313 = vperm.xlu0 %312, %v284
        %v314 = vpop.permute.xlu0 %313
        %317 = vset.pattern.permute.xlu0 0
        %318 = vperm.xlu0 %317, %v285
        %v319 = vpop.permute.xlu0 %318
        %v321 = vlaneseq
        %v322 = vshrl.u32 %v321, 7
        %v323 = vsub.s32 0, %v322
        %v324 = vrot.slane %v276, %v323
        %v325 = vmul.f32 %v289, %v324
        %v326 = vmul.f32 %v294, %v324
        %v327 = vmul.f32 %v299, %v324
        %v328 = vmul.f32 %v304, %v324
        %v329 = vmul.f32 %v309, %v324
        %v330 = vmul.f32 %v314, %v324
        %v331 = vmul.f32 %v319, %v324
        %v332 = vadd.f32 %v325, 0.0
        %v333 = vadd.f32 %v326, 0.0
        %v334 = vadd.f32 %v327, 0.0
        %v335 = vadd.f32 %v328, 0.0
        %v336 = vadd.f32 %v329, 0.0
        %v337 = vadd.f32 %v330, 0.0
        %v338 = vadd.f32 %v331, 0.0
        %339 = vset.pattern.permute.xlu0 1
        %340 = vperm.xlu0 %339, %v279
        %v341 = vpop.permute.xlu0 %340
        %343 = vset.pattern.permute.xlu0 1
        %344 = vperm.xlu0 %343, %v280
        %v345 = vpop.permute.xlu0 %344
        %347 = vset.pattern.permute.xlu0 1
        %348 = vperm.xlu0 %347, %v281
        %v349 = vpop.permute.xlu0 %348
        %351 = vset.pattern.permute.xlu0 1
        %352 = vperm.xlu0 %351, %v282
        %v353 = vpop.permute.xlu0 %352
        %355 = vset.pattern.permute.xlu0 1
        %356 = vperm.xlu0 %355, %v283
        %v357 = vpop.permute.xlu0 %356
        %359 = vset.pattern.permute.xlu0 1
        %360 = vperm.xlu0 %359, %v284
        %v361 = vpop.permute.xlu0 %360
        %363 = vset.pattern.permute.xlu0 1
        %364 = vperm.xlu0 %363, %v285
        %v365 = vpop.permute.xlu0 %364
        %v367 = vlaneseq
        %v368 = vshrl.u32 %v367, 7
        %v369 = vsub.s32 1, %v368
        %v370 = vrot.slane %v276, %v369
        %v371 = vmul.f32 %v341, %v370
        %v372 = vmul.f32 %v345, %v370
        %v373 = vmul.f32 %v349, %v370
        %v374 = vmul.f32 %v353, %v370
        %v375 = vmul.f32 %v357, %v370
        %v376 = vmul.f32 %v361, %v370
        %v377 = vmul.f32 %v365, %v370
        %v378 = vadd.f32 %v332, %v371
        %v379 = vadd.f32 %v333, %v372
        %v380 = vadd.f32 %v334, %v373
        %v381 = vadd.f32 %v335, %v374
        %v382 = vadd.f32 %v336, %v375
        %v383 = vadd.f32 %v337, %v376
        %v384 = vadd.f32 %v338, %v377
        %385 = vset.pattern.permute.xlu0 2
        %386 = vperm.xlu0 %385, %v279
        %v387 = vpop.permute.xlu0 %386
        %389 = vset.pattern.permute.xlu0 2
        %390 = vperm.xlu0 %389, %v280
        %v391 = vpop.permute.xlu0 %390
        %393 = vset.pattern.permute.xlu0 2
        %394 = vperm.xlu0 %393, %v281
        %v395 = vpop.permute.xlu0 %394
        %397 = vset.pattern.permute.xlu0 2
        %398 = vperm.xlu0 %397, %v282
        %v399 = vpop.permute.xlu0 %398
        %401 = vset.pattern.permute.xlu0 2
        %402 = vperm.xlu0 %401, %v283
        %v403 = vpop.permute.xlu0 %402
        %405 = vset.pattern.permute.xlu0 2
        %406 = vperm.xlu0 %405, %v284
        %v407 = vpop.permute.xlu0 %406
        %409 = vset.pattern.permute.xlu0 2
        %410 = vperm.xlu0 %409, %v285
        %v411 = vpop.permute.xlu0 %410
        %v413 = vlaneseq
        %v414 = vshrl.u32 %v413, 7
        %v415 = vsub.s32 2, %v414
        %v416 = vrot.slane %v276, %v415
        %v417 = vmul.f32 %v387, %v416
        %v418 = vmul.f32 %v391, %v416
        %v419 = vmul.f32 %v395, %v416
        %v420 = vmul.f32 %v399, %v416
        %v421 = vmul.f32 %v403, %v416
        %v422 = vmul.f32 %v407, %v416
        %v423 = vmul.f32 %v411, %v416
        %v424 = vadd.f32 %v378, %v417
        %v425 = vadd.f32 %v379, %v418
        %v426 = vadd.f32 %v380, %v419
        %v427 = vadd.f32 %v381, %v420
        %v428 = vadd.f32 %v382, %v421
        %v429 = vadd.f32 %v383, %v422
        %v430 = vadd.f32 %v384, %v423
        %431 = vset.pattern.permute.xlu0 3
        %432 = vperm.xlu0 %431, %v279
        %v433 = vpop.permute.xlu0 %432
        %435 = vset.pattern.permute.xlu0 3
        %436 = vperm.xlu0 %435, %v280
        %v437 = vpop.permute.xlu0 %436
        %439 = vset.pattern.permute.xlu0 3
        %440 = vperm.xlu0 %439, %v281
        %v441 = vpop.permute.xlu0 %440
        %443 = vset.pattern.permute.xlu0 3
        %444 = vperm.xlu0 %443, %v282
        %v445 = vpop.permute.xlu0 %444
        %447 = vset.pattern.permute.xlu0 3
        %448 = vperm.xlu0 %447, %v283
        %v449 = vpop.permute.xlu0 %448
        %451 = vset.pattern.permute.xlu0 3
        %452 = vperm.xlu0 %451, %v284
        %v453 = vpop.permute.xlu0 %452
        %455 = vset.pattern.permute.xlu0 3
        %456 = vperm.xlu0 %455, %v285
        %v457 = vpop.permute.xlu0 %456
        %v459 = vlaneseq
        %v460 = vshrl.u32 %v459, 7
        %v461 = vsub.s32 3, %v460
        %v462 = vrot.slane %v276, %v461
        %v463 = vmul.f32 %v433, %v462
        %v464 = vmul.f32 %v437, %v462
        %v465 = vmul.f32 %v441, %v462
        %v466 = vmul.f32 %v445, %v462
        %v467 = vmul.f32 %v449, %v462
        %v468 = vmul.f32 %v453, %v462
        %v469 = vmul.f32 %v457, %v462
        %v470 = vadd.f32 %v424, %v463
        %v471 = vadd.f32 %v425, %v464
        %v472 = vadd.f32 %v426, %v465
        %v473 = vadd.f32 %v427, %v466
        %v474 = vadd.f32 %v428, %v467
        %v475 = vadd.f32 %v429, %v468
        %v476 = vadd.f32 %v430, %v469
        %477 = vset.pattern.permute.xlu0 4
        %478 = vperm.xlu0 %477, %v279
        %v479 = vpop.permute.xlu0 %478
        %481 = vset.pattern.permute.xlu0 4
        %482 = vperm.xlu0 %481, %v280
        %v483 = vpop.permute.xlu0 %482
        %485 = vset.pattern.permute.xlu0 4
        %486 = vperm.xlu0 %485, %v281
        %v487 = vpop.permute.xlu0 %486
        %489 = vset.pattern.permute.xlu0 4
        %490 = vperm.xlu0 %489, %v282
        %v491 = vpop.permute.xlu0 %490
        %493 = vset.pattern.permute.xlu0 4
        %494 = vperm.xlu0 %493, %v283
        %v495 = vpop.permute.xlu0 %494
        %497 = vset.pattern.permute.xlu0 4
        %498 = vperm.xlu0 %497, %v284
        %v499 = vpop.permute.xlu0 %498
        %501 = vset.pattern.permute.xlu0 4
        %502 = vperm.xlu0 %501, %v285
        %v503 = vpop.permute.xlu0 %502
        %v505 = vlaneseq
        %v506 = vshrl.u32 %v505, 7
        %v507 = vsub.s32 4, %v506
        %v508 = vrot.slane %v276, %v507
        %v509 = vmul.f32 %v479, %v508
        %v510 = vmul.f32 %v483, %v508
        %v511 = vmul.f32 %v487, %v508
        %v512 = vmul.f32 %v491, %v508
        %v513 = vmul.f32 %v495, %v508
        %v514 = vmul.f32 %v499, %v508
        %v515 = vmul.f32 %v503, %v508
        %v516 = vadd.f32 %v470, %v509
        %v517 = vadd.f32 %v471, %v510
        %v518 = vadd.f32 %v472, %v511
        %v519 = vadd.f32 %v473, %v512
        %v520 = vadd.f32 %v474, %v513
        %v521 = vadd.f32 %v475, %v514
        %v522 = vadd.f32 %v476, %v515
        %523 = vset.pattern.permute.xlu0 5
        %524 = vperm.xlu0 %523, %v279
        %v525 = vpop.permute.xlu0 %524
        %527 = vset.pattern.permute.xlu0 5
        %528 = vperm.xlu0 %527, %v280
        %v529 = vpop.permute.xlu0 %528
        %531 = vset.pattern.permute.xlu0 5
        %532 = vperm.xlu0 %531, %v281
        %v533 = vpop.permute.xlu0 %532
        %535 = vset.pattern.permute.xlu0 5
        %536 = vperm.xlu0 %535, %v282
        %v537 = vpop.permute.xlu0 %536
        %539 = vset.pattern.permute.xlu0 5
        %540 = vperm.xlu0 %539, %v283
        %v541 = vpop.permute.xlu0 %540
        %543 = vset.pattern.permute.xlu0 5
        %544 = vperm.xlu0 %543, %v284
        %v545 = vpop.permute.xlu0 %544
        %547 = vset.pattern.permute.xlu0 5
        %548 = vperm.xlu0 %547, %v285
        %v549 = vpop.permute.xlu0 %548
        %v551 = vlaneseq
        %v552 = vshrl.u32 %v551, 7
        %v553 = vsub.s32 5, %v552
        %v554 = vrot.slane %v276, %v553
        %v555 = vmul.f32 %v525, %v554
        %v556 = vmul.f32 %v529, %v554
        %v557 = vmul.f32 %v533, %v554
        %v558 = vmul.f32 %v537, %v554
        %v559 = vmul.f32 %v541, %v554
        %v560 = vmul.f32 %v545, %v554
        %v561 = vmul.f32 %v549, %v554
        %v562 = vadd.f32 %v516, %v555
        %v563 = vadd.f32 %v517, %v556
        %v564 = vadd.f32 %v518, %v557
        %v565 = vadd.f32 %v519, %v558
        %v566 = vadd.f32 %v520, %v559
        %v567 = vadd.f32 %v521, %v560
        %v568 = vadd.f32 %v522, %v561
        %569 = vset.pattern.permute.xlu0 6
        %570 = vperm.xlu0 %569, %v279
        %v571 = vpop.permute.xlu0 %570
        %573 = vset.pattern.permute.xlu0 6
        %574 = vperm.xlu0 %573, %v280
        %v575 = vpop.permute.xlu0 %574
        %577 = vset.pattern.permute.xlu0 6
        %578 = vperm.xlu0 %577, %v281
        %v579 = vpop.permute.xlu0 %578
        %581 = vset.pattern.permute.xlu0 6
        %582 = vperm.xlu0 %581, %v282
        %v583 = vpop.permute.xlu0 %582
        %585 = vset.pattern.permute.xlu0 6
        %586 = vperm.xlu0 %585, %v283
        %v587 = vpop.permute.xlu0 %586
        %589 = vset.pattern.permute.xlu0 6
        %590 = vperm.xlu0 %589, %v284
        %v591 = vpop.permute.xlu0 %590
        %593 = vset.pattern.permute.xlu0 6
        %594 = vperm.xlu0 %593, %v285
        %v595 = vpop.permute.xlu0 %594
        %v597 = vlaneseq
        %v598 = vshrl.u32 %v597, 7
        %v599 = vsub.s32 6, %v598
        %v600 = vrot.slane %v276, %v599
        %v601 = vmul.f32 %v571, %v600
        %v602 = vmul.f32 %v575, %v600
        %v603 = vmul.f32 %v579, %v600
        %v604 = vmul.f32 %v583, %v600
        %v605 = vmul.f32 %v587, %v600
        %v606 = vmul.f32 %v591, %v600
        %v607 = vmul.f32 %v595, %v600
        %v608 = vadd.f32 %v562, %v601
        %v609 = vadd.f32 %v563, %v602
        %v610 = vadd.f32 %v564, %v603
        %v611 = vadd.f32 %v565, %v604
        %v612 = vadd.f32 %v566, %v605
        %v613 = vadd.f32 %v567, %v606
        %v614 = vadd.f32 %v568, %v607
        %615 = vset.pattern.permute.xlu0 7
        %616 = vperm.xlu0 %615, %v279
        %v617 = vpop.permute.xlu0 %616
        %619 = vset.pattern.permute.xlu0 7
        %620 = vperm.xlu0 %619, %v280
        %v621 = vpop.permute.xlu0 %620
        %623 = vset.pattern.permute.xlu0 7
        %624 = vperm.xlu0 %623, %v281
        %v625 = vpop.permute.xlu0 %624
        %627 = vset.pattern.permute.xlu0 7
        %628 = vperm.xlu0 %627, %v282
        %v629 = vpop.permute.xlu0 %628
        %631 = vset.pattern.permute.xlu0 7
        %632 = vperm.xlu0 %631, %v283
        %v633 = vpop.permute.xlu0 %632
        %635 = vset.pattern.permute.xlu0 7
        %636 = vperm.xlu0 %635, %v284
        %v637 = vpop.permute.xlu0 %636
        %639 = vset.pattern.permute.xlu0 7
        %640 = vperm.xlu0 %639, %v285
        %v641 = vpop.permute.xlu0 %640
        %v643 = vlaneseq
        %v644 = vshrl.u32 %v643, 7
        %v645 = vsub.s32 7, %v644
        %v646 = vrot.slane %v276, %v645
        %v647 = vmul.f32 %v617, %v646
        %v648 = vmul.f32 %v621, %v646
        %v649 = vmul.f32 %v625, %v646
        %v650 = vmul.f32 %v629, %v646
        %v651 = vmul.f32 %v633, %v646
        %v652 = vmul.f32 %v637, %v646
        %v653 = vmul.f32 %v641, %v646
        %v654 = vadd.f32 %v608, %v647
        %v655 = vadd.f32 %v609, %v648
        %v656 = vadd.f32 %v610, %v649
        %v657 = vadd.f32 %v611, %v650
        %v658 = vadd.f32 %v612, %v651
        %v659 = vadd.f32 %v613, %v652
        %v660 = vadd.f32 %v614, %v653
        %661 = vset.pattern.permute.xlu0 8
        %662 = vperm.xlu0 %661, %v279
        %v663 = vpop.permute.xlu0 %662
        %665 = vset.pattern.permute.xlu0 8
        %666 = vperm.xlu0 %665, %v280
        %v667 = vpop.permute.xlu0 %666
        %669 = vset.pattern.permute.xlu0 8
        %670 = vperm.xlu0 %669, %v281
        %v671 = vpop.permute.xlu0 %670
        %673 = vset.pattern.permute.xlu0 8
        %674 = vperm.xlu0 %673, %v282
        %v675 = vpop.permute.xlu0 %674
        %677 = vset.pattern.permute.xlu0 8
        %678 = vperm.xlu0 %677, %v283
        %v679 = vpop.permute.xlu0 %678
        %681 = vset.pattern.permute.xlu0 8
        %682 = vperm.xlu0 %681, %v284
        %v683 = vpop.permute.xlu0 %682
        %685 = vset.pattern.permute.xlu0 8
        %686 = vperm.xlu0 %685, %v285
        %v687 = vpop.permute.xlu0 %686
        %v689 = vlaneseq
        %v690 = vshrl.u32 %v689, 7
        %v691 = vsub.s32 0, %v690
        %v692 = vrot.slane %v277, %v691
        %v693 = vmul.f32 %v663, %v692
        %v694 = vmul.f32 %v667, %v692
        %v695 = vmul.f32 %v671, %v692
        %v696 = vmul.f32 %v675, %v692
        %v697 = vmul.f32 %v679, %v692
        %v698 = vmul.f32 %v683, %v692
        %v699 = vmul.f32 %v687, %v692
        %v700 = vadd.f32 %v654, %v693
        %v701 = vadd.f32 %v655, %v694
        %v702 = vadd.f32 %v656, %v695
        %v703 = vadd.f32 %v657, %v696
        %v704 = vadd.f32 %v658, %v697
        %v705 = vadd.f32 %v659, %v698
        %v706 = vadd.f32 %v660, %v699
        %707 = vset.pattern.permute.xlu0 9
        %708 = vperm.xlu0 %707, %v279
        %v709 = vpop.permute.xlu0 %708
        %711 = vset.pattern.permute.xlu0 9
        %712 = vperm.xlu0 %711, %v280
        %v713 = vpop.permute.xlu0 %712
        %715 = vset.pattern.permute.xlu0 9
        %716 = vperm.xlu0 %715, %v281
        %v717 = vpop.permute.xlu0 %716
        %719 = vset.pattern.permute.xlu0 9
        %720 = vperm.xlu0 %719, %v282
        %v721 = vpop.permute.xlu0 %720
        %723 = vset.pattern.permute.xlu0 9
        %724 = vperm.xlu0 %723, %v283
        %v725 = vpop.permute.xlu0 %724
        %727 = vset.pattern.permute.xlu0 9
        %728 = vperm.xlu0 %727, %v284
        %v729 = vpop.permute.xlu0 %728
        %731 = vset.pattern.permute.xlu0 9
        %732 = vperm.xlu0 %731, %v285
        %v733 = vpop.permute.xlu0 %732
        %v735 = vlaneseq
        %v736 = vshrl.u32 %v735, 7
        %v737 = vsub.s32 1, %v736
        %v738 = vrot.slane %v277, %v737
        %v739 = vmul.f32 %v709, %v738
        %v740 = vmul.f32 %v713, %v738
        %v741 = vmul.f32 %v717, %v738
        %v742 = vmul.f32 %v721, %v738
        %v743 = vmul.f32 %v725, %v738
        %v744 = vmul.f32 %v729, %v738
        %v745 = vmul.f32 %v733, %v738
        %v746 = vadd.f32 %v700, %v739
        %v747 = vadd.f32 %v701, %v740
        %v748 = vadd.f32 %v702, %v741
        %v749 = vadd.f32 %v703, %v742
        %v750 = vadd.f32 %v704, %v743
        %v751 = vadd.f32 %v705, %v744
        %v752 = vadd.f32 %v706, %v745
        %753 = vset.pattern.permute.xlu0 10
        %754 = vperm.xlu0 %753, %v279
        %v755 = vpop.permute.xlu0 %754
        %757 = vset.pattern.permute.xlu0 10
        %758 = vperm.xlu0 %757, %v280
        %v759 = vpop.permute.xlu0 %758
        %761 = vset.pattern.permute.xlu0 10
        %762 = vperm.xlu0 %761, %v281
        %v763 = vpop.permute.xlu0 %762
        %765 = vset.pattern.permute.xlu0 10
        %766 = vperm.xlu0 %765, %v282
        %v767 = vpop.permute.xlu0 %766
        %769 = vset.pattern.permute.xlu0 10
        %770 = vperm.xlu0 %769, %v283
        %v771 = vpop.permute.xlu0 %770
        %773 = vset.pattern.permute.xlu0 10
        %774 = vperm.xlu0 %773, %v284
        %v775 = vpop.permute.xlu0 %774
        %777 = vset.pattern.permute.xlu0 10
        %778 = vperm.xlu0 %777, %v285
        %v779 = vpop.permute.xlu0 %778
        %v781 = vlaneseq
        %v782 = vshrl.u32 %v781, 7
        %v783 = vsub.s32 2, %v782
        %v784 = vrot.slane %v277, %v783
        %v785 = vmul.f32 %v755, %v784
        %v786 = vmul.f32 %v759, %v784
        %v787 = vmul.f32 %v763, %v784
        %v788 = vmul.f32 %v767, %v784
        %v789 = vmul.f32 %v771, %v784
        %v790 = vmul.f32 %v775, %v784
        %v791 = vmul.f32 %v779, %v784
        %v792 = vadd.f32 %v746, %v785
        %v793 = vadd.f32 %v747, %v786
        %v794 = vadd.f32 %v748, %v787
        %v795 = vadd.f32 %v749, %v788
        %v796 = vadd.f32 %v750, %v789
        %v797 = vadd.f32 %v751, %v790
        %v798 = vadd.f32 %v752, %v791
        %799 = vset.pattern.permute.xlu0 11
        %800 = vperm.xlu0 %799, %v279
        %v801 = vpop.permute.xlu0 %800
        %803 = vset.pattern.permute.xlu0 11
        %804 = vperm.xlu0 %803, %v280
        %v805 = vpop.permute.xlu0 %804
        %807 = vset.pattern.permute.xlu0 11
        %808 = vperm.xlu0 %807, %v281
        %v809 = vpop.permute.xlu0 %808
        %811 = vset.pattern.permute.xlu0 11
        %812 = vperm.xlu0 %811, %v282
        %v813 = vpop.permute.xlu0 %812
        %815 = vset.pattern.permute.xlu0 11
        %816 = vperm.xlu0 %815, %v283
        %v817 = vpop.permute.xlu0 %816
        %819 = vset.pattern.permute.xlu0 11
        %820 = vperm.xlu0 %819, %v284
        %v821 = vpop.permute.xlu0 %820
        %823 = vset.pattern.permute.xlu0 11
        %824 = vperm.xlu0 %823, %v285
        %v825 = vpop.permute.xlu0 %824
        %v827 = vlaneseq
        %v828 = vshrl.u32 %v827, 7
        %v829 = vsub.s32 3, %v828
        %v830 = vrot.slane %v277, %v829
        %v831 = vmul.f32 %v801, %v830
        %v832 = vmul.f32 %v805, %v830
        %v833 = vmul.f32 %v809, %v830
        %v834 = vmul.f32 %v813, %v830
        %v835 = vmul.f32 %v817, %v830
        %v836 = vmul.f32 %v821, %v830
        %v837 = vmul.f32 %v825, %v830
        %v838 = vadd.f32 %v792, %v831
        %v839 = vadd.f32 %v793, %v832
        %v840 = vadd.f32 %v794, %v833
        %v841 = vadd.f32 %v795, %v834
        %v842 = vadd.f32 %v796, %v835
        %v843 = vadd.f32 %v797, %v836
        %v844 = vadd.f32 %v798, %v837
        %845 = vset.pattern.permute.xlu0 12
        %846 = vperm.xlu0 %845, %v279
        %v847 = vpop.permute.xlu0 %846
        %849 = vset.pattern.permute.xlu0 12
        %850 = vperm.xlu0 %849, %v280
        %v851 = vpop.permute.xlu0 %850
        %853 = vset.pattern.permute.xlu0 12
        %854 = vperm.xlu0 %853, %v281
        %v855 = vpop.permute.xlu0 %854
        %857 = vset.pattern.permute.xlu0 12
        %858 = vperm.xlu0 %857, %v282
        %v859 = vpop.permute.xlu0 %858
        %861 = vset.pattern.permute.xlu0 12
        %862 = vperm.xlu0 %861, %v283
        %v863 = vpop.permute.xlu0 %862
        %865 = vset.pattern.permute.xlu0 12
        %866 = vperm.xlu0 %865, %v284
        %v867 = vpop.permute.xlu0 %866
        %869 = vset.pattern.permute.xlu0 12
        %870 = vperm.xlu0 %869, %v285
        %v871 = vpop.permute.xlu0 %870
        %v873 = vlaneseq
        %v874 = vshrl.u32 %v873, 7
        %v875 = vsub.s32 4, %v874
        %v876 = vrot.slane %v277, %v875
        %v877 = vmul.f32 %v847, %v876
        %v878 = vmul.f32 %v851, %v876
        %v879 = vmul.f32 %v855, %v876
        %v880 = vmul.f32 %v859, %v876
        %v881 = vmul.f32 %v863, %v876
        %v882 = vmul.f32 %v867, %v876
        %v883 = vmul.f32 %v871, %v876
        %v884 = vadd.f32 %v838, %v877
        %v885 = vadd.f32 %v839, %v878
        %v886 = vadd.f32 %v840, %v879
        %v887 = vadd.f32 %v841, %v880
        %v888 = vadd.f32 %v842, %v881
        %v889 = vadd.f32 %v843, %v882
        %v890 = vadd.f32 %v844, %v883
        %891 = vset.pattern.permute.xlu0 13
        %892 = vperm.xlu0 %891, %v279
        %v893 = vpop.permute.xlu0 %892
        %895 = vset.pattern.permute.xlu0 13
        %896 = vperm.xlu0 %895, %v280
        %v897 = vpop.permute.xlu0 %896
        %899 = vset.pattern.permute.xlu0 13
        %900 = vperm.xlu0 %899, %v281
        %v901 = vpop.permute.xlu0 %900
        %903 = vset.pattern.permute.xlu0 13
        %904 = vperm.xlu0 %903, %v282
        %v905 = vpop.permute.xlu0 %904
        %907 = vset.pattern.permute.xlu0 13
        %908 = vperm.xlu0 %907, %v283
        %v909 = vpop.permute.xlu0 %908
        %911 = vset.pattern.permute.xlu0 13
        %912 = vperm.xlu0 %911, %v284
        %v913 = vpop.permute.xlu0 %912
        %915 = vset.pattern.permute.xlu0 13
        %916 = vperm.xlu0 %915, %v285
        %v917 = vpop.permute.xlu0 %916
        %v919 = vlaneseq
        %v920 = vshrl.u32 %v919, 7
        %v921 = vsub.s32 5, %v920
        %v922 = vrot.slane %v277, %v921
        %v923 = vmul.f32 %v893, %v922
        %v924 = vmul.f32 %v897, %v922
        %v925 = vmul.f32 %v901, %v922
        %v926 = vmul.f32 %v905, %v922
        %v927 = vmul.f32 %v909, %v922
        %v928 = vmul.f32 %v913, %v922
        %v929 = vmul.f32 %v917, %v922
        %v930 = vadd.f32 %v884, %v923
        %v931 = vadd.f32 %v885, %v924
        %v932 = vadd.f32 %v886, %v925
        %v933 = vadd.f32 %v887, %v926
        %v934 = vadd.f32 %v888, %v927
        %v935 = vadd.f32 %v889, %v928
        %v936 = vadd.f32 %v890, %v929
        %937 = vset.pattern.permute.xlu0 14
        %938 = vperm.xlu0 %937, %v279
        %v939 = vpop.permute.xlu0 %938
        %941 = vset.pattern.permute.xlu0 14
        %942 = vperm.xlu0 %941, %v280
        %v943 = vpop.permute.xlu0 %942
        %945 = vset.pattern.permute.xlu0 14
        %946 = vperm.xlu0 %945, %v281
        %v947 = vpop.permute.xlu0 %946
        %949 = vset.pattern.permute.xlu0 14
        %950 = vperm.xlu0 %949, %v282
        %v951 = vpop.permute.xlu0 %950
        %953 = vset.pattern.permute.xlu0 14
        %954 = vperm.xlu0 %953, %v283
        %v955 = vpop.permute.xlu0 %954
        %957 = vset.pattern.permute.xlu0 14
        %958 = vperm.xlu0 %957, %v284
        %v959 = vpop.permute.xlu0 %958
        %961 = vset.pattern.permute.xlu0 14
        %962 = vperm.xlu0 %961, %v285
        %v963 = vpop.permute.xlu0 %962
        %v965 = vlaneseq
        %v966 = vshrl.u32 %v965, 7
        %v967 = vsub.s32 6, %v966
        %v968 = vrot.slane %v277, %v967
        %v969 = vmul.f32 %v939, %v968
        %v970 = vmul.f32 %v943, %v968
        %v971 = vmul.f32 %v947, %v968
        %v972 = vmul.f32 %v951, %v968
        %v973 = vmul.f32 %v955, %v968
        %v974 = vmul.f32 %v959, %v968
        %v975 = vmul.f32 %v963, %v968
        %v976 = vadd.f32 %v930, %v969
        %v977 = vadd.f32 %v931, %v970
        %v978 = vadd.f32 %v932, %v971
        %v979 = vadd.f32 %v933, %v972
        %v980 = vadd.f32 %v934, %v973
        %v981 = vadd.f32 %v935, %v974
        %v982 = vadd.f32 %v936, %v975
        %983 = vset.pattern.permute.xlu0 15
        %984 = vperm.xlu0 %983, %v279
        %v985 = vpop.permute.xlu0 %984
        %987 = vset.pattern.permute.xlu0 15
        %988 = vperm.xlu0 %987, %v280
        %v989 = vpop.permute.xlu0 %988
        %991 = vset.pattern.permute.xlu0 15
        %992 = vperm.xlu0 %991, %v281
        %v993 = vpop.permute.xlu0 %992
        %995 = vset.pattern.permute.xlu0 15
        %996 = vperm.xlu0 %995, %v282
        %v997 = vpop.permute.xlu0 %996
        %999 = vset.pattern.permute.xlu0 15
        %1000 = vperm.xlu0 %999, %v283
        %v1001 = vpop.permute.xlu0 %1000
        %1003 = vset.pattern.permute.xlu0 15
        %1004 = vperm.xlu0 %1003, %v284
        %v1005 = vpop.permute.xlu0 %1004
        %1007 = vset.pattern.permute.xlu0 15
        %1008 = vperm.xlu0 %1007, %v285
        %v1009 = vpop.permute.xlu0 %1008
        %v1011 = vlaneseq
        %v1012 = vshrl.u32 %v1011, 7
        %v1013 = vsub.s32 7, %v1012
        %v1014 = vrot.slane %v277, %v1013
        %v1015 = vmul.f32 %v985, %v1014
        %v1016 = vmul.f32 %v989, %v1014
        %v1017 = vmul.f32 %v993, %v1014
        %v1018 = vmul.f32 %v997, %v1014
        %v1019 = vmul.f32 %v1001, %v1014
        %v1020 = vmul.f32 %v1005, %v1014
        %v1021 = vmul.f32 %v1009, %v1014
        %v1022 = vadd.f32 %v976, %v1015
        %v1023 = vadd.f32 %v977, %v1016
        %v1024 = vadd.f32 %v978, %v1017
        %v1025 = vadd.f32 %v979, %v1018
        %v1026 = vadd.f32 %v980, %v1019
        %v1027 = vadd.f32 %v981, %v1020
        %v1028 = vadd.f32 %v982, %v1021
        %v1030 = vlaneseq
        %v1031 = vshrl.u32 %v1030, 7
        %v1032 = vsub.s32 0, %v1031
        %v1033 = vrot.slane %v278, %v1032
        %v1035 = vadd.f32 %v1022, %v1033
        %v1036 = vadd.f32 %v1023, %v1033
        %v1037 = vadd.f32 %v1024, %v1033
        %v1038 = vadd.f32 %v1025, %v1033
        %v1039 = vadd.f32 %v1026, %v1033
        %v1040 = vadd.f32 %v1027, %v1033
        %v1041 = vadd.f32 %v1028, %v1033
        %v1042 = vmax.f32 %v1035, 0.0
        %v1043 = vmax.f32 %v1036, 0.0
        %v1044 = vmax.f32 %v1037, 0.0
        %v1045 = vmax.f32 %v1038, 0.0
        %v1046 = vmax.f32 %v1039, 0.0
        %v1047 = vmax.f32 %v1040, 0.0
        %v1048 = vmax.f32 %v1041, 0.0
        %vm1049 = vcmask 96256
        %1050 = vst.msk [vmem:[#allocation2] sm:$0x7f] %vm1049, %v1042
        %1051 = vst.msk [vmem:[#allocation2 + $0x8] sm:$0x7f] %vm1049, %v1043
        %1052 = vst.msk [vmem:[#allocation2 + $0x10] sm:$0x7f] %vm1049, %v1044
        %1053 = vst.msk [vmem:[#allocation2 + $0x18] sm:$0x7f] %vm1049, %v1045
        %1054 = vst.msk [vmem:[#allocation2 + $0x20] sm:$0x7f] %vm1049, %v1046
        %1055 = vst.msk [vmem:[#allocation2 + $0x28] sm:$0x7f] %vm1049, %v1047
        %1056 = vst.msk [vmem:[#allocation2 + $0x30] sm:$0x7f] %vm1049, %v1048
        %v1057 = vld [vmem:[%s275] sm:$0x7f]
        %v1058 = vld [vmem:[%s275 + $0x8] sm:$0x7f]
        %v1059 = vld [vmem:[%s275 + $0x10] sm:$0x7f]
        %v1060 = vld [vmem:[%s275 + $0x18] sm:$0x7f]
        %v1061 = vld [vmem:[%s275 + $0x20] sm:$0x7f]
        %v1062 = vld [vmem:[%s275 + $0x28] sm:$0x7f]
        %v1063 = vld [vmem:[%s275 + $0x30] sm:$0x7f]
        %1065 = vset.pattern.permute.xlu0 2
        %1066 = vperm.xlu0 %1065, %v1057
        %v1067 = vpop.permute.xlu0 %1066
        %1070 = vset.pattern.permute.xlu0 2
        %1071 = vperm.xlu0 %1070, %v1058
        %v1072 = vpop.permute.xlu0 %1071
        %1075 = vset.pattern.permute.xlu0 2
        %1076 = vperm.xlu0 %1075, %v1059
        %v1077 = vpop.permute.xlu0 %1076
        %1080 = vset.pattern.permute.xlu0 2
        %1081 = vperm.xlu0 %1080, %v1060
        %v1082 = vpop.permute.xlu0 %1081
        %1085 = vset.pattern.permute.xlu0 2
        %1086 = vperm.xlu0 %1085, %v1061
        %v1087 = vpop.permute.xlu0 %1086
        %1090 = vset.pattern.permute.xlu0 2
        %1091 = vperm.xlu0 %1090, %v1062
        %v1092 = vpop.permute.xlu0 %1091
        %1095 = vset.pattern.permute.xlu0 2
        %1096 = vperm.xlu0 %1095, %v1063
        %v1097 = vpop.permute.xlu0 %1096
        %v1099 = vmul.f32 %v1067, %v324
        %v1100 = vmul.f32 %v1072, %v324
        %v1101 = vmul.f32 %v1077, %v324
        %v1102 = vmul.f32 %v1082, %v324
        %v1103 = vmul.f32 %v1087, %v324
        %v1104 = vmul.f32 %v1092, %v324
        %v1105 = vmul.f32 %v1097, %v324
        %v1106 = vadd.f32 %v1099, 0.0
        %v1107 = vadd.f32 %v1100, 0.0
        %v1108 = vadd.f32 %v1101, 0.0
        %v1109 = vadd.f32 %v1102, 0.0
        %v1110 = vadd.f32 %v1103, 0.0
        %v1111 = vadd.f32 %v1104, 0.0
        %v1112 = vadd.f32 %v1105, 0.0
        %1113 = vset.pattern.permute.xlu0 3
        %1114 = vperm.xlu0 %1113, %v1057
        %v1115 = vpop.permute.xlu0 %1114
        %1117 = vset.pattern.permute.xlu0 3
        %1118 = vperm.xlu0 %1117, %v1058
        %v1119 = vpop.permute.xlu0 %1118
        %1121 = vset.pattern.permute.xlu0 3
        %1122 = vperm.xlu0 %1121, %v1059
        %v1123 = vpop.permute.xlu0 %1122
        %1125 = vset.pattern.permute.xlu0 3
        %1126 = vperm.xlu0 %1125, %v1060
        %v1127 = vpop.permute.xlu0 %1126
        %1129 = vset.pattern.permute.xlu0 3
        %1130 = vperm.xlu0 %1129, %v1061
        %v1131 = vpop.permute.xlu0 %1130
        %1133 = vset.pattern.permute.xlu0 3
        %1134 = vperm.xlu0 %1133, %v1062
        %v1135 = vpop.permute.xlu0 %1134
        %1137 = vset.pattern.permute.xlu0 3
        %1138 = vperm.xlu0 %1137, %v1063
        %v1139 = vpop.permute.xlu0 %1138
        %v1141 = vmul.f32 %v1115, %v370
        %v1142 = vmul.f32 %v1119, %v370
        %v1143 = vmul.f32 %v1123, %v370
        %v1144 = vmul.f32 %v1127, %v370
        %v1145 = vmul.f32 %v1131, %v370
        %v1146 = vmul.f32 %v1135, %v370
        %v1147 = vmul.f32 %v1139, %v370
        %v1148 = vadd.f32 %v1106, %v1141
        %v1149 = vadd.f32 %v1107, %v1142
        %v1150 = vadd.f32 %v1108, %v1143
        %v1151 = vadd.f32 %v1109, %v1144
        %v1152 = vadd.f32 %v1110, %v1145
        %v1153 = vadd.f32 %v1111, %v1146
        %v1154 = vadd.f32 %v1112, %v1147
        %v1155 = vld [vmem:[%s275 + $0x1] sm:$0x7f]
        %v1156 = vld [vmem:[%s275 + $0x9] sm:$0x7f]
        %v1157 = vld [vmem:[%s275 + $0x11] sm:$0x7f]
        %v1158 = vld [vmem:[%s275 + $0x19] sm:$0x7f]
        %v1159 = vld [vmem:[%s275 + $0x21] sm:$0x7f]
        %v1160 = vld [vmem:[%s275 + $0x29] sm:$0x7f]
        %v1161 = vld [vmem:[%s275 + $0x31] sm:$0x7f]
        %1163 = vset.pattern.permute.xlu0 0
        %1164 = vperm.xlu0 %1163, %v1155
        %v1165 = vpop.permute.xlu0 %1164
        %1168 = vset.pattern.permute.xlu0 0
        %1169 = vperm.xlu0 %1168, %v1156
        %v1170 = vpop.permute.xlu0 %1169
        %1173 = vset.pattern.permute.xlu0 0
        %1174 = vperm.xlu0 %1173, %v1157
        %v1175 = vpop.permute.xlu0 %1174
        %1178 = vset.pattern.permute.xlu0 0
        %1179 = vperm.xlu0 %1178, %v1158
        %v1180 = vpop.permute.xlu0 %1179
        %1183 = vset.pattern.permute.xlu0 0
        %1184 = vperm.xlu0 %1183, %v1159
        %v1185 = vpop.permute.xlu0 %1184
        %1188 = vset.pattern.permute.xlu0 0
        %1189 = vperm.xlu0 %1188, %v1160
        %v1190 = vpop.permute.xlu0 %1189
        %1193 = vset.pattern.permute.xlu0 0
        %1194 = vperm.xlu0 %1193, %v1161
        %v1195 = vpop.permute.xlu0 %1194
        %v1197 = vmul.f32 %v1165, %v416
        %v1198 = vmul.f32 %v1170, %v416
        %v1199 = vmul.f32 %v1175, %v416
        %v1200 = vmul.f32 %v1180, %v416
        %v1201 = vmul.f32 %v1185, %v416
        %v1202 = vmul.f32 %v1190, %v416
        %v1203 = vmul.f32 %v1195, %v416
        %v1204 = vadd.f32 %v1148, %v1197
        %v1205 = vadd.f32 %v1149, %v1198
        %v1206 = vadd.f32 %v1150, %v1199
        %v1207 = vadd.f32 %v1151, %v1200
        %v1208 = vadd.f32 %v1152, %v1201
        %v1209 = vadd.f32 %v1153, %v1202
        %v1210 = vadd.f32 %v1154, %v1203
        %1211 = vset.pattern.permute.xlu0 1
        %1212 = vperm.xlu0 %1211, %v1155
        %v1213 = vpop.permute.xlu0 %1212
        %1215 = vset.pattern.permute.xlu0 1
        %1216 = vperm.xlu0 %1215, %v1156
        %v1217 = vpop.permute.xlu0 %1216
        %1219 = vset.pattern.permute.xlu0 1
        %1220 = vperm.xlu0 %1219, %v1157
        %v1221 = vpop.permute.xlu0 %1220
        %1223 = vset.pattern.permute.xlu0 1
        %1224 = vperm.xlu0 %1223, %v1158
        %v1225 = vpop.permute.xlu0 %1224
        %1227 = vset.pattern.permute.xlu0 1
        %1228 = vperm.xlu0 %1227, %v1159
        %v1229 = vpop.permute.xlu0 %1228
        %1231 = vset.pattern.permute.xlu0 1
        %1232 = vperm.xlu0 %1231, %v1160
        %v1233 = vpop.permute.xlu0 %1232
        %1235 = vset.pattern.permute.xlu0 1
        %1236 = vperm.xlu0 %1235, %v1161
        %v1237 = vpop.permute.xlu0 %1236
        %v1239 = vmul.f32 %v1213, %v462
        %v1240 = vmul.f32 %v1217, %v462
        %v1241 = vmul.f32 %v1221, %v462
        %v1242 = vmul.f32 %v1225, %v462
        %v1243 = vmul.f32 %v1229, %v462
        %v1244 = vmul.f32 %v1233, %v462
        %v1245 = vmul.f32 %v1237, %v462
        %v1246 = vadd.f32 %v1204, %v1239
        %v1247 = vadd.f32 %v1205, %v1240
        %v1248 = vadd.f32 %v1206, %v1241
        %v1249 = vadd.f32 %v1207, %v1242
        %v1250 = vadd.f32 %v1208, %v1243
        %v1251 = vadd.f32 %v1209, %v1244
        %v1252 = vadd.f32 %v1210, %v1245
        %1253 = vset.pattern.permute.xlu0 6
        %1254 = vperm.xlu0 %1253, %v1057
        %v1255 = vpop.permute.xlu0 %1254
        %1257 = vset.pattern.permute.xlu0 6
        %1258 = vperm.xlu0 %1257, %v1058
        %v1259 = vpop.permute.xlu0 %1258
        %1261 = vset.pattern.permute.xlu0 6
        %1262 = vperm.xlu0 %1261, %v1059
        %v1263 = vpop.permute.xlu0 %1262
        %1265 = vset.pattern.permute.xlu0 6
        %1266 = vperm.xlu0 %1265, %v1060
        %v1267 = vpop.permute.xlu0 %1266
        %1269 = vset.pattern.permute.xlu0 6
        %1270 = vperm.xlu0 %1269, %v1061
        %v1271 = vpop.permute.xlu0 %1270
        %1273 = vset.pattern.permute.xlu0 6
        %1274 = vperm.xlu0 %1273, %v1062
        %v1275 = vpop.permute.xlu0 %1274
        %1277 = vset.pattern.permute.xlu0 6
        %1278 = vperm.xlu0 %1277, %v1063
        %v1279 = vpop.permute.xlu0 %1278
        %v1281 = vmul.f32 %v1255, %v508
        %v1282 = vmul.f32 %v1259, %v508
        %v1283 = vmul.f32 %v1263, %v508
        %v1284 = vmul.f32 %v1267, %v508
        %v1285 = vmul.f32 %v1271, %v508
        %v1286 = vmul.f32 %v1275, %v508
        %v1287 = vmul.f32 %v1279, %v508
        %v1288 = vadd.f32 %v1246, %v1281
        %v1289 = vadd.f32 %v1247, %v1282
        %v1290 = vadd.f32 %v1248, %v1283
        %v1291 = vadd.f32 %v1249, %v1284
        %v1292 = vadd.f32 %v1250, %v1285
        %v1293 = vadd.f32 %v1251, %v1286
        %v1294 = vadd.f32 %v1252, %v1287
        %1295 = vset.pattern.permute.xlu0 7
        %1296 = vperm.xlu0 %1295, %v1057
        %v1297 = vpop.permute.xlu0 %1296
        %1299 = vset.pattern.permute.xlu0 7
        %1300 = vperm.xlu0 %1299, %v1058
        %v1301 = vpop.permute.xlu0 %1300
        %1303 = vset.pattern.permute.xlu0 7
        %1304 = vperm.xlu0 %1303, %v1059
        %v1305 = vpop.permute.xlu0 %1304
        %1307 = vset.pattern.permute.xlu0 7
        %1308 = vperm.xlu0 %1307, %v1060
        %v1309 = vpop.permute.xlu0 %1308
        %1311 = vset.pattern.permute.xlu0 7
        %1312 = vperm.xlu0 %1311, %v1061
        %v1313 = vpop.permute.xlu0 %1312
        %1315 = vset.pattern.permute.xlu0 7
        %1316 = vperm.xlu0 %1315, %v1062
        %v1317 = vpop.permute.xlu0 %1316
        %1319 = vset.pattern.permute.xlu0 7
        %1320 = vperm.xlu0 %1319, %v1063
        %v1321 = vpop.permute.xlu0 %1320
        %v1323 = vmul.f32 %v1297, %v554
        %v1324 = vmul.f32 %v1301, %v554
        %v1325 = vmul.f32 %v1305, %v554
        %v1326 = vmul.f32 %v1309, %v554
        %v1327 = vmul.f32 %v1313, %v554
        %v1328 = vmul.f32 %v1317, %v554
        %v1329 = vmul.f32 %v1321, %v554
        %v1330 = vadd.f32 %v1288, %v1323
        %v1331 = vadd.f32 %v1289, %v1324
        %v1332 = vadd.f32 %v1290, %v1325
        %v1333 = vadd.f32 %v1291, %v1326
        %v1334 = vadd.f32 %v1292, %v1327
        %v1335 = vadd.f32 %v1293, %v1328
        %v1336 = vadd.f32 %v1294, %v1329
        %1337 = vset.pattern.permute.xlu0 4
        %1338 = vperm.xlu0 %1337, %v1155
        %v1339 = vpop.permute.xlu0 %1338
        %1341 = vset.pattern.permute.xlu0 4
        %1342 = vperm.xlu0 %1341, %v1156
        %v1343 = vpop.permute.xlu0 %1342
        %1345 = vset.pattern.permute.xlu0 4
        %1346 = vperm.xlu0 %1345, %v1157
        %v1347 = vpop.permute.xlu0 %1346
        %1349 = vset.pattern.permute.xlu0 4
        %1350 = vperm.xlu0 %1349, %v1158
        %v1351 = vpop.permute.xlu0 %1350
        %1353 = vset.pattern.permute.xlu0 4
        %1354 = vperm.xlu0 %1353, %v1159
        %v1355 = vpop.permute.xlu0 %1354
        %1357 = vset.pattern.permute.xlu0 4
        %1358 = vperm.xlu0 %1357, %v1160
        %v1359 = vpop.permute.xlu0 %1358
        %1361 = vset.pattern.permute.xlu0 4
        %1362 = vperm.xlu0 %1361, %v1161
        %v1363 = vpop.permute.xlu0 %1362
        %v1365 = vmul.f32 %v1339, %v600
        %v1366 = vmul.f32 %v1343, %v600
        %v1367 = vmul.f32 %v1347, %v600
        %v1368 = vmul.f32 %v1351, %v600
        %v1369 = vmul.f32 %v1355, %v600
        %v1370 = vmul.f32 %v1359, %v600
        %v1371 = vmul.f32 %v1363, %v600
        %v1372 = vadd.f32 %v1330, %v1365
        %v1373 = vadd.f32 %v1331, %v1366
        %v1374 = vadd.f32 %v1332, %v1367
        %v1375 = vadd.f32 %v1333, %v1368
        %v1376 = vadd.f32 %v1334, %v1369
        %v1377 = vadd.f32 %v1335, %v1370
        %v1378 = vadd.f32 %v1336, %v1371
        %1379 = vset.pattern.permute.xlu0 5
        %1380 = vperm.xlu0 %1379, %v1155
        %v1381 = vpop.permute.xlu0 %1380
        %1383 = vset.pattern.permute.xlu0 5
        %1384 = vperm.xlu0 %1383, %v1156
        %v1385 = vpop.permute.xlu0 %1384
        %1387 = vset.pattern.permute.xlu0 5
        %1388 = vperm.xlu0 %1387, %v1157
        %v1389 = vpop.permute.xlu0 %1388
        %1391 = vset.pattern.permute.xlu0 5
        %1392 = vperm.xlu0 %1391, %v1158
        %v1393 = vpop.permute.xlu0 %1392
        %1395 = vset.pattern.permute.xlu0 5
        %1396 = vperm.xlu0 %1395, %v1159
        %v1397 = vpop.permute.xlu0 %1396
        %1399 = vset.pattern.permute.xlu0 5
        %1400 = vperm.xlu0 %1399, %v1160
        %v1401 = vpop.permute.xlu0 %1400
        %1403 = vset.pattern.permute.xlu0 5
        %1404 = vperm.xlu0 %1403, %v1161
        %v1405 = vpop.permute.xlu0 %1404
        %v1407 = vmul.f32 %v1381, %v646
        %v1408 = vmul.f32 %v1385, %v646
        %v1409 = vmul.f32 %v1389, %v646
        %v1410 = vmul.f32 %v1393, %v646
        %v1411 = vmul.f32 %v1397, %v646
        %v1412 = vmul.f32 %v1401, %v646
        %v1413 = vmul.f32 %v1405, %v646
        %v1414 = vadd.f32 %v1372, %v1407
        %v1415 = vadd.f32 %v1373, %v1408
        %v1416 = vadd.f32 %v1374, %v1409
        %v1417 = vadd.f32 %v1375, %v1410
        %v1418 = vadd.f32 %v1376, %v1411
        %v1419 = vadd.f32 %v1377, %v1412
        %v1420 = vadd.f32 %v1378, %v1413
        %1421 = vset.pattern.permute.xlu0 10
        %1422 = vperm.xlu0 %1421, %v1057
        %v1423 = vpop.permute.xlu0 %1422
        %1425 = vset.pattern.permute.xlu0 10
        %1426 = vperm.xlu0 %1425, %v1058
        %v1427 = vpop.permute.xlu0 %1426
        %1429 = vset.pattern.permute.xlu0 10
        %1430 = vperm.xlu0 %1429, %v1059
        %v1431 = vpop.permute.xlu0 %1430
        %1433 = vset.pattern.permute.xlu0 10
        %1434 = vperm.xlu0 %1433, %v1060
        %v1435 = vpop.permute.xlu0 %1434
        %1437 = vset.pattern.permute.xlu0 10
        %1438 = vperm.xlu0 %1437, %v1061
        %v1439 = vpop.permute.xlu0 %1438
        %1441 = vset.pattern.permute.xlu0 10
        %1442 = vperm.xlu0 %1441, %v1062
        %v1443 = vpop.permute.xlu0 %1442
        %1445 = vset.pattern.permute.xlu0 10
        %1446 = vperm.xlu0 %1445, %v1063
        %v1447 = vpop.permute.xlu0 %1446
        %v1449 = vmul.f32 %v1423, %v692
        %v1450 = vmul.f32 %v1427, %v692
        %v1451 = vmul.f32 %v1431, %v692
        %v1452 = vmul.f32 %v1435, %v692
        %v1453 = vmul.f32 %v1439, %v692
        %v1454 = vmul.f32 %v1443, %v692
        %v1455 = vmul.f32 %v1447, %v692
        %v1456 = vadd.f32 %v1414, %v1449
        %v1457 = vadd.f32 %v1415, %v1450
        %v1458 = vadd.f32 %v1416, %v1451
        %v1459 = vadd.f32 %v1417, %v1452
        %v1460 = vadd.f32 %v1418, %v1453
        %v1461 = vadd.f32 %v1419, %v1454
        %v1462 = vadd.f32 %v1420, %v1455
        %1463 = vset.pattern.permute.xlu0 11
        %1464 = vperm.xlu0 %1463, %v1057
        %v1465 = vpop.permute.xlu0 %1464
        %1467 = vset.pattern.permute.xlu0 11
        %1468 = vperm.xlu0 %1467, %v1058
        %v1469 = vpop.permute.xlu0 %1468
        %1471 = vset.pattern.permute.xlu0 11
        %1472 = vperm.xlu0 %1471, %v1059
        %v1473 = vpop.permute.xlu0 %1472
        %1475 = vset.pattern.permute.xlu0 11
        %1476 = vperm.xlu0 %1475, %v1060
        %v1477 = vpop.permute.xlu0 %1476
        %1479 = vset.pattern.permute.xlu0 11
        %1480 = vperm.xlu0 %1479, %v1061
        %v1481 = vpop.permute.xlu0 %1480
        %1483 = vset.pattern.permute.xlu0 11
        %1484 = vperm.xlu0 %1483, %v1062
        %v1485 = vpop.permute.xlu0 %1484
        %1487 = vset.pattern.permute.xlu0 11
        %1488 = vperm.xlu0 %1487, %v1063
        %v1489 = vpop.permute.xlu0 %1488
        %v1491 = vmul.f32 %v1465, %v738
        %v1492 = vmul.f32 %v1469, %v738
        %v1493 = vmul.f32 %v1473, %v738
        %v1494 = vmul.f32 %v1477, %v738
        %v1495 = vmul.f32 %v1481, %v738
        %v1496 = vmul.f32 %v1485, %v738
        %v1497 = vmul.f32 %v1489, %v738
        %v1498 = vadd.f32 %v1456, %v1491
        %v1499 = vadd.f32 %v1457, %v1492
        %v1500 = vadd.f32 %v1458, %v1493
        %v1501 = vadd.f32 %v1459, %v1494
        %v1502 = vadd.f32 %v1460, %v1495
        %v1503 = vadd.f32 %v1461, %v1496
        %v1504 = vadd.f32 %v1462, %v1497
        %1505 = vset.pattern.permute.xlu0 8
        %1506 = vperm.xlu0 %1505, %v1155
        %v1507 = vpop.permute.xlu0 %1506
        %1509 = vset.pattern.permute.xlu0 8
        %1510 = vperm.xlu0 %1509, %v1156
        %v1511 = vpop.permute.xlu0 %1510
        %1513 = vset.pattern.permute.xlu0 8
        %1514 = vperm.xlu0 %1513, %v1157
        %v1515 = vpop.permute.xlu0 %1514
        %1517 = vset.pattern.permute.xlu0 8
        %1518 = vperm.xlu0 %1517, %v1158
        %v1519 = vpop.permute.xlu0 %1518
        %1521 = vset.pattern.permute.xlu0 8
        %1522 = vperm.xlu0 %1521, %v1159
        %v1523 = vpop.permute.xlu0 %1522
        %1525 = vset.pattern.permute.xlu0 8
        %1526 = vperm.xlu0 %1525, %v1160
        %v1527 = vpop.permute.xlu0 %1526
        %1529 = vset.pattern.permute.xlu0 8
        %1530 = vperm.xlu0 %1529, %v1161
        %v1531 = vpop.permute.xlu0 %1530
        %v1533 = vmul.f32 %v1507, %v784
        %v1534 = vmul.f32 %v1511, %v784
        %v1535 = vmul.f32 %v1515, %v784
        %v1536 = vmul.f32 %v1519, %v784
        %v1537 = vmul.f32 %v1523, %v784
        %v1538 = vmul.f32 %v1527, %v784
        %v1539 = vmul.f32 %v1531, %v784
        %v1540 = vadd.f32 %v1498, %v1533
        %v1541 = vadd.f32 %v1499, %v1534
        %v1542 = vadd.f32 %v1500, %v1535
        %v1543 = vadd.f32 %v1501, %v1536
        %v1544 = vadd.f32 %v1502, %v1537
        %v1545 = vadd.f32 %v1503, %v1538
        %v1546 = vadd.f32 %v1504, %v1539
        %1547 = vset.pattern.permute.xlu0 9
        %1548 = vperm.xlu0 %1547, %v1155
        %v1549 = vpop.permute.xlu0 %1548
        %1551 = vset.pattern.permute.xlu0 9
        %1552 = vperm.xlu0 %1551, %v1156
        %v1553 = vpop.permute.xlu0 %1552
        %1555 = vset.pattern.permute.xlu0 9
        %1556 = vperm.xlu0 %1555, %v1157
        %v1557 = vpop.permute.xlu0 %1556
        %1559 = vset.pattern.permute.xlu0 9
        %1560 = vperm.xlu0 %1559, %v1158
        %v1561 = vpop.permute.xlu0 %1560
        %1563 = vset.pattern.permute.xlu0 9
        %1564 = vperm.xlu0 %1563, %v1159
        %v1565 = vpop.permute.xlu0 %1564
        %1567 = vset.pattern.permute.xlu0 9
        %1568 = vperm.xlu0 %1567, %v1160
        %v1569 = vpop.permute.xlu0 %1568
        %1571 = vset.pattern.permute.xlu0 9
        %1572 = vperm.xlu0 %1571, %v1161
        %v1573 = vpop.permute.xlu0 %1572
        %v1575 = vmul.f32 %v1549, %v830
        %v1576 = vmul.f32 %v1553, %v830
        %v1577 = vmul.f32 %v1557, %v830
        %v1578 = vmul.f32 %v1561, %v830
        %v1579 = vmul.f32 %v1565, %v830
        %v1580 = vmul.f32 %v1569, %v830
        %v1581 = vmul.f32 %v1573, %v830
        %v1582 = vadd.f32 %v1540, %v1575
        %v1583 = vadd.f32 %v1541, %v1576
        %v1584 = vadd.f32 %v1542, %v1577
        %v1585 = vadd.f32 %v1543, %v1578
        %v1586 = vadd.f32 %v1544, %v1579
        %v1587 = vadd.f32 %v1545, %v1580
        %v1588 = vadd.f32 %v1546, %v1581
        %1589 = vset.pattern.permute.xlu0 14
        %1590 = vperm.xlu0 %1589, %v1057
        %v1591 = vpop.permute.xlu0 %1590
        %1593 = vset.pattern.permute.xlu0 14
        %1594 = vperm.xlu0 %1593, %v1058
        %v1595 = vpop.permute.xlu0 %1594
        %1597 = vset.pattern.permute.xlu0 14
        %1598 = vperm.xlu0 %1597, %v1059
        %v1599 = vpop.permute.xlu0 %1598
        %1601 = vset.pattern.permute.xlu0 14
        %1602 = vperm.xlu0 %1601, %v1060
        %v1603 = vpop.permute.xlu0 %1602
        %1605 = vset.pattern.permute.xlu0 14
        %1606 = vperm.xlu0 %1605, %v1061
        %v1607 = vpop.permute.xlu0 %1606
        %1609 = vset.pattern.permute.xlu0 14
        %1610 = vperm.xlu0 %1609, %v1062
        %v1611 = vpop.permute.xlu0 %1610
        %1613 = vset.pattern.permute.xlu0 14
        %1614 = vperm.xlu0 %1613, %v1063
        %v1615 = vpop.permute.xlu0 %1614
        %v1617 = vmul.f32 %v1591, %v876
        %v1618 = vmul.f32 %v1595, %v876
        %v1619 = vmul.f32 %v1599, %v876
        %v1620 = vmul.f32 %v1603, %v876
        %v1621 = vmul.f32 %v1607, %v876
        %v1622 = vmul.f32 %v1611, %v876
        %v1623 = vmul.f32 %v1615, %v876
        %v1624 = vadd.f32 %v1582, %v1617
        %v1625 = vadd.f32 %v1583, %v1618
        %v1626 = vadd.f32 %v1584, %v1619
        %v1627 = vadd.f32 %v1585, %v1620
        %v1628 = vadd.f32 %v1586, %v1621
        %v1629 = vadd.f32 %v1587, %v1622
        %v1630 = vadd.f32 %v1588, %v1623
        %1631 = vset.pattern.permute.xlu0 15
        %1632 = vperm.xlu0 %1631, %v1057
        %v1633 = vpop.permute.xlu0 %1632
        %1635 = vset.pattern.permute.xlu0 15
        %1636 = vperm.xlu0 %1635, %v1058
        %v1637 = vpop.permute.xlu0 %1636
        %1639 = vset.pattern.permute.xlu0 15
        %1640 = vperm.xlu0 %1639, %v1059
        %v1641 = vpop.permute.xlu0 %1640
        %1643 = vset.pattern.permute.xlu0 15
        %1644 = vperm.xlu0 %1643, %v1060
        %v1645 = vpop.permute.xlu0 %1644
        %1647 = vset.pattern.permute.xlu0 15
        %1648 = vperm.xlu0 %1647, %v1061
        %v1649 = vpop.permute.xlu0 %1648
        %1651 = vset.pattern.permute.xlu0 15
        %1652 = vperm.xlu0 %1651, %v1062
        %v1653 = vpop.permute.xlu0 %1652
        %1655 = vset.pattern.permute.xlu0 15
        %1656 = vperm.xlu0 %1655, %v1063
        %v1657 = vpop.permute.xlu0 %1656
        %v1659 = vmul.f32 %v1633, %v922
        %v1660 = vmul.f32 %v1637, %v922
        %v1661 = vmul.f32 %v1641, %v922
        %v1662 = vmul.f32 %v1645, %v922
        %v1663 = vmul.f32 %v1649, %v922
        %v1664 = vmul.f32 %v1653, %v922
        %v1665 = vmul.f32 %v1657, %v922
        %v1666 = vadd.f32 %v1624, %v1659
        %v1667 = vadd.f32 %v1625, %v1660
        %v1668 = vadd.f32 %v1626, %v1661
        %v1669 = vadd.f32 %v1627, %v1662
        %v1670 = vadd.f32 %v1628, %v1663
        %v1671 = vadd.f32 %v1629, %v1664
        %v1672 = vadd.f32 %v1630, %v1665
        %1673 = vset.pattern.permute.xlu0 12
        %1674 = vperm.xlu0 %1673, %v1155
        %v1675 = vpop.permute.xlu0 %1674
        %1677 = vset.pattern.permute.xlu0 12
        %1678 = vperm.xlu0 %1677, %v1156
        %v1679 = vpop.permute.xlu0 %1678
        %1681 = vset.pattern.permute.xlu0 12
        %1682 = vperm.xlu0 %1681, %v1157
        %v1683 = vpop.permute.xlu0 %1682
        %1685 = vset.pattern.permute.xlu0 12
        %1686 = vperm.xlu0 %1685, %v1158
        %v1687 = vpop.permute.xlu0 %1686
        %1689 = vset.pattern.permute.xlu0 12
        %1690 = vperm.xlu0 %1689, %v1159
        %v1691 = vpop.permute.xlu0 %1690
        %1693 = vset.pattern.permute.xlu0 12
        %1694 = vperm.xlu0 %1693, %v1160
        %v1695 = vpop.permute.xlu0 %1694
        %1697 = vset.pattern.permute.xlu0 12
        %1698 = vperm.xlu0 %1697, %v1161
        %v1699 = vpop.permute.xlu0 %1698
        %v1701 = vmul.f32 %v1675, %v968
        %v1702 = vmul.f32 %v1679, %v968
        %v1703 = vmul.f32 %v1683, %v968
        %v1704 = vmul.f32 %v1687, %v968
        %v1705 = vmul.f32 %v1691, %v968
        %v1706 = vmul.f32 %v1695, %v968
        %v1707 = vmul.f32 %v1699, %v968
        %v1708 = vadd.f32 %v1666, %v1701
        %v1709 = vadd.f32 %v1667, %v1702
        %v1710 = vadd.f32 %v1668, %v1703
        %v1711 = vadd.f32 %v1669, %v1704
        %v1712 = vadd.f32 %v1670, %v1705
        %v1713 = vadd.f32 %v1671, %v1706
        %v1714 = vadd.f32 %v1672, %v1707
        %1715 = vset.pattern.permute.xlu0 13
        %1716 = vperm.xlu0 %1715, %v1155
        %v1717 = vpop.permute.xlu0 %1716
        %1719 = vset.pattern.permute.xlu0 13
        %1720 = vperm.xlu0 %1719, %v1156
        %v1721 = vpop.permute.xlu0 %1720
        %1723 = vset.pattern.permute.xlu0 13
        %1724 = vperm.xlu0 %1723, %v1157
        %v1725 = vpop.permute.xlu0 %1724
        %1727 = vset.pattern.permute.xlu0 13
        %1728 = vperm.xlu0 %1727, %v1158
        %v1729 = vpop.permute.xlu0 %1728
        %1731 = vset.pattern.permute.xlu0 13
        %1732 = vperm.xlu0 %1731, %v1159
        %v1733 = vpop.permute.xlu0 %1732
        %1735 = vset.pattern.permute.xlu0 13
        %1736 = vperm.xlu0 %1735, %v1160
        %v1737 = vpop.permute.xlu0 %1736
        %1739 = vset.pattern.permute.xlu0 13
        %1740 = vperm.xlu0 %1739, %v1161
        %v1741 = vpop.permute.xlu0 %1740
        %v1743 = vmul.f32 %v1717, %v1014
        %v1744 = vmul.f32 %v1721, %v1014
        %v1745 = vmul.f32 %v1725, %v1014
        %v1746 = vmul.f32 %v1729, %v1014
        %v1747 = vmul.f32 %v1733, %v1014
        %v1748 = vmul.f32 %v1737, %v1014
        %v1749 = vmul.f32 %v1741, %v1014
        %v1750 = vadd.f32 %v1708, %v1743
        %v1751 = vadd.f32 %v1709, %v1744
        %v1752 = vadd.f32 %v1710, %v1745
        %v1753 = vadd.f32 %v1711, %v1746
        %v1754 = vadd.f32 %v1712, %v1747
        %v1755 = vadd.f32 %v1713, %v1748
        %v1756 = vadd.f32 %v1714, %v1749
        %v1757 = vadd.f32 %v1750, %v1033
        %v1758 = vadd.f32 %v1751, %v1033
        %v1759 = vadd.f32 %v1752, %v1033
        %v1760 = vadd.f32 %v1753, %v1033
        %v1761 = vadd.f32 %v1754, %v1033
        %v1762 = vadd.f32 %v1755, %v1033
        %v1763 = vadd.f32 %v1756, %v1033
        %v1764 = vmax.f32 %v1757, 0.0
        %v1765 = vmax.f32 %v1758, 0.0
        %v1766 = vmax.f32 %v1759, 0.0
        %v1767 = vmax.f32 %v1760, 0.0
        %v1768 = vmax.f32 %v1761, 0.0
        %v1769 = vmax.f32 %v1762, 0.0
        %v1770 = vmax.f32 %v1763, 0.0
        %s1771 = scalar_lea.vmem [#allocation2], 56
        %1772 = vst.msk [vmem:[%s1771] sm:$0x7f] %vm1049, %v1764
        %1773 = vst.msk [vmem:[%s1771 + $0x8] sm:$0x7f] %vm1049, %v1765
        %1774 = vst.msk [vmem:[%s1771 + $0x10] sm:$0x7f] %vm1049, %v1766
        %1775 = vst.msk [vmem:[%s1771 + $0x18] sm:$0x7f] %vm1049, %v1767
        %1776 = vst.msk [vmem:[%s1771 + $0x20] sm:$0x7f] %vm1049, %v1768
        %1777 = vst.msk [vmem:[%s1771 + $0x28] sm:$0x7f] %vm1049, %v1769
        %1778 = vst.msk [vmem:[%s1771 + $0x30] sm:$0x7f] %vm1049, %v1770
        %v1779 = vld [vmem:[%s275] sm:$0x7f]
        %v1780 = vld [vmem:[%s275 + $0x8] sm:$0x7f]
        %v1781 = vld [vmem:[%s275 + $0x10] sm:$0x7f]
        %v1782 = vld [vmem:[%s275 + $0x18] sm:$0x7f]
        %v1783 = vld [vmem:[%s275 + $0x20] sm:$0x7f]
        %v1784 = vld [vmem:[%s275 + $0x28] sm:$0x7f]
        %v1785 = vld [vmem:[%s275 + $0x30] sm:$0x7f]
        %1787 = vset.pattern.permute.xlu0 8
        %1788 = vperm.xlu0 %1787, %v1779
        %v1789 = vpop.permute.xlu0 %1788
        %1792 = vset.pattern.permute.xlu0 8
        %1793 = vperm.xlu0 %1792, %v1780
        %v1794 = vpop.permute.xlu0 %1793
        %1797 = vset.pattern.permute.xlu0 8
        %1798 = vperm.xlu0 %1797, %v1781
        %v1799 = vpop.permute.xlu0 %1798
        %1802 = vset.pattern.permute.xlu0 8
        %1803 = vperm.xlu0 %1802, %v1782
        %v1804 = vpop.permute.xlu0 %1803
        %1807 = vset.pattern.permute.xlu0 8
        %1808 = vperm.xlu0 %1807, %v1783
        %v1809 = vpop.permute.xlu0 %1808
        %1812 = vset.pattern.permute.xlu0 8
        %1813 = vperm.xlu0 %1812, %v1784
        %v1814 = vpop.permute.xlu0 %1813
        %1817 = vset.pattern.permute.xlu0 8
        %1818 = vperm.xlu0 %1817, %v1785
        %v1819 = vpop.permute.xlu0 %1818
        %v1821 = vmul.f32 %v1789, %v324
        %v1822 = vmul.f32 %v1794, %v324
        %v1823 = vmul.f32 %v1799, %v324
        %v1824 = vmul.f32 %v1804, %v324
        %v1825 = vmul.f32 %v1809, %v324
        %v1826 = vmul.f32 %v1814, %v324
        %v1827 = vmul.f32 %v1819, %v324
        %v1828 = vadd.f32 %v1821, 0.0
        %v1829 = vadd.f32 %v1822, 0.0
        %v1830 = vadd.f32 %v1823, 0.0
        %v1831 = vadd.f32 %v1824, 0.0
        %v1832 = vadd.f32 %v1825, 0.0
        %v1833 = vadd.f32 %v1826, 0.0
        %v1834 = vadd.f32 %v1827, 0.0
        %1835 = vset.pattern.permute.xlu0 9
        %1836 = vperm.xlu0 %1835, %v1779
        %v1837 = vpop.permute.xlu0 %1836
        %1839 = vset.pattern.permute.xlu0 9
        %1840 = vperm.xlu0 %1839, %v1780
        %v1841 = vpop.permute.xlu0 %1840
        %1843 = vset.pattern.permute.xlu0 9
        %1844 = vperm.xlu0 %1843, %v1781
        %v1845 = vpop.permute.xlu0 %1844
        %1847 = vset.pattern.permute.xlu0 9
        %1848 = vperm.xlu0 %1847, %v1782
        %v1849 = vpop.permute.xlu0 %1848
        %1851 = vset.pattern.permute.xlu0 9
        %1852 = vperm.xlu0 %1851, %v1783
        %v1853 = vpop.permute.xlu0 %1852
        %1855 = vset.pattern.permute.xlu0 9
        %1856 = vperm.xlu0 %1855, %v1784
        %v1857 = vpop.permute.xlu0 %1856
        %1859 = vset.pattern.permute.xlu0 9
        %1860 = vperm.xlu0 %1859, %v1785
        %v1861 = vpop.permute.xlu0 %1860
        %v1863 = vmul.f32 %v1837, %v370
        %v1864 = vmul.f32 %v1841, %v370
        %v1865 = vmul.f32 %v1845, %v370
        %v1866 = vmul.f32 %v1849, %v370
        %v1867 = vmul.f32 %v1853, %v370
        %v1868 = vmul.f32 %v1857, %v370
        %v1869 = vmul.f32 %v1861, %v370
        %v1870 = vadd.f32 %v1828, %v1863
        %v1871 = vadd.f32 %v1829, %v1864
        %v1872 = vadd.f32 %v1830, %v1865
        %v1873 = vadd.f32 %v1831, %v1866
        %v1874 = vadd.f32 %v1832, %v1867
        %v1875 = vadd.f32 %v1833, %v1868
        %v1876 = vadd.f32 %v1834, %v1869
        %1877 = vset.pattern.permute.xlu0 10
        %1878 = vperm.xlu0 %1877, %v1779
        %v1879 = vpop.permute.xlu0 %1878
        %1881 = vset.pattern.permute.xlu0 10
        %1882 = vperm.xlu0 %1881, %v1780
        %v1883 = vpop.permute.xlu0 %1882
        %1885 = vset.pattern.permute.xlu0 10
        %1886 = vperm.xlu0 %1885, %v1781
        %v1887 = vpop.permute.xlu0 %1886
        %1889 = vset.pattern.permute.xlu0 10
        %1890 = vperm.xlu0 %1889, %v1782
        %v1891 = vpop.permute.xlu0 %1890
        %1893 = vset.pattern.permute.xlu0 10
        %1894 = vperm.xlu0 %1893, %v1783
        %v1895 = vpop.permute.xlu0 %1894
        %1897 = vset.pattern.permute.xlu0 10
        %1898 = vperm.xlu0 %1897, %v1784
        %v1899 = vpop.permute.xlu0 %1898
        %1901 = vset.pattern.permute.xlu0 10
        %1902 = vperm.xlu0 %1901, %v1785
        %v1903 = vpop.permute.xlu0 %1902
        %v1905 = vmul.f32 %v1879, %v416
        %v1906 = vmul.f32 %v1883, %v416
        %v1907 = vmul.f32 %v1887, %v416
        %v1908 = vmul.f32 %v1891, %v416
        %v1909 = vmul.f32 %v1895, %v416
        %v1910 = vmul.f32 %v1899, %v416
        %v1911 = vmul.f32 %v1903, %v416
        %v1912 = vadd.f32 %v1870, %v1905
        %v1913 = vadd.f32 %v1871, %v1906
        %v1914 = vadd.f32 %v1872, %v1907
        %v1915 = vadd.f32 %v1873, %v1908
        %v1916 = vadd.f32 %v1874, %v1909
        %v1917 = vadd.f32 %v1875, %v1910
        %v1918 = vadd.f32 %v1876, %v1911
        %1919 = vset.pattern.permute.xlu0 11
        %1920 = vperm.xlu0 %1919, %v1779
        %v1921 = vpop.permute.xlu0 %1920
        %1923 = vset.pattern.permute.xlu0 11
        %1924 = vperm.xlu0 %1923, %v1780
        %v1925 = vpop.permute.xlu0 %1924
        %1927 = vset.pattern.permute.xlu0 11
        %1928 = vperm.xlu0 %1927, %v1781
        %v1929 = vpop.permute.xlu0 %1928
        %1931 = vset.pattern.permute.xlu0 11
        %1932 = vperm.xlu0 %1931, %v1782
        %v1933 = vpop.permute.xlu0 %1932
        %1935 = vset.pattern.permute.xlu0 11
        %1936 = vperm.xlu0 %1935, %v1783
        %v1937 = vpop.permute.xlu0 %1936
        %1939 = vset.pattern.permute.xlu0 11
        %1940 = vperm.xlu0 %1939, %v1784
        %v1941 = vpop.permute.xlu0 %1940
        %1943 = vset.pattern.permute.xlu0 11
        %1944 = vperm.xlu0 %1943, %v1785
        %v1945 = vpop.permute.xlu0 %1944
        %v1947 = vmul.f32 %v1921, %v462
        %v1948 = vmul.f32 %v1925, %v462
        %v1949 = vmul.f32 %v1929, %v462
        %v1950 = vmul.f32 %v1933, %v462
        %v1951 = vmul.f32 %v1937, %v462
        %v1952 = vmul.f32 %v1941, %v462
        %v1953 = vmul.f32 %v1945, %v462
        %v1954 = vadd.f32 %v1912, %v1947
        %v1955 = vadd.f32 %v1913, %v1948
        %v1956 = vadd.f32 %v1914, %v1949
        %v1957 = vadd.f32 %v1915, %v1950
        %v1958 = vadd.f32 %v1916, %v1951
        %v1959 = vadd.f32 %v1917, %v1952
        %v1960 = vadd.f32 %v1918, %v1953
        %1961 = vset.pattern.permute.xlu0 12
        %1962 = vperm.xlu0 %1961, %v1779
        %v1963 = vpop.permute.xlu0 %1962
        %1965 = vset.pattern.permute.xlu0 12
        %1966 = vperm.xlu0 %1965, %v1780
        %v1967 = vpop.permute.xlu0 %1966
        %1969 = vset.pattern.permute.xlu0 12
        %1970 = vperm.xlu0 %1969, %v1781
        %v1971 = vpop.permute.xlu0 %1970
        %1973 = vset.pattern.permute.xlu0 12
        %1974 = vperm.xlu0 %1973, %v1782
        %v1975 = vpop.permute.xlu0 %1974
        %1977 = vset.pattern.permute.xlu0 12
        %1978 = vperm.xlu0 %1977, %v1783
        %v1979 = vpop.permute.xlu0 %1978
        %1981 = vset.pattern.permute.xlu0 12
        %1982 = vperm.xlu0 %1981, %v1784
        %v1983 = vpop.permute.xlu0 %1982
        %1985 = vset.pattern.permute.xlu0 12
        %1986 = vperm.xlu0 %1985, %v1785
        %v1987 = vpop.permute.xlu0 %1986
        %v1989 = vmul.f32 %v1963, %v508
        %v1990 = vmul.f32 %v1967, %v508
        %v1991 = vmul.f32 %v1971, %v508
        %v1992 = vmul.f32 %v1975, %v508
        %v1993 = vmul.f32 %v1979, %v508
        %v1994 = vmul.f32 %v1983, %v508
        %v1995 = vmul.f32 %v1987, %v508
        %v1996 = vadd.f32 %v1954, %v1989
        %v1997 = vadd.f32 %v1955, %v1990
        %v1998 = vadd.f32 %v1956, %v1991
        %v1999 = vadd.f32 %v1957, %v1992
        %v2000 = vadd.f32 %v1958, %v1993
        %v2001 = vadd.f32 %v1959, %v1994
        %v2002 = vadd.f32 %v1960, %v1995
        %2003 = vset.pattern.permute.xlu0 13
        %2004 = vperm.xlu0 %2003, %v1779
        %v2005 = vpop.permute.xlu0 %2004
        %2007 = vset.pattern.permute.xlu0 13
        %2008 = vperm.xlu0 %2007, %v1780
        %v2009 = vpop.permute.xlu0 %2008
        %2011 = vset.pattern.permute.xlu0 13
        %2012 = vperm.xlu0 %2011, %v1781
        %v2013 = vpop.permute.xlu0 %2012
        %2015 = vset.pattern.permute.xlu0 13
        %2016 = vperm.xlu0 %2015, %v1782
        %v2017 = vpop.permute.xlu0 %2016
        %2019 = vset.pattern.permute.xlu0 13
        %2020 = vperm.xlu0 %2019, %v1783
        %v2021 = vpop.permute.xlu0 %2020
        %2023 = vset.pattern.permute.xlu0 13
        %2024 = vperm.xlu0 %2023, %v1784
        %v2025 = vpop.permute.xlu0 %2024
        %2027 = vset.pattern.permute.xlu0 13
        %2028 = vperm.xlu0 %2027, %v1785
        %v2029 = vpop.permute.xlu0 %2028
        %v2031 = vmul.f32 %v2005, %v554
        %v2032 = vmul.f32 %v2009, %v554
        %v2033 = vmul.f32 %v2013, %v554
        %v2034 = vmul.f32 %v2017, %v554
        %v2035 = vmul.f32 %v2021, %v554
        %v2036 = vmul.f32 %v2025, %v554
        %v2037 = vmul.f32 %v2029, %v554
        %v2038 = vadd.f32 %v1996, %v2031
        %v2039 = vadd.f32 %v1997, %v2032
        %v2040 = vadd.f32 %v1998, %v2033
        %v2041 = vadd.f32 %v1999, %v2034
        %v2042 = vadd.f32 %v2000, %v2035
        %v2043 = vadd.f32 %v2001, %v2036
        %v2044 = vadd.f32 %v2002, %v2037
        %2045 = vset.pattern.permute.xlu0 14
        %2046 = vperm.xlu0 %2045, %v1779
        %v2047 = vpop.permute.xlu0 %2046
        %2049 = vset.pattern.permute.xlu0 14
        %2050 = vperm.xlu0 %2049, %v1780
        %v2051 = vpop.permute.xlu0 %2050
        %2053 = vset.pattern.permute.xlu0 14
        %2054 = vperm.xlu0 %2053, %v1781
        %v2055 = vpop.permute.xlu0 %2054
        %2057 = vset.pattern.permute.xlu0 14
        %2058 = vperm.xlu0 %2057, %v1782
        %v2059 = vpop.permute.xlu0 %2058
        %2061 = vset.pattern.permute.xlu0 14
        %2062 = vperm.xlu0 %2061, %v1783
        %v2063 = vpop.permute.xlu0 %2062
        %2065 = vset.pattern.permute.xlu0 14
        %2066 = vperm.xlu0 %2065, %v1784
        %v2067 = vpop.permute.xlu0 %2066
        %2069 = vset.pattern.permute.xlu0 14
        %2070 = vperm.xlu0 %2069, %v1785
        %v2071 = vpop.permute.xlu0 %2070
        %v2073 = vmul.f32 %v2047, %v600
        %v2074 = vmul.f32 %v2051, %v600
        %v2075 = vmul.f32 %v2055, %v600
        %v2076 = vmul.f32 %v2059, %v600
        %v2077 = vmul.f32 %v2063, %v600
        %v2078 = vmul.f32 %v2067, %v600
        %v2079 = vmul.f32 %v2071, %v600
        %v2080 = vadd.f32 %v2038, %v2073
        %v2081 = vadd.f32 %v2039, %v2074
        %v2082 = vadd.f32 %v2040, %v2075
        %v2083 = vadd.f32 %v2041, %v2076
        %v2084 = vadd.f32 %v2042, %v2077
        %v2085 = vadd.f32 %v2043, %v2078
        %v2086 = vadd.f32 %v2044, %v2079
        %2087 = vset.pattern.permute.xlu0 15
        %2088 = vperm.xlu0 %2087, %v1779
        %v2089 = vpop.permute.xlu0 %2088
        %2091 = vset.pattern.permute.xlu0 15
        %2092 = vperm.xlu0 %2091, %v1780
        %v2093 = vpop.permute.xlu0 %2092
        %2095 = vset.pattern.permute.xlu0 15
        %2096 = vperm.xlu0 %2095, %v1781
        %v2097 = vpop.permute.xlu0 %2096
        %2099 = vset.pattern.permute.xlu0 15
        %2100 = vperm.xlu0 %2099, %v1782
        %v2101 = vpop.permute.xlu0 %2100
        %2103 = vset.pattern.permute.xlu0 15
        %2104 = vperm.xlu0 %2103, %v1783
        %v2105 = vpop.permute.xlu0 %2104
        %2107 = vset.pattern.permute.xlu0 15
        %2108 = vperm.xlu0 %2107, %v1784
        %v2109 = vpop.permute.xlu0 %2108
        %2111 = vset.pattern.permute.xlu0 15
        %2112 = vperm.xlu0 %2111, %v1785
        %v2113 = vpop.permute.xlu0 %2112
        %v2115 = vmul.f32 %v2089, %v646
        %v2116 = vmul.f32 %v2093, %v646
        %v2117 = vmul.f32 %v2097, %v646
        %v2118 = vmul.f32 %v2101, %v646
        %v2119 = vmul.f32 %v2105, %v646
        %v2120 = vmul.f32 %v2109, %v646
        %v2121 = vmul.f32 %v2113, %v646
        %v2122 = vadd.f32 %v2080, %v2115
        %v2123 = vadd.f32 %v2081, %v2116
        %v2124 = vadd.f32 %v2082, %v2117
        %v2125 = vadd.f32 %v2083, %v2118
        %v2126 = vadd.f32 %v2084, %v2119
        %v2127 = vadd.f32 %v2085, %v2120
        %v2128 = vadd.f32 %v2086, %v2121
        %s2129 = scalar_lea.vmem %s275, 8
        %v2130 = vld [vmem:[%s2129] sm:$0x7f]
        %v2131 = vld [vmem:[%s2129 + $0x8] sm:$0x7f]
        %v2132 = vld [vmem:[%s2129 + $0x10] sm:$0x7f]
        %v2133 = vld [vmem:[%s2129 + $0x18] sm:$0x7f]
        %v2134 = vld [vmem:[%s2129 + $0x20] sm:$0x7f]
        %v2135 = vld [vmem:[%s2129 + $0x28] sm:$0x7f]
        %v2136 = vld [vmem:[%s2129 + $0x30] sm:$0x7f]
        %2138 = vset.pattern.permute.xlu0 0
        %2139 = vperm.xlu0 %2138, %v2130
        %v2140 = vpop.permute.xlu0 %2139
        %2143 = vset.pattern.permute.xlu0 0
        %2144 = vperm.xlu0 %2143, %v2131
        %v2145 = vpop.permute.xlu0 %2144
        %2148 = vset.pattern.permute.xlu0 0
        %2149 = vperm.xlu0 %2148, %v2132
        %v2150 = vpop.permute.xlu0 %2149
        %2153 = vset.pattern.permute.xlu0 0
        %2154 = vperm.xlu0 %2153, %v2133
        %v2155 = vpop.permute.xlu0 %2154
        %2158 = vset.pattern.permute.xlu0 0
        %2159 = vperm.xlu0 %2158, %v2134
        %v2160 = vpop.permute.xlu0 %2159
        %2163 = vset.pattern.permute.xlu0 0
        %2164 = vperm.xlu0 %2163, %v2135
        %v2165 = vpop.permute.xlu0 %2164
        %2168 = vset.pattern.permute.xlu0 0
        %2169 = vperm.xlu0 %2168, %v2136
        %v2170 = vpop.permute.xlu0 %2169
        %v2172 = vmul.f32 %v2140, %v692
        %v2173 = vmul.f32 %v2145, %v692
        %v2174 = vmul.f32 %v2150, %v692
        %v2175 = vmul.f32 %v2155, %v692
        %v2176 = vmul.f32 %v2160, %v692
        %v2177 = vmul.f32 %v2165, %v692
        %v2178 = vmul.f32 %v2170, %v692
        %v2179 = vadd.f32 %v2122, %v2172
        %v2180 = vadd.f32 %v2123, %v2173
        %v2181 = vadd.f32 %v2124, %v2174
        %v2182 = vadd.f32 %v2125, %v2175
        %v2183 = vadd.f32 %v2126, %v2176
        %v2184 = vadd.f32 %v2127, %v2177
        %v2185 = vadd.f32 %v2128, %v2178
        %2186 = vset.pattern.permute.xlu0 1
        %2187 = vperm.xlu0 %2186, %v2130
        %v2188 = vpop.permute.xlu0 %2187
        %2190 = vset.pattern.permute.xlu0 1
        %2191 = vperm.xlu0 %2190, %v2131
        %v2192 = vpop.permute.xlu0 %2191
        %2194 = vset.pattern.permute.xlu0 1
        %2195 = vperm.xlu0 %2194, %v2132
        %v2196 = vpop.permute.xlu0 %2195
        %2198 = vset.pattern.permute.xlu0 1
        %2199 = vperm.xlu0 %2198, %v2133
        %v2200 = vpop.permute.xlu0 %2199
        %2202 = vset.pattern.permute.xlu0 1
        %2203 = vperm.xlu0 %2202, %v2134
        %v2204 = vpop.permute.xlu0 %2203
        %2206 = vset.pattern.permute.xlu0 1
        %2207 = vperm.xlu0 %2206, %v2135
        %v2208 = vpop.permute.xlu0 %2207
        %2210 = vset.pattern.permute.xlu0 1
        %2211 = vperm.xlu0 %2210, %v2136
        %v2212 = vpop.permute.xlu0 %2211
        %v2214 = vmul.f32 %v2188, %v738
        %v2215 = vmul.f32 %v2192, %v738
        %v2216 = vmul.f32 %v2196, %v738
        %v2217 = vmul.f32 %v2200, %v738
        %v2218 = vmul.f32 %v2204, %v738
        %v2219 = vmul.f32 %v2208, %v738
        %v2220 = vmul.f32 %v2212, %v738
        %v2221 = vadd.f32 %v2179, %v2214
        %v2222 = vadd.f32 %v2180, %v2215
        %v2223 = vadd.f32 %v2181, %v2216
        %v2224 = vadd.f32 %v2182, %v2217
        %v2225 = vadd.f32 %v2183, %v2218
        %v2226 = vadd.f32 %v2184, %v2219
        %v2227 = vadd.f32 %v2185, %v2220
        %2228 = vset.pattern.permute.xlu0 2
        %2229 = vperm.xlu0 %2228, %v2130
        %v2230 = vpop.permute.xlu0 %2229
        %2232 = vset.pattern.permute.xlu0 2
        %2233 = vperm.xlu0 %2232, %v2131
        %v2234 = vpop.permute.xlu0 %2233
        %2236 = vset.pattern.permute.xlu0 2
        %2237 = vperm.xlu0 %2236, %v2132
        %v2238 = vpop.permute.xlu0 %2237
        %2240 = vset.pattern.permute.xlu0 2
        %2241 = vperm.xlu0 %2240, %v2133
        %v2242 = vpop.permute.xlu0 %2241
        %2244 = vset.pattern.permute.xlu0 2
        %2245 = vperm.xlu0 %2244, %v2134
        %v2246 = vpop.permute.xlu0 %2245
        %2248 = vset.pattern.permute.xlu0 2
        %2249 = vperm.xlu0 %2248, %v2135
        %v2250 = vpop.permute.xlu0 %2249
        %2252 = vset.pattern.permute.xlu0 2
        %2253 = vperm.xlu0 %2252, %v2136
        %v2254 = vpop.permute.xlu0 %2253
        %v2256 = vmul.f32 %v2230, %v784
        %v2257 = vmul.f32 %v2234, %v784
        %v2258 = vmul.f32 %v2238, %v784
        %v2259 = vmul.f32 %v2242, %v784
        %v2260 = vmul.f32 %v2246, %v784
        %v2261 = vmul.f32 %v2250, %v784
        %v2262 = vmul.f32 %v2254, %v784
        %v2263 = vadd.f32 %v2221, %v2256
        %v2264 = vadd.f32 %v2222, %v2257
        %v2265 = vadd.f32 %v2223, %v2258
        %v2266 = vadd.f32 %v2224, %v2259
        %v2267 = vadd.f32 %v2225, %v2260
        %v2268 = vadd.f32 %v2226, %v2261
        %v2269 = vadd.f32 %v2227, %v2262
        %2270 = vset.pattern.permute.xlu0 3
        %2271 = vperm.xlu0 %2270, %v2130
        %v2272 = vpop.permute.xlu0 %2271
        %2274 = vset.pattern.permute.xlu0 3
        %2275 = vperm.xlu0 %2274, %v2131
        %v2276 = vpop.permute.xlu0 %2275
        %2278 = vset.pattern.permute.xlu0 3
        %2279 = vperm.xlu0 %2278, %v2132
        %v2280 = vpop.permute.xlu0 %2279
        %2282 = vset.pattern.permute.xlu0 3
        %2283 = vperm.xlu0 %2282, %v2133
        %v2284 = vpop.permute.xlu0 %2283
        %2286 = vset.pattern.permute.xlu0 3
        %2287 = vperm.xlu0 %2286, %v2134
        %v2288 = vpop.permute.xlu0 %2287
        %2290 = vset.pattern.permute.xlu0 3
        %2291 = vperm.xlu0 %2290, %v2135
        %v2292 = vpop.permute.xlu0 %2291
        %2294 = vset.pattern.permute.xlu0 3
        %2295 = vperm.xlu0 %2294, %v2136
        %v2296 = vpop.permute.xlu0 %2295
        %v2298 = vmul.f32 %v2272, %v830
        %v2299 = vmul.f32 %v2276, %v830
        %v2300 = vmul.f32 %v2280, %v830
        %v2301 = vmul.f32 %v2284, %v830
        %v2302 = vmul.f32 %v2288, %v830
        %v2303 = vmul.f32 %v2292, %v830
        %v2304 = vmul.f32 %v2296, %v830
        %v2305 = vadd.f32 %v2263, %v2298
        %v2306 = vadd.f32 %v2264, %v2299
        %v2307 = vadd.f32 %v2265, %v2300
        %v2308 = vadd.f32 %v2266, %v2301
        %v2309 = vadd.f32 %v2267, %v2302
        %v2310 = vadd.f32 %v2268, %v2303
        %v2311 = vadd.f32 %v2269, %v2304
        %2312 = vset.pattern.permute.xlu0 4
        %2313 = vperm.xlu0 %2312, %v2130
        %v2314 = vpop.permute.xlu0 %2313
        %2316 = vset.pattern.permute.xlu0 4
        %2317 = vperm.xlu0 %2316, %v2131
        %v2318 = vpop.permute.xlu0 %2317
        %2320 = vset.pattern.permute.xlu0 4
        %2321 = vperm.xlu0 %2320, %v2132
        %v2322 = vpop.permute.xlu0 %2321
        %2324 = vset.pattern.permute.xlu0 4
        %2325 = vperm.xlu0 %2324, %v2133
        %v2326 = vpop.permute.xlu0 %2325
        %2328 = vset.pattern.permute.xlu0 4
        %2329 = vperm.xlu0 %2328, %v2134
        %v2330 = vpop.permute.xlu0 %2329
        %2332 = vset.pattern.permute.xlu0 4
        %2333 = vperm.xlu0 %2332, %v2135
        %v2334 = vpop.permute.xlu0 %2333
        %2336 = vset.pattern.permute.xlu0 4
        %2337 = vperm.xlu0 %2336, %v2136
        %v2338 = vpop.permute.xlu0 %2337
        %v2340 = vmul.f32 %v2314, %v876
        %v2341 = vmul.f32 %v2318, %v876
        %v2342 = vmul.f32 %v2322, %v876
        %v2343 = vmul.f32 %v2326, %v876
        %v2344 = vmul.f32 %v2330, %v876
        %v2345 = vmul.f32 %v2334, %v876
        %v2346 = vmul.f32 %v2338, %v876
        %v2347 = vadd.f32 %v2305, %v2340
        %v2348 = vadd.f32 %v2306, %v2341
        %v2349 = vadd.f32 %v2307, %v2342
        %v2350 = vadd.f32 %v2308, %v2343
        %v2351 = vadd.f32 %v2309, %v2344
        %v2352 = vadd.f32 %v2310, %v2345
        %v2353 = vadd.f32 %v2311, %v2346
        %2354 = vset.pattern.permute.xlu0 5
        %2355 = vperm.xlu0 %2354, %v2130
        %v2356 = vpop.permute.xlu0 %2355
        %2358 = vset.pattern.permute.xlu0 5
        %2359 = vperm.xlu0 %2358, %v2131
        %v2360 = vpop.permute.xlu0 %2359
        %2362 = vset.pattern.permute.xlu0 5
        %2363 = vperm.xlu0 %2362, %v2132
        %v2364 = vpop.permute.xlu0 %2363
        %2366 = vset.pattern.permute.xlu0 5
        %2367 = vperm.xlu0 %2366, %v2133
        %v2368 = vpop.permute.xlu0 %2367
        %2370 = vset.pattern.permute.xlu0 5
        %2371 = vperm.xlu0 %2370, %v2134
        %v2372 = vpop.permute.xlu0 %2371
        %2374 = vset.pattern.permute.xlu0 5
        %2375 = vperm.xlu0 %2374, %v2135
        %v2376 = vpop.permute.xlu0 %2375
        %2378 = vset.pattern.permute.xlu0 5
        %2379 = vperm.xlu0 %2378, %v2136
        %v2380 = vpop.permute.xlu0 %2379
        %v2382 = vmul.f32 %v2356, %v922
        %v2383 = vmul.f32 %v2360, %v922
        %v2384 = vmul.f32 %v2364, %v922
        %v2385 = vmul.f32 %v2368, %v922
        %v2386 = vmul.f32 %v2372, %v922
        %v2387 = vmul.f32 %v2376, %v922
        %v2388 = vmul.f32 %v2380, %v922
        %v2389 = vadd.f32 %v2347, %v2382
        %v2390 = vadd.f32 %v2348, %v2383
        %v2391 = vadd.f32 %v2349, %v2384
        %v2392 = vadd.f32 %v2350, %v2385
        %v2393 = vadd.f32 %v2351, %v2386
        %v2394 = vadd.f32 %v2352, %v2387
        %v2395 = vadd.f32 %v2353, %v2388
        %2396 = vset.pattern.permute.xlu0 6
        %2397 = vperm.xlu0 %2396, %v2130
        %v2398 = vpop.permute.xlu0 %2397
        %2400 = vset.pattern.permute.xlu0 6
        %2401 = vperm.xlu0 %2400, %v2131
        %v2402 = vpop.permute.xlu0 %2401
        %2404 = vset.pattern.permute.xlu0 6
        %2405 = vperm.xlu0 %2404, %v2132
        %v2406 = vpop.permute.xlu0 %2405
        %2408 = vset.pattern.permute.xlu0 6
        %2409 = vperm.xlu0 %2408, %v2133
        %v2410 = vpop.permute.xlu0 %2409
        %2412 = vset.pattern.permute.xlu0 6
        %2413 = vperm.xlu0 %2412, %v2134
        %v2414 = vpop.permute.xlu0 %2413
        %2416 = vset.pattern.permute.xlu0 6
        %2417 = vperm.xlu0 %2416, %v2135
        %v2418 = vpop.permute.xlu0 %2417
        %2420 = vset.pattern.permute.xlu0 6
        %2421 = vperm.xlu0 %2420, %v2136
        %v2422 = vpop.permute.xlu0 %2421
        %v2424 = vmul.f32 %v2398, %v968
        %v2425 = vmul.f32 %v2402, %v968
        %v2426 = vmul.f32 %v2406, %v968
        %v2427 = vmul.f32 %v2410, %v968
        %v2428 = vmul.f32 %v2414, %v968
        %v2429 = vmul.f32 %v2418, %v968
        %v2430 = vmul.f32 %v2422, %v968
        %v2431 = vadd.f32 %v2389, %v2424
        %v2432 = vadd.f32 %v2390, %v2425
        %v2433 = vadd.f32 %v2391, %v2426
        %v2434 = vadd.f32 %v2392, %v2427
        %v2435 = vadd.f32 %v2393, %v2428
        %v2436 = vadd.f32 %v2394, %v2429
        %v2437 = vadd.f32 %v2395, %v2430
        %2438 = vset.pattern.permute.xlu0 7
        %2439 = vperm.xlu0 %2438, %v2130
        %v2440 = vpop.permute.xlu0 %2439
        %2442 = vset.pattern.permute.xlu0 7
        %2443 = vperm.xlu0 %2442, %v2131
        %v2444 = vpop.permute.xlu0 %2443
        %2446 = vset.pattern.permute.xlu0 7
        %2447 = vperm.xlu0 %2446, %v2132
        %v2448 = vpop.permute.xlu0 %2447
        %2450 = vset.pattern.permute.xlu0 7
        %2451 = vperm.xlu0 %2450, %v2133
        %v2452 = vpop.permute.xlu0 %2451
        %2454 = vset.pattern.permute.xlu0 7
        %2455 = vperm.xlu0 %2454, %v2134
        %v2456 = vpop.permute.xlu0 %2455
        %2458 = vset.pattern.permute.xlu0 7
        %2459 = vperm.xlu0 %2458, %v2135
        %v2460 = vpop.permute.xlu0 %2459
        %2462 = vset.pattern.permute.xlu0 7
        %2463 = vperm.xlu0 %2462, %v2136
        %v2464 = vpop.permute.xlu0 %2463
        %v2466 = vmul.f32 %v2440, %v1014
        %v2467 = vmul.f32 %v2444, %v1014
        %v2468 = vmul.f32 %v2448, %v1014
        %v2469 = vmul.f32 %v2452, %v1014
        %v2470 = vmul.f32 %v2456, %v1014
        %v2471 = vmul.f32 %v2460, %v1014
        %v2472 = vmul.f32 %v2464, %v1014
        %v2473 = vadd.f32 %v2431, %v2466
        %v2474 = vadd.f32 %v2432, %v2467
        %v2475 = vadd.f32 %v2433, %v2468
        %v2476 = vadd.f32 %v2434, %v2469
        %v2477 = vadd.f32 %v2435, %v2470
        %v2478 = vadd.f32 %v2436, %v2471
        %v2479 = vadd.f32 %v2437, %v2472
        %v2480 = vadd.f32 %v2473, %v1033
        %v2481 = vadd.f32 %v2474, %v1033
        %v2482 = vadd.f32 %v2475, %v1033
        %v2483 = vadd.f32 %v2476, %v1033
        %v2484 = vadd.f32 %v2477, %v1033
        %v2485 = vadd.f32 %v2478, %v1033
        %v2486 = vadd.f32 %v2479, %v1033
        %v2487 = vmax.f32 %v2480, 0.0
        %v2488 = vmax.f32 %v2481, 0.0
        %v2489 = vmax.f32 %v2482, 0.0
        %v2490 = vmax.f32 %v2483, 0.0
        %v2491 = vmax.f32 %v2484, 0.0
        %v2492 = vmax.f32 %v2485, 0.0
        %v2493 = vmax.f32 %v2486, 0.0
        %s2494 = scalar_lea.vmem [#allocation2], 112
        %2495 = vst.msk [vmem:[%s2494] sm:$0x7f] %vm1049, %v2487
        %2496 = vst.msk [vmem:[%s2494 + $0x8] sm:$0x7f] %vm1049, %v2488
        %2497 = vst.msk [vmem:[%s2494 + $0x10] sm:$0x7f] %vm1049, %v2489
        %2498 = vst.msk [vmem:[%s2494 + $0x18] sm:$0x7f] %vm1049, %v2490
        %2499 = vst.msk [vmem:[%s2494 + $0x20] sm:$0x7f] %vm1049, %v2491
        %2500 = vst.msk [vmem:[%s2494 + $0x28] sm:$0x7f] %vm1049, %v2492
        %2501 = vst.msk [vmem:[%s2494 + $0x30] sm:$0x7f] %vm1049, %v2493
        %v2502 = vld [vmem:[%s275] sm:$0x7f]
        %v2503 = vld [vmem:[%s275 + $0x8] sm:$0x7f]
        %v2504 = vld [vmem:[%s275 + $0x10] sm:$0x7f]
        %v2505 = vld [vmem:[%s275 + $0x18] sm:$0x7f]
        %v2506 = vld [vmem:[%s275 + $0x20] sm:$0x7f]
        %v2507 = vld [vmem:[%s275 + $0x28] sm:$0x7f]
        %v2508 = vld [vmem:[%s275 + $0x30] sm:$0x7f]
        %2510 = vset.pattern.permute.xlu0 10
        %2511 = vperm.xlu0 %2510, %v2502
        %v2512 = vpop.permute.xlu0 %2511
        %2515 = vset.pattern.permute.xlu0 10
        %2516 = vperm.xlu0 %2515, %v2503
        %v2517 = vpop.permute.xlu0 %2516
        %2520 = vset.pattern.permute.xlu0 10
        %2521 = vperm.xlu0 %2520, %v2504
        %v2522 = vpop.permute.xlu0 %2521
        %2525 = vset.pattern.permute.xlu0 10
        %2526 = vperm.xlu0 %2525, %v2505
        %v2527 = vpop.permute.xlu0 %2526
        %2530 = vset.pattern.permute.xlu0 10
        %2531 = vperm.xlu0 %2530, %v2506
        %v2532 = vpop.permute.xlu0 %2531
        %2535 = vset.pattern.permute.xlu0 10
        %2536 = vperm.xlu0 %2535, %v2507
        %v2537 = vpop.permute.xlu0 %2536
        %2540 = vset.pattern.permute.xlu0 10
        %2541 = vperm.xlu0 %2540, %v2508
        %v2542 = vpop.permute.xlu0 %2541
        %v2544 = vmul.f32 %v2512, %v324
        %v2545 = vmul.f32 %v2517, %v324
        %v2546 = vmul.f32 %v2522, %v324
        %v2547 = vmul.f32 %v2527, %v324
        %v2548 = vmul.f32 %v2532, %v324
        %v2549 = vmul.f32 %v2537, %v324
        %v2550 = vmul.f32 %v2542, %v324
        %v2551 = vadd.f32 %v2544, 0.0
        %v2552 = vadd.f32 %v2545, 0.0
        %v2553 = vadd.f32 %v2546, 0.0
        %v2554 = vadd.f32 %v2547, 0.0
        %v2555 = vadd.f32 %v2548, 0.0
        %v2556 = vadd.f32 %v2549, 0.0
        %v2557 = vadd.f32 %v2550, 0.0
        %2558 = vset.pattern.permute.xlu0 11
        %2559 = vperm.xlu0 %2558, %v2502
        %v2560 = vpop.permute.xlu0 %2559
        %2562 = vset.pattern.permute.xlu0 11
        %2563 = vperm.xlu0 %2562, %v2503
        %v2564 = vpop.permute.xlu0 %2563
        %2566 = vset.pattern.permute.xlu0 11
        %2567 = vperm.xlu0 %2566, %v2504
        %v2568 = vpop.permute.xlu0 %2567
        %2570 = vset.pattern.permute.xlu0 11
        %2571 = vperm.xlu0 %2570, %v2505
        %v2572 = vpop.permute.xlu0 %2571
        %2574 = vset.pattern.permute.xlu0 11
        %2575 = vperm.xlu0 %2574, %v2506
        %v2576 = vpop.permute.xlu0 %2575
        %2578 = vset.pattern.permute.xlu0 11
        %2579 = vperm.xlu0 %2578, %v2507
        %v2580 = vpop.permute.xlu0 %2579
        %2582 = vset.pattern.permute.xlu0 11
        %2583 = vperm.xlu0 %2582, %v2508
        %v2584 = vpop.permute.xlu0 %2583
        %v2586 = vmul.f32 %v2560, %v370
        %v2587 = vmul.f32 %v2564, %v370
        %v2588 = vmul.f32 %v2568, %v370
        %v2589 = vmul.f32 %v2572, %v370
        %v2590 = vmul.f32 %v2576, %v370
        %v2591 = vmul.f32 %v2580, %v370
        %v2592 = vmul.f32 %v2584, %v370
        %v2593 = vadd.f32 %v2551, %v2586
        %v2594 = vadd.f32 %v2552, %v2587
        %v2595 = vadd.f32 %v2553, %v2588
        %v2596 = vadd.f32 %v2554, %v2589
        %v2597 = vadd.f32 %v2555, %v2590
        %v2598 = vadd.f32 %v2556, %v2591
        %v2599 = vadd.f32 %v2557, %v2592
        %v2600 = vld [vmem:[%s275 + $0x1] sm:$0x7f]
        %v2601 = vld [vmem:[%s275 + $0x9] sm:$0x7f]
        %v2602 = vld [vmem:[%s275 + $0x11] sm:$0x7f]
        %v2603 = vld [vmem:[%s275 + $0x19] sm:$0x7f]
        %v2604 = vld [vmem:[%s275 + $0x21] sm:$0x7f]
        %v2605 = vld [vmem:[%s275 + $0x29] sm:$0x7f]
        %v2606 = vld [vmem:[%s275 + $0x31] sm:$0x7f]
        %2608 = vset.pattern.permute.xlu0 8
        %2609 = vperm.xlu0 %2608, %v2600
        %v2610 = vpop.permute.xlu0 %2609
        %2613 = vset.pattern.permute.xlu0 8
        %2614 = vperm.xlu0 %2613, %v2601
        %v2615 = vpop.permute.xlu0 %2614
        %2618 = vset.pattern.permute.xlu0 8
        %2619 = vperm.xlu0 %2618, %v2602
        %v2620 = vpop.permute.xlu0 %2619
        %2623 = vset.pattern.permute.xlu0 8
        %2624 = vperm.xlu0 %2623, %v2603
        %v2625 = vpop.permute.xlu0 %2624
        %2628 = vset.pattern.permute.xlu0 8
        %2629 = vperm.xlu0 %2628, %v2604
        %v2630 = vpop.permute.xlu0 %2629
        %2633 = vset.pattern.permute.xlu0 8
        %2634 = vperm.xlu0 %2633, %v2605
        %v2635 = vpop.permute.xlu0 %2634
        %2638 = vset.pattern.permute.xlu0 8
        %2639 = vperm.xlu0 %2638, %v2606
        %v2640 = vpop.permute.xlu0 %2639
        %v2642 = vmul.f32 %v2610, %v416
        %v2643 = vmul.f32 %v2615, %v416
        %v2644 = vmul.f32 %v2620, %v416
        %v2645 = vmul.f32 %v2625, %v416
        %v2646 = vmul.f32 %v2630, %v416
        %v2647 = vmul.f32 %v2635, %v416
        %v2648 = vmul.f32 %v2640, %v416
        %v2649 = vadd.f32 %v2593, %v2642
        %v2650 = vadd.f32 %v2594, %v2643
        %v2651 = vadd.f32 %v2595, %v2644
        %v2652 = vadd.f32 %v2596, %v2645
        %v2653 = vadd.f32 %v2597, %v2646
        %v2654 = vadd.f32 %v2598, %v2647
        %v2655 = vadd.f32 %v2599, %v2648
        %2656 = vset.pattern.permute.xlu0 9
        %2657 = vperm.xlu0 %2656, %v2600
        %v2658 = vpop.permute.xlu0 %2657
        %2660 = vset.pattern.permute.xlu0 9
        %2661 = vperm.xlu0 %2660, %v2601
        %v2662 = vpop.permute.xlu0 %2661
        %2664 = vset.pattern.permute.xlu0 9
        %2665 = vperm.xlu0 %2664, %v2602
        %v2666 = vpop.permute.xlu0 %2665
        %2668 = vset.pattern.permute.xlu0 9
        %2669 = vperm.xlu0 %2668, %v2603
        %v2670 = vpop.permute.xlu0 %2669
        %2672 = vset.pattern.permute.xlu0 9
        %2673 = vperm.xlu0 %2672, %v2604
        %v2674 = vpop.permute.xlu0 %2673
        %2676 = vset.pattern.permute.xlu0 9
        %2677 = vperm.xlu0 %2676, %v2605
        %v2678 = vpop.permute.xlu0 %2677
        %2680 = vset.pattern.permute.xlu0 9
        %2681 = vperm.xlu0 %2680, %v2606
        %v2682 = vpop.permute.xlu0 %2681
        %v2684 = vmul.f32 %v2658, %v462
        %v2685 = vmul.f32 %v2662, %v462
        %v2686 = vmul.f32 %v2666, %v462
        %v2687 = vmul.f32 %v2670, %v462
        %v2688 = vmul.f32 %v2674, %v462
        %v2689 = vmul.f32 %v2678, %v462
        %v2690 = vmul.f32 %v2682, %v462
        %v2691 = vadd.f32 %v2649, %v2684
        %v2692 = vadd.f32 %v2650, %v2685
        %v2693 = vadd.f32 %v2651, %v2686
        %v2694 = vadd.f32 %v2652, %v2687
        %v2695 = vadd.f32 %v2653, %v2688
        %v2696 = vadd.f32 %v2654, %v2689
        %v2697 = vadd.f32 %v2655, %v2690
        %2698 = vset.pattern.permute.xlu0 14
        %2699 = vperm.xlu0 %2698, %v2502
        %v2700 = vpop.permute.xlu0 %2699
        %2702 = vset.pattern.permute.xlu0 14
        %2703 = vperm.xlu0 %2702, %v2503
        %v2704 = vpop.permute.xlu0 %2703
        %2706 = vset.pattern.permute.xlu0 14
        %2707 = vperm.xlu0 %2706, %v2504
        %v2708 = vpop.permute.xlu0 %2707
        %2710 = vset.pattern.permute.xlu0 14
        %2711 = vperm.xlu0 %2710, %v2505
        %v2712 = vpop.permute.xlu0 %2711
        %2714 = vset.pattern.permute.xlu0 14
        %2715 = vperm.xlu0 %2714, %v2506
        %v2716 = vpop.permute.xlu0 %2715
        %2718 = vset.pattern.permute.xlu0 14
        %2719 = vperm.xlu0 %2718, %v2507
        %v2720 = vpop.permute.xlu0 %2719
        %2722 = vset.pattern.permute.xlu0 14
        %2723 = vperm.xlu0 %2722, %v2508
        %v2724 = vpop.permute.xlu0 %2723
        %v2726 = vmul.f32 %v2700, %v508
        %v2727 = vmul.f32 %v2704, %v508
        %v2728 = vmul.f32 %v2708, %v508
        %v2729 = vmul.f32 %v2712, %v508
        %v2730 = vmul.f32 %v2716, %v508
        %v2731 = vmul.f32 %v2720, %v508
        %v2732 = vmul.f32 %v2724, %v508
        %v2733 = vadd.f32 %v2691, %v2726
        %v2734 = vadd.f32 %v2692, %v2727
        %v2735 = vadd.f32 %v2693, %v2728
        %v2736 = vadd.f32 %v2694, %v2729
        %v2737 = vadd.f32 %v2695, %v2730
        %v2738 = vadd.f32 %v2696, %v2731
        %v2739 = vadd.f32 %v2697, %v2732
        %2740 = vset.pattern.permute.xlu0 15
        %2741 = vperm.xlu0 %2740, %v2502
        %v2742 = vpop.permute.xlu0 %2741
        %2744 = vset.pattern.permute.xlu0 15
        %2745 = vperm.xlu0 %2744, %v2503
        %v2746 = vpop.permute.xlu0 %2745
        %2748 = vset.pattern.permute.xlu0 15
        %2749 = vperm.xlu0 %2748, %v2504
        %v2750 = vpop.permute.xlu0 %2749
        %2752 = vset.pattern.permute.xlu0 15
        %2753 = vperm.xlu0 %2752, %v2505
        %v2754 = vpop.permute.xlu0 %2753
        %2756 = vset.pattern.permute.xlu0 15
        %2757 = vperm.xlu0 %2756, %v2506
        %v2758 = vpop.permute.xlu0 %2757
        %2760 = vset.pattern.permute.xlu0 15
        %2761 = vperm.xlu0 %2760, %v2507
        %v2762 = vpop.permute.xlu0 %2761
        %2764 = vset.pattern.permute.xlu0 15
        %2765 = vperm.xlu0 %2764, %v2508
        %v2766 = vpop.permute.xlu0 %2765
        %v2768 = vmul.f32 %v2742, %v554
        %v2769 = vmul.f32 %v2746, %v554
        %v2770 = vmul.f32 %v2750, %v554
        %v2771 = vmul.f32 %v2754, %v554
        %v2772 = vmul.f32 %v2758, %v554
        %v2773 = vmul.f32 %v2762, %v554
        %v2774 = vmul.f32 %v2766, %v554
        %v2775 = vadd.f32 %v2733, %v2768
        %v2776 = vadd.f32 %v2734, %v2769
        %v2777 = vadd.f32 %v2735, %v2770
        %v2778 = vadd.f32 %v2736, %v2771
        %v2779 = vadd.f32 %v2737, %v2772
        %v2780 = vadd.f32 %v2738, %v2773
        %v2781 = vadd.f32 %v2739, %v2774
        %2782 = vset.pattern.permute.xlu0 12
        %2783 = vperm.xlu0 %2782, %v2600
        %v2784 = vpop.permute.xlu0 %2783
        %2786 = vset.pattern.permute.xlu0 12
        %2787 = vperm.xlu0 %2786, %v2601
        %v2788 = vpop.permute.xlu0 %2787
        %2790 = vset.pattern.permute.xlu0 12
        %2791 = vperm.xlu0 %2790, %v2602
        %v2792 = vpop.permute.xlu0 %2791
        %2794 = vset.pattern.permute.xlu0 12
        %2795 = vperm.xlu0 %2794, %v2603
        %v2796 = vpop.permute.xlu0 %2795
        %2798 = vset.pattern.permute.xlu0 12
        %2799 = vperm.xlu0 %2798, %v2604
        %v2800 = vpop.permute.xlu0 %2799
        %2802 = vset.pattern.permute.xlu0 12
        %2803 = vperm.xlu0 %2802, %v2605
        %v2804 = vpop.permute.xlu0 %2803
        %2806 = vset.pattern.permute.xlu0 12
        %2807 = vperm.xlu0 %2806, %v2606
        %v2808 = vpop.permute.xlu0 %2807
        %v2810 = vmul.f32 %v2784, %v600
        %v2811 = vmul.f32 %v2788, %v600
        %v2812 = vmul.f32 %v2792, %v600
        %v2813 = vmul.f32 %v2796, %v600
        %v2814 = vmul.f32 %v2800, %v600
        %v2815 = vmul.f32 %v2804, %v600
        %v2816 = vmul.f32 %v2808, %v600
        %v2817 = vadd.f32 %v2775, %v2810
        %v2818 = vadd.f32 %v2776, %v2811
        %v2819 = vadd.f32 %v2777, %v2812
        %v2820 = vadd.f32 %v2778, %v2813
        %v2821 = vadd.f32 %v2779, %v2814
        %v2822 = vadd.f32 %v2780, %v2815
        %v2823 = vadd.f32 %v2781, %v2816
        %2824 = vset.pattern.permute.xlu0 13
        %2825 = vperm.xlu0 %2824, %v2600
        %v2826 = vpop.permute.xlu0 %2825
        %2828 = vset.pattern.permute.xlu0 13
        %2829 = vperm.xlu0 %2828, %v2601
        %v2830 = vpop.permute.xlu0 %2829
        %2832 = vset.pattern.permute.xlu0 13
        %2833 = vperm.xlu0 %2832, %v2602
        %v2834 = vpop.permute.xlu0 %2833
        %2836 = vset.pattern.permute.xlu0 13
        %2837 = vperm.xlu0 %2836, %v2603
        %v2838 = vpop.permute.xlu0 %2837
        %2840 = vset.pattern.permute.xlu0 13
        %2841 = vperm.xlu0 %2840, %v2604
        %v2842 = vpop.permute.xlu0 %2841
        %2844 = vset.pattern.permute.xlu0 13
        %2845 = vperm.xlu0 %2844, %v2605
        %v2846 = vpop.permute.xlu0 %2845
        %2848 = vset.pattern.permute.xlu0 13
        %2849 = vperm.xlu0 %2848, %v2606
        %v2850 = vpop.permute.xlu0 %2849
        %v2852 = vmul.f32 %v2826, %v646
        %v2853 = vmul.f32 %v2830, %v646
        %v2854 = vmul.f32 %v2834, %v646
        %v2855 = vmul.f32 %v2838, %v646
        %v2856 = vmul.f32 %v2842, %v646
        %v2857 = vmul.f32 %v2846, %v646
        %v2858 = vmul.f32 %v2850, %v646
        %v2859 = vadd.f32 %v2817, %v2852
        %v2860 = vadd.f32 %v2818, %v2853
        %v2861 = vadd.f32 %v2819, %v2854
        %v2862 = vadd.f32 %v2820, %v2855
        %v2863 = vadd.f32 %v2821, %v2856
        %v2864 = vadd.f32 %v2822, %v2857
        %v2865 = vadd.f32 %v2823, %v2858
        %v2866 = vld [vmem:[%s2129] sm:$0x7f]
        %v2867 = vld [vmem:[%s2129 + $0x8] sm:$0x7f]
        %v2868 = vld [vmem:[%s2129 + $0x10] sm:$0x7f]
        %v2869 = vld [vmem:[%s2129 + $0x18] sm:$0x7f]
        %v2870 = vld [vmem:[%s2129 + $0x20] sm:$0x7f]
        %v2871 = vld [vmem:[%s2129 + $0x28] sm:$0x7f]
        %v2872 = vld [vmem:[%s2129 + $0x30] sm:$0x7f]
        %2874 = vset.pattern.permute.xlu0 2
        %2875 = vperm.xlu0 %2874, %v2866
        %v2876 = vpop.permute.xlu0 %2875
        %2879 = vset.pattern.permute.xlu0 2
        %2880 = vperm.xlu0 %2879, %v2867
        %v2881 = vpop.permute.xlu0 %2880
        %2884 = vset.pattern.permute.xlu0 2
        %2885 = vperm.xlu0 %2884, %v2868
        %v2886 = vpop.permute.xlu0 %2885
        %2889 = vset.pattern.permute.xlu0 2
        %2890 = vperm.xlu0 %2889, %v2869
        %v2891 = vpop.permute.xlu0 %2890
        %2894 = vset.pattern.permute.xlu0 2
        %2895 = vperm.xlu0 %2894, %v2870
        %v2896 = vpop.permute.xlu0 %2895
        %2899 = vset.pattern.permute.xlu0 2
        %2900 = vperm.xlu0 %2899, %v2871
        %v2901 = vpop.permute.xlu0 %2900
        %2904 = vset.pattern.permute.xlu0 2
        %2905 = vperm.xlu0 %2904, %v2872
        %v2906 = vpop.permute.xlu0 %2905
        %v2908 = vmul.f32 %v2876, %v692
        %v2909 = vmul.f32 %v2881, %v692
        %v2910 = vmul.f32 %v2886, %v692
        %v2911 = vmul.f32 %v2891, %v692
        %v2912 = vmul.f32 %v2896, %v692
        %v2913 = vmul.f32 %v2901, %v692
        %v2914 = vmul.f32 %v2906, %v692
        %v2915 = vadd.f32 %v2859, %v2908
        %v2916 = vadd.f32 %v2860, %v2909
        %v2917 = vadd.f32 %v2861, %v2910
        %v2918 = vadd.f32 %v2862, %v2911
        %v2919 = vadd.f32 %v2863, %v2912
        %v2920 = vadd.f32 %v2864, %v2913
        %v2921 = vadd.f32 %v2865, %v2914
        %2922 = vset.pattern.permute.xlu0 3
        %2923 = vperm.xlu0 %2922, %v2866
        %v2924 = vpop.permute.xlu0 %2923
        %2926 = vset.pattern.permute.xlu0 3
        %2927 = vperm.xlu0 %2926, %v2867
        %v2928 = vpop.permute.xlu0 %2927
        %2930 = vset.pattern.permute.xlu0 3
        %2931 = vperm.xlu0 %2930, %v2868
        %v2932 = vpop.permute.xlu0 %2931
        %2934 = vset.pattern.permute.xlu0 3
        %2935 = vperm.xlu0 %2934, %v2869
        %v2936 = vpop.permute.xlu0 %2935
        %2938 = vset.pattern.permute.xlu0 3
        %2939 = vperm.xlu0 %2938, %v2870
        %v2940 = vpop.permute.xlu0 %2939
        %2942 = vset.pattern.permute.xlu0 3
        %2943 = vperm.xlu0 %2942, %v2871
        %v2944 = vpop.permute.xlu0 %2943
        %2946 = vset.pattern.permute.xlu0 3
        %2947 = vperm.xlu0 %2946, %v2872
        %v2948 = vpop.permute.xlu0 %2947
        %v2950 = vmul.f32 %v2924, %v738
        %v2951 = vmul.f32 %v2928, %v738
        %v2952 = vmul.f32 %v2932, %v738
        %v2953 = vmul.f32 %v2936, %v738
        %v2954 = vmul.f32 %v2940, %v738
        %v2955 = vmul.f32 %v2944, %v738
        %v2956 = vmul.f32 %v2948, %v738
        %v2957 = vadd.f32 %v2915, %v2950
        %v2958 = vadd.f32 %v2916, %v2951
        %v2959 = vadd.f32 %v2917, %v2952
        %v2960 = vadd.f32 %v2918, %v2953
        %v2961 = vadd.f32 %v2919, %v2954
        %v2962 = vadd.f32 %v2920, %v2955
        %v2963 = vadd.f32 %v2921, %v2956
        %v2964 = vld [vmem:[%s2129 + $0x1] sm:$0x7f]
        %v2965 = vld [vmem:[%s2129 + $0x9] sm:$0x7f]
        %v2966 = vld [vmem:[%s2129 + $0x11] sm:$0x7f]
        %v2967 = vld [vmem:[%s2129 + $0x19] sm:$0x7f]
        %v2968 = vld [vmem:[%s2129 + $0x21] sm:$0x7f]
        %v2969 = vld [vmem:[%s2129 + $0x29] sm:$0x7f]
        %v2970 = vld [vmem:[%s2129 + $0x31] sm:$0x7f]
        %2972 = vset.pattern.permute.xlu0 0
        %2973 = vperm.xlu0 %2972, %v2964
        %v2974 = vpop.permute.xlu0 %2973
        %2977 = vset.pattern.permute.xlu0 0
        %2978 = vperm.xlu0 %2977, %v2965
        %v2979 = vpop.permute.xlu0 %2978
        %2982 = vset.pattern.permute.xlu0 0
        %2983 = vperm.xlu0 %2982, %v2966
        %v2984 = vpop.permute.xlu0 %2983
        %2987 = vset.pattern.permute.xlu0 0
        %2988 = vperm.xlu0 %2987, %v2967
        %v2989 = vpop.permute.xlu0 %2988
        %2992 = vset.pattern.permute.xlu0 0
        %2993 = vperm.xlu0 %2992, %v2968
        %v2994 = vpop.permute.xlu0 %2993
        %2997 = vset.pattern.permute.xlu0 0
        %2998 = vperm.xlu0 %2997, %v2969
        %v2999 = vpop.permute.xlu0 %2998
        %3002 = vset.pattern.permute.xlu0 0
        %3003 = vperm.xlu0 %3002, %v2970
        %v3004 = vpop.permute.xlu0 %3003
        %v3006 = vmul.f32 %v2974, %v784
        %v3007 = vmul.f32 %v2979, %v784
        %v3008 = vmul.f32 %v2984, %v784
        %v3009 = vmul.f32 %v2989, %v784
        %v3010 = vmul.f32 %v2994, %v784
        %v3011 = vmul.f32 %v2999, %v784
        %v3012 = vmul.f32 %v3004, %v784
        %v3013 = vadd.f32 %v2957, %v3006
        %v3014 = vadd.f32 %v2958, %v3007
        %v3015 = vadd.f32 %v2959, %v3008
        %v3016 = vadd.f32 %v2960, %v3009
        %v3017 = vadd.f32 %v2961, %v3010
        %v3018 = vadd.f32 %v2962, %v3011
        %v3019 = vadd.f32 %v2963, %v3012
        %3020 = vset.pattern.permute.xlu0 1
        %3021 = vperm.xlu0 %3020, %v2964
        %v3022 = vpop.permute.xlu0 %3021
        %3024 = vset.pattern.permute.xlu0 1
        %3025 = vperm.xlu0 %3024, %v2965
        %v3026 = vpop.permute.xlu0 %3025
        %3028 = vset.pattern.permute.xlu0 1
        %3029 = vperm.xlu0 %3028, %v2966
        %v3030 = vpop.permute.xlu0 %3029
        %3032 = vset.pattern.permute.xlu0 1
        %3033 = vperm.xlu0 %3032, %v2967
        %v3034 = vpop.permute.xlu0 %3033
        %3036 = vset.pattern.permute.xlu0 1
        %3037 = vperm.xlu0 %3036, %v2968
        %v3038 = vpop.permute.xlu0 %3037
        %3040 = vset.pattern.permute.xlu0 1
        %3041 = vperm.xlu0 %3040, %v2969
        %v3042 = vpop.permute.xlu0 %3041
        %3044 = vset.pattern.permute.xlu0 1
        %3045 = vperm.xlu0 %3044, %v2970
        %v3046 = vpop.permute.xlu0 %3045
        %v3048 = vmul.f32 %v3022, %v830
        %v3049 = vmul.f32 %v3026, %v830
        %v3050 = vmul.f32 %v3030, %v830
        %v3051 = vmul.f32 %v3034, %v830
        %v3052 = vmul.f32 %v3038, %v830
        %v3053 = vmul.f32 %v3042, %v830
        %v3054 = vmul.f32 %v3046, %v830
        %v3055 = vadd.f32 %v3013, %v3048
        %v3056 = vadd.f32 %v3014, %v3049
        %v3057 = vadd.f32 %v3015, %v3050
        %v3058 = vadd.f32 %v3016, %v3051
        %v3059 = vadd.f32 %v3017, %v3052
        %v3060 = vadd.f32 %v3018, %v3053
        %v3061 = vadd.f32 %v3019, %v3054
        %3062 = vset.pattern.permute.xlu0 6
        %3063 = vperm.xlu0 %3062, %v2866
        %v3064 = vpop.permute.xlu0 %3063
        %3066 = vset.pattern.permute.xlu0 6
        %3067 = vperm.xlu0 %3066, %v2867
        %v3068 = vpop.permute.xlu0 %3067
        %3070 = vset.pattern.permute.xlu0 6
        %3071 = vperm.xlu0 %3070, %v2868
        %v3072 = vpop.permute.xlu0 %3071
        %3074 = vset.pattern.permute.xlu0 6
        %3075 = vperm.xlu0 %3074, %v2869
        %v3076 = vpop.permute.xlu0 %3075
        %3078 = vset.pattern.permute.xlu0 6
        %3079 = vperm.xlu0 %3078, %v2870
        %v3080 = vpop.permute.xlu0 %3079
        %3082 = vset.pattern.permute.xlu0 6
        %3083 = vperm.xlu0 %3082, %v2871
        %v3084 = vpop.permute.xlu0 %3083
        %3086 = vset.pattern.permute.xlu0 6
        %3087 = vperm.xlu0 %3086, %v2872
        %v3088 = vpop.permute.xlu0 %3087
        %v3090 = vmul.f32 %v3064, %v876
        %v3091 = vmul.f32 %v3068, %v876
        %v3092 = vmul.f32 %v3072, %v876
        %v3093 = vmul.f32 %v3076, %v876
        %v3094 = vmul.f32 %v3080, %v876
        %v3095 = vmul.f32 %v3084, %v876
        %v3096 = vmul.f32 %v3088, %v876
        %v3097 = vadd.f32 %v3055, %v3090
        %v3098 = vadd.f32 %v3056, %v3091
        %v3099 = vadd.f32 %v3057, %v3092
        %v3100 = vadd.f32 %v3058, %v3093
        %v3101 = vadd.f32 %v3059, %v3094
        %v3102 = vadd.f32 %v3060, %v3095
        %v3103 = vadd.f32 %v3061, %v3096
        %3104 = vset.pattern.permute.xlu0 7
        %3105 = vperm.xlu0 %3104, %v2866
        %v3106 = vpop.permute.xlu0 %3105
        %3108 = vset.pattern.permute.xlu0 7
        %3109 = vperm.xlu0 %3108, %v2867
        %v3110 = vpop.permute.xlu0 %3109
        %3112 = vset.pattern.permute.xlu0 7
        %3113 = vperm.xlu0 %3112, %v2868
        %v3114 = vpop.permute.xlu0 %3113
        %3116 = vset.pattern.permute.xlu0 7
        %3117 = vperm.xlu0 %3116, %v2869
        %v3118 = vpop.permute.xlu0 %3117
        %3120 = vset.pattern.permute.xlu0 7
        %3121 = vperm.xlu0 %3120, %v2870
        %v3122 = vpop.permute.xlu0 %3121
        %3124 = vset.pattern.permute.xlu0 7
        %3125 = vperm.xlu0 %3124, %v2871
        %v3126 = vpop.permute.xlu0 %3125
        %3128 = vset.pattern.permute.xlu0 7
        %3129 = vperm.xlu0 %3128, %v2872
        %v3130 = vpop.permute.xlu0 %3129
        %v3132 = vmul.f32 %v3106, %v922
        %v3133 = vmul.f32 %v3110, %v922
        %v3134 = vmul.f32 %v3114, %v922
        %v3135 = vmul.f32 %v3118, %v922
        %v3136 = vmul.f32 %v3122, %v922
        %v3137 = vmul.f32 %v3126, %v922
        %v3138 = vmul.f32 %v3130, %v922
        %v3139 = vadd.f32 %v3097, %v3132
        %v3140 = vadd.f32 %v3098, %v3133
        %v3141 = vadd.f32 %v3099, %v3134
        %v3142 = vadd.f32 %v3100, %v3135
        %v3143 = vadd.f32 %v3101, %v3136
        %v3144 = vadd.f32 %v3102, %v3137
        %v3145 = vadd.f32 %v3103, %v3138
        %3146 = vset.pattern.permute.xlu0 4
        %3147 = vperm.xlu0 %3146, %v2964
        %v3148 = vpop.permute.xlu0 %3147
        %3150 = vset.pattern.permute.xlu0 4
        %3151 = vperm.xlu0 %3150, %v2965
        %v3152 = vpop.permute.xlu0 %3151
        %3154 = vset.pattern.permute.xlu0 4
        %3155 = vperm.xlu0 %3154, %v2966
        %v3156 = vpop.permute.xlu0 %3155
        %3158 = vset.pattern.permute.xlu0 4
        %3159 = vperm.xlu0 %3158, %v2967
        %v3160 = vpop.permute.xlu0 %3159
        %3162 = vset.pattern.permute.xlu0 4
        %3163 = vperm.xlu0 %3162, %v2968
        %v3164 = vpop.permute.xlu0 %3163
        %3166 = vset.pattern.permute.xlu0 4
        %3167 = vperm.xlu0 %3166, %v2969
        %v3168 = vpop.permute.xlu0 %3167
        %3170 = vset.pattern.permute.xlu0 4
        %3171 = vperm.xlu0 %3170, %v2970
        %v3172 = vpop.permute.xlu0 %3171
        %v3174 = vmul.f32 %v3148, %v968
        %v3175 = vmul.f32 %v3152, %v968
        %v3176 = vmul.f32 %v3156, %v968
        %v3177 = vmul.f32 %v3160, %v968
        %v3178 = vmul.f32 %v3164, %v968
        %v3179 = vmul.f32 %v3168, %v968
        %v3180 = vmul.f32 %v3172, %v968
        %v3181 = vadd.f32 %v3139, %v3174
        %v3182 = vadd.f32 %v3140, %v3175
        %v3183 = vadd.f32 %v3141, %v3176
        %v3184 = vadd.f32 %v3142, %v3177
        %v3185 = vadd.f32 %v3143, %v3178
        %v3186 = vadd.f32 %v3144, %v3179
        %v3187 = vadd.f32 %v3145, %v3180
        %3188 = vset.pattern.permute.xlu0 5
        %3189 = vperm.xlu0 %3188, %v2964
        %v3190 = vpop.permute.xlu0 %3189
        %3192 = vset.pattern.permute.xlu0 5
        %3193 = vperm.xlu0 %3192, %v2965
        %v3194 = vpop.permute.xlu0 %3193
        %3196 = vset.pattern.permute.xlu0 5
        %3197 = vperm.xlu0 %3196, %v2966
        %v3198 = vpop.permute.xlu0 %3197
        %3200 = vset.pattern.permute.xlu0 5
        %3201 = vperm.xlu0 %3200, %v2967
        %v3202 = vpop.permute.xlu0 %3201
        %3204 = vset.pattern.permute.xlu0 5
        %3205 = vperm.xlu0 %3204, %v2968
        %v3206 = vpop.permute.xlu0 %3205
        %3208 = vset.pattern.permute.xlu0 5
        %3209 = vperm.xlu0 %3208, %v2969
        %v3210 = vpop.permute.xlu0 %3209
        %3212 = vset.pattern.permute.xlu0 5
        %3213 = vperm.xlu0 %3212, %v2970
        %v3214 = vpop.permute.xlu0 %3213
        %v3216 = vmul.f32 %v3190, %v1014
        %v3217 = vmul.f32 %v3194, %v1014
        %v3218 = vmul.f32 %v3198, %v1014
        %v3219 = vmul.f32 %v3202, %v1014
        %v3220 = vmul.f32 %v3206, %v1014
        %v3221 = vmul.f32 %v3210, %v1014
        %v3222 = vmul.f32 %v3214, %v1014
        %v3223 = vadd.f32 %v3181, %v3216
        %v3224 = vadd.f32 %v3182, %v3217
        %v3225 = vadd.f32 %v3183, %v3218
        %v3226 = vadd.f32 %v3184, %v3219
        %v3227 = vadd.f32 %v3185, %v3220
        %v3228 = vadd.f32 %v3186, %v3221
        %v3229 = vadd.f32 %v3187, %v3222
        %v3230 = vadd.f32 %v3223, %v1033
        %v3231 = vadd.f32 %v3224, %v1033
        %v3232 = vadd.f32 %v3225, %v1033
        %v3233 = vadd.f32 %v3226, %v1033
        %v3234 = vadd.f32 %v3227, %v1033
        %v3235 = vadd.f32 %v3228, %v1033
        %v3236 = vadd.f32 %v3229, %v1033
        %v3237 = vmax.f32 %v3230, 0.0
        %v3238 = vmax.f32 %v3231, 0.0
        %v3239 = vmax.f32 %v3232, 0.0
        %v3240 = vmax.f32 %v3233, 0.0
        %v3241 = vmax.f32 %v3234, 0.0
        %v3242 = vmax.f32 %v3235, 0.0
        %v3243 = vmax.f32 %v3236, 0.0
        %s3244 = scalar_lea.vmem [#allocation2], 168
        %3245 = vst.msk [vmem:[%s3244] sm:$0x7f] %vm1049, %v3237
        %3246 = vst.msk [vmem:[%s3244 + $0x8] sm:$0x7f] %vm1049, %v3238
        %3247 = vst.msk [vmem:[%s3244 + $0x10] sm:$0x7f] %vm1049, %v3239
        %3248 = vst.msk [vmem:[%s3244 + $0x18] sm:$0x7f] %vm1049, %v3240
        %3249 = vst.msk [vmem:[%s3244 + $0x20] sm:$0x7f] %vm1049, %v3241
        %3250 = vst.msk [vmem:[%s3244 + $0x28] sm:$0x7f] %vm1049, %v3242
        %3251 = vst.msk [vmem:[%s3244 + $0x30] sm:$0x7f] %vm1049, %v3243
        %v3252 = vld [vmem:[#allocation2] sm:$0x3f]
        %v3253 = vld [vmem:[#allocation2 + $0x8] sm:$0x3f]
        %v3254 = vld [vmem:[#allocation2 + $0x10] sm:$0x3f]
        %v3255 = vld [vmem:[#allocation2 + $0x18] sm:$0x3f]
        %v3256 = vld [vmem:[#allocation2 + $0x20] sm:$0x3f]
        %v3257 = vld [vmem:[#allocation2 + $0x28] sm:$0x3f]
        %vm3258 = vcmask 95232
        %3259 = vst.msk [vmem:[#allocation3] sm:$0x3f] %vm3258, %v3252
        %3260 = vst.msk [vmem:[#allocation3 + $0x10] sm:$0x3f] %vm3258, %v3253
        %3261 = vst.msk [vmem:[#allocation3 + $0x20] sm:$0x3f] %vm3258, %v3254
        %3262 = vst.msk [vmem:[#allocation3 + $0x30] sm:$0x3f] %vm3258, %v3255
        %3263 = vst.msk [vmem:[#allocation3 + $0x40] sm:$0x3f] %vm3258, %v3256
        %3264 = vst.msk [vmem:[#allocation3 + $0x50] sm:$0x3f] %vm3258, %v3257
        %v3265 = vld [vmem:[%s1771] sm:$0x3f]
        %v3266 = vld [vmem:[%s1771 + $0x8] sm:$0x3f]
        %v3267 = vld [vmem:[%s1771 + $0x10] sm:$0x3f]
        %v3268 = vld [vmem:[%s1771 + $0x18] sm:$0x3f]
        %v3269 = vld [vmem:[%s1771 + $0x20] sm:$0x3f]
        %v3270 = vld [vmem:[%s1771 + $0x28] sm:$0x3f]
        %3277 = vrot.lane.b32.xlu0 %v3265, 12
        %v3278 = vpop.permute.xlu0 %3277
        %3279 = vrot.lane.b32.xlu0 %v3266, 12
        %v3280 = vpop.permute.xlu0 %3279
        %3281 = vrot.lane.b32.xlu0 %v3267, 12
        %v3282 = vpop.permute.xlu0 %3281
        %3283 = vrot.lane.b32.xlu0 %v3268, 12
        %v3284 = vpop.permute.xlu0 %3283
        %3285 = vrot.lane.b32.xlu0 %v3269, 12
        %v3286 = vpop.permute.xlu0 %3285
        %3287 = vrot.lane.b32.xlu0 %v3270, 12
        %v3288 = vpop.permute.xlu0 %3287
        %vm3295 = vcmask 193632
        %3296 = vst.msk [vmem:[#allocation3] sm:$0x3f] %vm3295, %v3278
        %3297 = vst.msk [vmem:[#allocation3 + $0x10] sm:$0x3f] %vm3295, %v3280
        %3298 = vst.msk [vmem:[#allocation3 + $0x20] sm:$0x3f] %vm3295, %v3282
        %3299 = vst.msk [vmem:[#allocation3 + $0x30] sm:$0x3f] %vm3295, %v3284
        %3300 = vst.msk [vmem:[#allocation3 + $0x40] sm:$0x3f] %vm3295, %v3286
        %3301 = vst.msk [vmem:[#allocation3 + $0x50] sm:$0x3f] %vm3295, %v3288
        %v3302 = vld [vmem:[#allocation2 + $0x1] sm:$0x3f]
        %v3303 = vld [vmem:[#allocation2 + $0x9] sm:$0x3f]
        %v3304 = vld [vmem:[#allocation2 + $0x11] sm:$0x3f]
        %v3305 = vld [vmem:[#allocation2 + $0x19] sm:$0x3f]
        %v3306 = vld [vmem:[#allocation2 + $0x21] sm:$0x3f]
        %v3307 = vld [vmem:[#allocation2 + $0x29] sm:$0x3f]
        %3314 = vrot.lane.b32.xlu0 %v3302, 24
        %v3315 = vpop.permute.xlu0 %3314
        %3316 = vrot.lane.b32.xlu0 %v3303, 24
        %v3317 = vpop.permute.xlu0 %3316
        %3318 = vrot.lane.b32.xlu0 %v3304, 24
        %v3319 = vpop.permute.xlu0 %3318
        %3320 = vrot.lane.b32.xlu0 %v3305, 24
        %v3321 = vpop.permute.xlu0 %3320
        %3322 = vrot.lane.b32.xlu0 %v3306, 24
        %v3323 = vpop.permute.xlu0 %3322
        %3324 = vrot.lane.b32.xlu0 %v3307, 24
        %v3325 = vpop.permute.xlu0 %3324
        %vm3332 = vcmask 292032
        %3333 = vst.msk [vmem:[#allocation3] sm:$0x3f] %vm3332, %v3315
        %3334 = vst.msk [vmem:[#allocation3 + $0x10] sm:$0x3f] %vm3332, %v3317
        %3335 = vst.msk [vmem:[#allocation3 + $0x20] sm:$0x3f] %vm3332, %v3319
        %3336 = vst.msk [vmem:[#allocation3 + $0x30] sm:$0x3f] %vm3332, %v3321
        %3337 = vst.msk [vmem:[#allocation3 + $0x40] sm:$0x3f] %vm3332, %v3323
        %3338 = vst.msk [vmem:[#allocation3 + $0x50] sm:$0x3f] %vm3332, %v3325
        %v3339 = vld [vmem:[%s1771 + $0x1] sm:$0x3f]
        %v3340 = vld [vmem:[%s1771 + $0x9] sm:$0x3f]
        %v3341 = vld [vmem:[%s1771 + $0x11] sm:$0x3f]
        %v3342 = vld [vmem:[%s1771 + $0x19] sm:$0x3f]
        %v3343 = vld [vmem:[%s1771 + $0x21] sm:$0x3f]
        %v3344 = vld [vmem:[%s1771 + $0x29] sm:$0x3f]
        %3351 = vrot.lane.b32.xlu0 %v3339, 36
        %v3352 = vpop.permute.xlu0 %3351
        %3353 = vrot.lane.b32.xlu0 %v3340, 36
        %v3354 = vpop.permute.xlu0 %3353
        %3355 = vrot.lane.b32.xlu0 %v3341, 36
        %v3356 = vpop.permute.xlu0 %3355
        %3357 = vrot.lane.b32.xlu0 %v3342, 36
        %v3358 = vpop.permute.xlu0 %3357
        %3359 = vrot.lane.b32.xlu0 %v3343, 36
        %v3360 = vpop.permute.xlu0 %3359
        %3361 = vrot.lane.b32.xlu0 %v3344, 36
        %v3362 = vpop.permute.xlu0 %3361
        %vm3369 = vcmask 390432
        %3370 = vst.msk [vmem:[#allocation3] sm:$0x3f] %vm3369, %v3352
        %3371 = vst.msk [vmem:[#allocation3 + $0x10] sm:$0x3f] %vm3369, %v3354
        %3372 = vst.msk [vmem:[#allocation3 + $0x20] sm:$0x3f] %vm3369, %v3356
        %3373 = vst.msk [vmem:[#allocation3 + $0x30] sm:$0x3f] %vm3369, %v3358
        %3374 = vst.msk [vmem:[#allocation3 + $0x40] sm:$0x3f] %vm3369, %v3360
        %3375 = vst.msk [vmem:[#allocation3 + $0x50] sm:$0x3f] %vm3369, %v3362
        %v3376 = vld [vmem:[%s2494] sm:$0x3f]
        %v3377 = vld [vmem:[%s2494 + $0x8] sm:$0x3f]
        %v3378 = vld [vmem:[%s2494 + $0x10] sm:$0x3f]
        %v3379 = vld [vmem:[%s2494 + $0x18] sm:$0x3f]
        %v3380 = vld [vmem:[%s2494 + $0x20] sm:$0x3f]
        %v3381 = vld [vmem:[%s2494 + $0x28] sm:$0x3f]
        %3388 = vrot.lane.b32.xlu0 %v3376, 48
        %v3389 = vpop.permute.xlu0 %3388
        %3390 = vrot.lane.b32.xlu0 %v3377, 48
        %v3391 = vpop.permute.xlu0 %3390
        %3392 = vrot.lane.b32.xlu0 %v3378, 48
        %v3393 = vpop.permute.xlu0 %3392
        %3394 = vrot.lane.b32.xlu0 %v3379, 48
        %v3395 = vpop.permute.xlu0 %3394
        %3396 = vrot.lane.b32.xlu0 %v3380, 48
        %v3397 = vpop.permute.xlu0 %3396
        %3398 = vrot.lane.b32.xlu0 %v3381, 48
        %v3399 = vpop.permute.xlu0 %3398
        %vm3406 = vcmask 488832
        %3407 = vst.msk [vmem:[#allocation3] sm:$0x3f] %vm3406, %v3389
        %3408 = vst.msk [vmem:[#allocation3 + $0x10] sm:$0x3f] %vm3406, %v3391
        %3409 = vst.msk [vmem:[#allocation3 + $0x20] sm:$0x3f] %vm3406, %v3393
        %3410 = vst.msk [vmem:[#allocation3 + $0x30] sm:$0x3f] %vm3406, %v3395
        %3411 = vst.msk [vmem:[#allocation3 + $0x40] sm:$0x3f] %vm3406, %v3397
        %3412 = vst.msk [vmem:[#allocation3 + $0x50] sm:$0x3f] %vm3406, %v3399
        %v3413 = vld [vmem:[%s3244] sm:$0x3f]
        %v3414 = vld [vmem:[%s3244 + $0x8] sm:$0x3f]
        %v3415 = vld [vmem:[%s3244 + $0x10] sm:$0x3f]
        %v3416 = vld [vmem:[%s3244 + $0x18] sm:$0x3f]
        %v3417 = vld [vmem:[%s3244 + $0x20] sm:$0x3f]
        %v3418 = vld [vmem:[%s3244 + $0x28] sm:$0x3f]
        %3425 = vrot.lane.b32.xlu0 %v3413, 60
        %v3426 = vpop.permute.xlu0 %3425
        %3427 = vrot.lane.b32.xlu0 %v3414, 60
        %v3428 = vpop.permute.xlu0 %3427
        %3429 = vrot.lane.b32.xlu0 %v3415, 60
        %v3430 = vpop.permute.xlu0 %3429
        %3431 = vrot.lane.b32.xlu0 %v3416, 60
        %v3432 = vpop.permute.xlu0 %3431
        %3433 = vrot.lane.b32.xlu0 %v3417, 60
        %v3434 = vpop.permute.xlu0 %3433
        %3435 = vrot.lane.b32.xlu0 %v3418, 60
        %v3436 = vpop.permute.xlu0 %3435
        %vm3443 = vcmask 587232
        %3444 = vst.msk [vmem:[#allocation3] sm:$0x3f] %vm3443, %v3426
        %3445 = vst.msk [vmem:[#allocation3 + $0x10] sm:$0x3f] %vm3443, %v3428
        %3446 = vst.msk [vmem:[#allocation3 + $0x20] sm:$0x3f] %vm3443, %v3430
        %3447 = vst.msk [vmem:[#allocation3 + $0x30] sm:$0x3f] %vm3443, %v3432
        %3448 = vst.msk [vmem:[#allocation3 + $0x40] sm:$0x3f] %vm3443, %v3434
        %3449 = vst.msk [vmem:[#allocation3 + $0x50] sm:$0x3f] %vm3443, %v3436
        %v3450 = vld [vmem:[%s2494 + $0x1] sm:$0x3f]
        %v3451 = vld [vmem:[%s2494 + $0x9] sm:$0x3f]
        %v3452 = vld [vmem:[%s2494 + $0x11] sm:$0x3f]
        %v3453 = vld [vmem:[%s2494 + $0x19] sm:$0x3f]
        %v3454 = vld [vmem:[%s2494 + $0x21] sm:$0x3f]
        %v3455 = vld [vmem:[%s2494 + $0x29] sm:$0x3f]
        %3462 = vrot.lane.b32.xlu0 %v3450, 72
        %v3463 = vpop.permute.xlu0 %3462
        %3464 = vrot.lane.b32.xlu0 %v3451, 72
        %v3465 = vpop.permute.xlu0 %3464
        %3466 = vrot.lane.b32.xlu0 %v3452, 72
        %v3467 = vpop.permute.xlu0 %3466
        %3468 = vrot.lane.b32.xlu0 %v3453, 72
        %v3469 = vpop.permute.xlu0 %3468
        %3470 = vrot.lane.b32.xlu0 %v3454, 72
        %v3471 = vpop.permute.xlu0 %3470
        %3472 = vrot.lane.b32.xlu0 %v3455, 72
        %v3473 = vpop.permute.xlu0 %3472
        %vm3480 = vcmask 685632
        %3481 = vst.msk [vmem:[#allocation3] sm:$0x3f] %vm3480, %v3463
        %3482 = vst.msk [vmem:[#allocation3 + $0x10] sm:$0x3f] %vm3480, %v3465
        %3483 = vst.msk [vmem:[#allocation3 + $0x20] sm:$0x3f] %vm3480, %v3467
        %3484 = vst.msk [vmem:[#allocation3 + $0x30] sm:$0x3f] %vm3480, %v3469
        %3485 = vst.msk [vmem:[#allocation3 + $0x40] sm:$0x3f] %vm3480, %v3471
        %3486 = vst.msk [vmem:[#allocation3 + $0x50] sm:$0x3f] %vm3480, %v3473
        %v3487 = vld [vmem:[%s3244 + $0x1] sm:$0x3f]
        %v3488 = vld [vmem:[%s3244 + $0x9] sm:$0x3f]
        %v3489 = vld [vmem:[%s3244 + $0x11] sm:$0x3f]
        %v3490 = vld [vmem:[%s3244 + $0x19] sm:$0x3f]
        %v3491 = vld [vmem:[%s3244 + $0x21] sm:$0x3f]
        %v3492 = vld [vmem:[%s3244 + $0x29] sm:$0x3f]
        %3499 = vrot.lane.b32.xlu0 %v3487, 84
        %v3500 = vpop.permute.xlu0 %3499
        %3501 = vrot.lane.b32.xlu0 %v3488, 84
        %v3502 = vpop.permute.xlu0 %3501
        %3503 = vrot.lane.b32.xlu0 %v3489, 84
        %v3504 = vpop.permute.xlu0 %3503
        %3505 = vrot.lane.b32.xlu0 %v3490, 84
        %v3506 = vpop.permute.xlu0 %3505
        %3507 = vrot.lane.b32.xlu0 %v3491, 84
        %v3508 = vpop.permute.xlu0 %3507
        %3509 = vrot.lane.b32.xlu0 %v3492, 84
        %v3510 = vpop.permute.xlu0 %3509
        %vm3517 = vcmask 784032
        %3518 = vst.msk [vmem:[#allocation3] sm:$0x3f] %vm3517, %v3500
        %3519 = vst.msk [vmem:[#allocation3 + $0x10] sm:$0x3f] %vm3517, %v3502
        %3520 = vst.msk [vmem:[#allocation3 + $0x20] sm:$0x3f] %vm3517, %v3504
        %3521 = vst.msk [vmem:[#allocation3 + $0x30] sm:$0x3f] %vm3517, %v3506
        %3522 = vst.msk [vmem:[#allocation3 + $0x40] sm:$0x3f] %vm3517, %v3508
        %3523 = vst.msk [vmem:[#allocation3 + $0x50] sm:$0x3f] %vm3517, %v3510
        %s3524 = scalar_lea.vmem [#allocation2], 8
        %v3525 = vld [vmem:[%s3524] sm:$0x3f]
        %v3526 = vld [vmem:[%s3524 + $0x8] sm:$0x3f]
        %v3527 = vld [vmem:[%s3524 + $0x10] sm:$0x3f]
        %v3528 = vld [vmem:[%s3524 + $0x18] sm:$0x3f]
        %v3529 = vld [vmem:[%s3524 + $0x20] sm:$0x3f]
        %v3530 = vld [vmem:[%s3524 + $0x28] sm:$0x3f]
        %3537 = vrot.lane.b32.xlu0 %v3525, 96
        %v3538 = vpop.permute.xlu0 %3537
        %3539 = vrot.lane.b32.xlu0 %v3526, 96
        %v3540 = vpop.permute.xlu0 %3539
        %3541 = vrot.lane.b32.xlu0 %v3527, 96
        %v3542 = vpop.permute.xlu0 %3541
        %3543 = vrot.lane.b32.xlu0 %v3528, 96
        %v3544 = vpop.permute.xlu0 %3543
        %3545 = vrot.lane.b32.xlu0 %v3529, 96
        %v3546 = vpop.permute.xlu0 %3545
        %3547 = vrot.lane.b32.xlu0 %v3530, 96
        %v3548 = vpop.permute.xlu0 %3547
        %vm3555 = vcmask 882432
        %3556 = vst.msk [vmem:[#allocation3] sm:$0x3f] %vm3555, %v3538
        %3557 = vst.msk [vmem:[#allocation3 + $0x10] sm:$0x3f] %vm3555, %v3540
        %3558 = vst.msk [vmem:[#allocation3 + $0x20] sm:$0x3f] %vm3555, %v3542
        %3559 = vst.msk [vmem:[#allocation3 + $0x30] sm:$0x3f] %vm3555, %v3544
        %3560 = vst.msk [vmem:[#allocation3 + $0x40] sm:$0x3f] %vm3555, %v3546
        %3561 = vst.msk [vmem:[#allocation3 + $0x50] sm:$0x3f] %vm3555, %v3548
        %s3562 = scalar_lea.vmem [#allocation2], 64
        %v3563 = vld [vmem:[%s3562] sm:$0x3f]
        %v3564 = vld [vmem:[%s3562 + $0x8] sm:$0x3f]
        %v3565 = vld [vmem:[%s3562 + $0x10] sm:$0x3f]
        %v3566 = vld [vmem:[%s3562 + $0x18] sm:$0x3f]
        %v3567 = vld [vmem:[%s3562 + $0x20] sm:$0x3f]
        %v3568 = vld [vmem:[%s3562 + $0x28] sm:$0x3f]
        %3575 = vrot.lane.b32.xlu0 %v3563, 108
        %v3576 = vpop.permute.xlu0 %3575
        %3577 = vrot.lane.b32.xlu0 %v3564, 108
        %v3578 = vpop.permute.xlu0 %3577
        %3579 = vrot.lane.b32.xlu0 %v3565, 108
        %v3580 = vpop.permute.xlu0 %3579
        %3581 = vrot.lane.b32.xlu0 %v3566, 108
        %v3582 = vpop.permute.xlu0 %3581
        %3583 = vrot.lane.b32.xlu0 %v3567, 108
        %v3584 = vpop.permute.xlu0 %3583
        %3585 = vrot.lane.b32.xlu0 %v3568, 108
        %v3586 = vpop.permute.xlu0 %3585
        %vm3593 = vcmask 980832
        %3594 = vst.msk [vmem:[#allocation3] sm:$0x3f] %vm3593, %v3576
        %3595 = vst.msk [vmem:[#allocation3 + $0x10] sm:$0x3f] %vm3593, %v3578
        %3596 = vst.msk [vmem:[#allocation3 + $0x20] sm:$0x3f] %vm3593, %v3580
        %3597 = vst.msk [vmem:[#allocation3 + $0x30] sm:$0x3f] %vm3593, %v3582
        %3598 = vst.msk [vmem:[#allocation3 + $0x40] sm:$0x3f] %vm3593, %v3584
        %3599 = vst.msk [vmem:[#allocation3 + $0x50] sm:$0x3f] %vm3593, %v3586
        %v3600 = vld [vmem:[%s3524 + $0x1] sm:$0x3f]
        %v3601 = vld [vmem:[%s3524 + $0x9] sm:$0x3f]
        %v3602 = vld [vmem:[%s3524 + $0x11] sm:$0x3f]
        %v3603 = vld [vmem:[%s3524 + $0x19] sm:$0x3f]
        %v3604 = vld [vmem:[%s3524 + $0x21] sm:$0x3f]
        %v3605 = vld [vmem:[%s3524 + $0x29] sm:$0x3f]
        %3612 = vrot.lane.b32.xlu0 %v3600, 120
        %v3613 = vpop.permute.xlu0 %3612
        %3614 = vrot.lane.b32.xlu0 %v3601, 120
        %v3615 = vpop.permute.xlu0 %3614
        %3616 = vrot.lane.b32.xlu0 %v3602, 120
        %v3617 = vpop.permute.xlu0 %3616
        %3618 = vrot.lane.b32.xlu0 %v3603, 120
        %v3619 = vpop.permute.xlu0 %3618
        %3620 = vrot.lane.b32.xlu0 %v3604, 120
        %v3621 = vpop.permute.xlu0 %3620
        %3622 = vrot.lane.b32.xlu0 %v3605, 120
        %v3623 = vpop.permute.xlu0 %3622
        %vm3630 = vcmask 1046464
        %3631 = vst.msk [vmem:[#allocation3] sm:$0x3f] %vm3630, %v3613
        %vm3632 = vcmask 29696
        %3633 = vst.msk [vmem:[#allocation3 + $0x8] sm:$0x3f] %vm3632, %v3613
        %3634 = vst.msk [vmem:[#allocation3 + $0x10] sm:$0x3f] %vm3630, %v3615
        %3635 = vst.msk [vmem:[#allocation3 + $0x18] sm:$0x3f] %vm3632, %v3615
        %3636 = vst.msk [vmem:[#allocation3 + $0x20] sm:$0x3f] %vm3630, %v3617
        %3637 = vst.msk [vmem:[#allocation3 + $0x28] sm:$0x3f] %vm3632, %v3617
        %3638 = vst.msk [vmem:[#allocation3 + $0x30] sm:$0x3f] %vm3630, %v3619
        %3639 = vst.msk [vmem:[#allocation3 + $0x38] sm:$0x3f] %vm3632, %v3619
        %3640 = vst.msk [vmem:[#allocation3 + $0x40] sm:$0x3f] %vm3630, %v3621
        %3641 = vst.msk [vmem:[#allocation3 + $0x48] sm:$0x3f] %vm3632, %v3621
        %3642 = vst.msk [vmem:[#allocation3 + $0x50] sm:$0x3f] %vm3630, %v3623
        %3643 = vst.msk [vmem:[#allocation3 + $0x58] sm:$0x3f] %vm3632, %v3623
        %v3644 = vld [vmem:[%s3562 + $0x1] sm:$0x3f]
        %v3645 = vld [vmem:[%s3562 + $0x9] sm:$0x3f]
        %v3646 = vld [vmem:[%s3562 + $0x11] sm:$0x3f]
        %v3647 = vld [vmem:[%s3562 + $0x19] sm:$0x3f]
        %v3648 = vld [vmem:[%s3562 + $0x21] sm:$0x3f]
        %v3649 = vld [vmem:[%s3562 + $0x29] sm:$0x3f]
        %3656 = vrot.lane.b32.xlu0 %v3644, 4
        %v3657 = vpop.permute.xlu0 %3656
        %3658 = vrot.lane.b32.xlu0 %v3645, 4
        %v3659 = vpop.permute.xlu0 %3658
        %3660 = vrot.lane.b32.xlu0 %v3646, 4
        %v3661 = vpop.permute.xlu0 %3660
        %3662 = vrot.lane.b32.xlu0 %v3647, 4
        %v3663 = vpop.permute.xlu0 %3662
        %3664 = vrot.lane.b32.xlu0 %v3648, 4
        %v3665 = vpop.permute.xlu0 %3664
        %3666 = vrot.lane.b32.xlu0 %v3649, 4
        %v3667 = vpop.permute.xlu0 %3666
        %vm3674 = vcmask 128032
        %3675 = vst.msk [vmem:[#allocation3 + $0x8] sm:$0x3f] %vm3674, %v3657
        %3676 = vst.msk [vmem:[#allocation3 + $0x18] sm:$0x3f] %vm3674, %v3659
        %3677 = vst.msk [vmem:[#allocation3 + $0x28] sm:$0x3f] %vm3674, %v3661
        %3678 = vst.msk [vmem:[#allocation3 + $0x38] sm:$0x3f] %vm3674, %v3663
        %3679 = vst.msk [vmem:[#allocation3 + $0x48] sm:$0x3f] %vm3674, %v3665
        %3680 = vst.msk [vmem:[#allocation3 + $0x58] sm:$0x3f] %vm3674, %v3667
        %s3681 = scalar_lea.vmem [#allocation2], 120
        %v3682 = vld [vmem:[%s3681] sm:$0x3f]
        %v3683 = vld [vmem:[%s3681 + $0x8] sm:$0x3f]
        %v3684 = vld [vmem:[%s3681 + $0x10] sm:$0x3f]
        %v3685 = vld [vmem:[%s3681 + $0x18] sm:$0x3f]
        %v3686 = vld [vmem:[%s3681 + $0x20] sm:$0x3f]
        %v3687 = vld [vmem:[%s3681 + $0x28] sm:$0x3f]
        %3694 = vrot.lane.b32.xlu0 %v3682, 16
        %v3695 = vpop.permute.xlu0 %3694
        %3696 = vrot.lane.b32.xlu0 %v3683, 16
        %v3697 = vpop.permute.xlu0 %3696
        %3698 = vrot.lane.b32.xlu0 %v3684, 16
        %v3699 = vpop.permute.xlu0 %3698
        %3700 = vrot.lane.b32.xlu0 %v3685, 16
        %v3701 = vpop.permute.xlu0 %3700
        %3702 = vrot.lane.b32.xlu0 %v3686, 16
        %v3703 = vpop.permute.xlu0 %3702
        %3704 = vrot.lane.b32.xlu0 %v3687, 16
        %v3705 = vpop.permute.xlu0 %3704
        %vm3712 = vcmask 226432
        %3713 = vst.msk [vmem:[#allocation3 + $0x8] sm:$0x3f] %vm3712, %v3695
        %3714 = vst.msk [vmem:[#allocation3 + $0x18] sm:$0x3f] %vm3712, %v3697
        %3715 = vst.msk [vmem:[#allocation3 + $0x28] sm:$0x3f] %vm3712, %v3699
        %3716 = vst.msk [vmem:[#allocation3 + $0x38] sm:$0x3f] %vm3712, %v3701
        %3717 = vst.msk [vmem:[#allocation3 + $0x48] sm:$0x3f] %vm3712, %v3703
        %3718 = vst.msk [vmem:[#allocation3 + $0x58] sm:$0x3f] %vm3712, %v3705
        %s3719 = scalar_lea.vmem [#allocation2], 176
        %v3720 = vld [vmem:[%s3719] sm:$0x3f]
        %v3721 = vld [vmem:[%s3719 + $0x8] sm:$0x3f]
        %v3722 = vld [vmem:[%s3719 + $0x10] sm:$0x3f]
        %v3723 = vld [vmem:[%s3719 + $0x18] sm:$0x3f]
        %v3724 = vld [vmem:[%s3719 + $0x20] sm:$0x3f]
        %v3725 = vld [vmem:[%s3719 + $0x28] sm:$0x3f]
        %3732 = vrot.lane.b32.xlu0 %v3720, 28
        %v3733 = vpop.permute.xlu0 %3732
        %3734 = vrot.lane.b32.xlu0 %v3721, 28
        %v3735 = vpop.permute.xlu0 %3734
        %3736 = vrot.lane.b32.xlu0 %v3722, 28
        %v3737 = vpop.permute.xlu0 %3736
        %3738 = vrot.lane.b32.xlu0 %v3723, 28
        %v3739 = vpop.permute.xlu0 %3738
        %3740 = vrot.lane.b32.xlu0 %v3724, 28
        %v3741 = vpop.permute.xlu0 %3740
        %3742 = vrot.lane.b32.xlu0 %v3725, 28
        %v3743 = vpop.permute.xlu0 %3742
        %vm3750 = vcmask 324832
        %3751 = vst.msk [vmem:[#allocation3 + $0x8] sm:$0x3f] %vm3750, %v3733
        %3752 = vst.msk [vmem:[#allocation3 + $0x18] sm:$0x3f] %vm3750, %v3735
        %3753 = vst.msk [vmem:[#allocation3 + $0x28] sm:$0x3f] %vm3750, %v3737
        %3754 = vst.msk [vmem:[#allocation3 + $0x38] sm:$0x3f] %vm3750, %v3739
        %3755 = vst.msk [vmem:[#allocation3 + $0x48] sm:$0x3f] %vm3750, %v3741
        %3756 = vst.msk [vmem:[#allocation3 + $0x58] sm:$0x3f] %vm3750, %v3743
        %v3757 = vld [vmem:[%s3681 + $0x1] sm:$0x3f]
        %v3758 = vld [vmem:[%s3681 + $0x9] sm:$0x3f]
        %v3759 = vld [vmem:[%s3681 + $0x11] sm:$0x3f]
        %v3760 = vld [vmem:[%s3681 + $0x19] sm:$0x3f]
        %v3761 = vld [vmem:[%s3681 + $0x21] sm:$0x3f]
        %v3762 = vld [vmem:[%s3681 + $0x29] sm:$0x3f]
        %3769 = vrot.lane.b32.xlu0 %v3757, 40
        %v3770 = vpop.permute.xlu0 %3769
        %3771 = vrot.lane.b32.xlu0 %v3758, 40
        %v3772 = vpop.permute.xlu0 %3771
        %3773 = vrot.lane.b32.xlu0 %v3759, 40
        %v3774 = vpop.permute.xlu0 %3773
        %3775 = vrot.lane.b32.xlu0 %v3760, 40
        %v3776 = vpop.permute.xlu0 %3775
        %3777 = vrot.lane.b32.xlu0 %v3761, 40
        %v3778 = vpop.permute.xlu0 %3777
        %3779 = vrot.lane.b32.xlu0 %v3762, 40
        %v3780 = vpop.permute.xlu0 %3779
        %vm3787 = vcmask 423232
        %3788 = vst.msk [vmem:[#allocation3 + $0x8] sm:$0x3f] %vm3787, %v3770
        %3789 = vst.msk [vmem:[#allocation3 + $0x18] sm:$0x3f] %vm3787, %v3772
        %3790 = vst.msk [vmem:[#allocation3 + $0x28] sm:$0x3f] %vm3787, %v3774
        %3791 = vst.msk [vmem:[#allocation3 + $0x38] sm:$0x3f] %vm3787, %v3776
        %3792 = vst.msk [vmem:[#allocation3 + $0x48] sm:$0x3f] %vm3787, %v3778
        %3793 = vst.msk [vmem:[#allocation3 + $0x58] sm:$0x3f] %vm3787, %v3780
        %v3794 = vld [vmem:[%s3719 + $0x1] sm:$0x3f]
        %v3795 = vld [vmem:[%s3719 + $0x9] sm:$0x3f]
        %v3796 = vld [vmem:[%s3719 + $0x11] sm:$0x3f]
        %v3797 = vld [vmem:[%s3719 + $0x19] sm:$0x3f]
        %v3798 = vld [vmem:[%s3719 + $0x21] sm:$0x3f]
        %v3799 = vld [vmem:[%s3719 + $0x29] sm:$0x3f]
        %3806 = vrot.lane.b32.xlu0 %v3794, 52
        %v3807 = vpop.permute.xlu0 %3806
        %3808 = vrot.lane.b32.xlu0 %v3795, 52
        %v3809 = vpop.permute.xlu0 %3808
        %3810 = vrot.lane.b32.xlu0 %v3796, 52
        %v3811 = vpop.permute.xlu0 %3810
        %3812 = vrot.lane.b32.xlu0 %v3797, 52
        %v3813 = vpop.permute.xlu0 %3812
        %3814 = vrot.lane.b32.xlu0 %v3798, 52
        %v3815 = vpop.permute.xlu0 %3814
        %3816 = vrot.lane.b32.xlu0 %v3799, 52
        %v3817 = vpop.permute.xlu0 %3816
        %vm3824 = vcmask 521632
        %3825 = vst.msk [vmem:[#allocation3 + $0x8] sm:$0x3f] %vm3824, %v3807
        %3826 = vst.msk [vmem:[#allocation3 + $0x18] sm:$0x3f] %vm3824, %v3809
        %3827 = vst.msk [vmem:[#allocation3 + $0x28] sm:$0x3f] %vm3824, %v3811
        %3828 = vst.msk [vmem:[#allocation3 + $0x38] sm:$0x3f] %vm3824, %v3813
        %3829 = vst.msk [vmem:[#allocation3 + $0x48] sm:$0x3f] %vm3824, %v3815
        %3830 = vst.msk [vmem:[#allocation3 + $0x58] sm:$0x3f] %vm3824, %v3817
        %v3831 = vld [vmem:[%s3] sm:$0xff]
        %v3832 = vld [vmem:[%s3 + $0x8] sm:$0xff]
        %v3833 = vld [vmem:[%s3 + $0x10] sm:$0xff]
        %v3834 = vld [vmem:[%s3 + $0x18] sm:$0xff]
        %v3835 = vld [vmem:[%s3 + $0x20] sm:$0xff]
        %v3836 = vld [vmem:[%s3 + $0x28] sm:$0xff]
        %v3837 = vld [vmem:[%s3 + $0x30] sm:$0xff]
        %v3838 = vld [vmem:[%s3 + $0x38] sm:$0xff]
        %v3839 = vld [vmem:[%s3 + $0x40] sm:$0xff]
        %v3840 = vld [vmem:[%s3 + $0x48] sm:$0xff]
        %v3841 = vld [vmem:[%s3 + $0x50] sm:$0xff]
        %v3842 = vld [vmem:[%s3 + $0x58] sm:$0xff]
        %v3843 = vld [vmem:[%s3 + $0x60] sm:$0xff]
        %v3844 = vld [vmem:[%s3 + $0x68] sm:$0xff]
        %v3845 = vld [vmem:[%s3 + $0x70] sm:$0xff]
        %v3846 = vld [vmem:[%s3 + $0x78] sm:$0xff]
        %v3847 = vld [vmem:[%s3 + $0x80] sm:$0xff]
        %v3848 = vld [vmem:[%s3 + $0x88] sm:$0xff]
        %v3849 = vld [vmem:[%s3 + $0x90] sm:$0xff]
        %v3850 = vld [vmem:[%s3 + $0x98] sm:$0xff]
        %v3851 = vld [vmem:[%s3 + $0xa0] sm:$0xff]
        %v3852 = vld [vmem:[%s3 + $0xa8] sm:$0xff]
        %v3853 = vld [vmem:[%s3 + $0xb0] sm:$0xff]
        %v3854 = vld [vmem:[%s3 + $0xb8] sm:$0xff]
        %v3855 = vld [vmem:[%s4] sm:$0x1]
        %v3856 = vld [vmem:[#allocation3] sm:$0x3f]
        %v3857 = vld [vmem:[#allocation3 + $0x8] sm:$0x3f]
        %v3859 = vlaneseq
        %v3860 = vshrl.u32 %v3859, 7
        %v3861 = vsub.s32 0, %v3860
        %v3862 = vrot.slane %v3855, %v3861
        %vm3864 = vcmask 523264
        %v3866 = vsel %vm3864, %v3857, 0
        %3868 = vmatprep.subr.mxu0 0.0
        %3869 = vmatpush1.msra.mxu0 %v3831
        %3870 = vmatprep.subr.mxu0 0.0
        %3871 = vmatpush1.msra.mxu0 %v3832
        %3872 = vmatprep.subr.mxu0 0.0
        %3873 = vmatpush1.msra.mxu0 %v3833
        %3874 = vmatprep.subr.mxu0 0.0
        %3875 = vmatpush1.msra.mxu0 %v3834
        %3876 = vmatprep.subr.mxu0 0.0
        %3877 = vmatpush1.msra.mxu0 %v3835
        %3878 = vmatprep.subr.mxu0 0.0
        %3879 = vmatpush1.msra.mxu0 %v3836
        %3880 = vmatprep.subr.mxu0 0.0
        %3881 = vmatpush1.msra.mxu0 %v3837
        %3882 = vmatprep.subr.mxu0 0.0
        %3883 = vmatpush1.msra.mxu0 %v3838
        %3884 = vmatprep.subr.mxu0 0.0
        %3885 = vmatpush1.msra.mxu0 %v3839
        %3886 = vmatprep.subr.mxu0 0.0
        %3887 = vmatpush1.msra.mxu0 %v3840
        %3888 = vmatprep.subr.mxu0 0.0
        %3889 = vmatpush1.msra.mxu0 %v3841
        %3890 = vmatprep.subr.mxu0 0.0
        %3891 = vmatpush1.msra.mxu0 %v3842
        %3892 = vmatprep.subr.mxu0 0.0
        %3893 = vmatpush1.msra.mxu0 %v3843
        %3894 = vmatprep.subr.mxu0 0.0
        %3895 = vmatpush1.msra.mxu0 %v3844
        %3896 = vmatprep.subr.mxu0 0.0
        %3897 = vmatpush1.msra.mxu0 %v3845
        %3898 = vmatprep.subr.mxu0 0.0
        %3899 = vmatpush1.msra.mxu0 %v3846
        %3900 = vmatprep.subr.mxu0 0.0
        %3901 = vmatpush1.msra.mxu0 %v3847
        %3902 = vmatprep.subr.mxu0 0.0
        %3903 = vmatpush1.msra.mxu0 %v3848
        %3904 = vmatprep.subr.mxu0 0.0
        %3905 = vmatpush1.msra.mxu0 %v3849
        %3906 = vmatprep.subr.mxu0 0.0
        %3907 = vmatpush1.msra.mxu0 %v3850
        %3908 = vmatprep.subr.mxu0 0.0
        %3909 = vmatpush1.msra.mxu0 %v3851
        %3910 = vmatprep.subr.mxu0 0.0
        %3911 = vmatpush1.msra.mxu0 %v3852
        %3912 = vmatprep.subr.mxu0 0.0
        %3913 = vmatpush1.msra.mxu0 %v3853
        %3914 = vmatprep.subr.mxu0 0.0
        %3915 = vmatpush1.msra.mxu0 %v3854
        %3916 = vmatprep.subr.mxu0 0.0
        %3917 = vmatpush1.msra.mxu0 0.0
        %3918 = vmatprep.subr.mxu0 0.0
        %3919 = vmatpush1.msra.mxu0 0.0
        %3920 = vmatprep.subr.mxu0 0.0
        %3921 = vmatpush1.msra.mxu0 0.0
        %3922 = vmatprep.subr.mxu0 0.0
        %3923 = vmatpush1.msra.mxu0 0.0
        %3924 = vmatprep.subr.mxu0 0.0
        %3925 = vmatpush1.msra.mxu0 0.0
        %3926 = vmatprep.subr.mxu0 0.0
        %3927 = vmatpush1.msra.mxu0 0.0
        %3928 = vmatprep.subr.mxu0 0.0
        %3929 = vmatpush1.msra.mxu0 0.0
        %3930 = vmatprep.subr.mxu0 0.0
        %3931 = vmatpush1.msra.mxu0 0.0
        %3932 = vmatprep.mubr.f32.mxu0 %v3866
        %3933 = vmatmul.mubr.f32.gmra.mrb[0].mxu0 %v3856
        %v3934 = vpop.f32.mrb[0].mxu0
        %v3935 = vadd.f32 %v3862, %v3934
        %v3936 = vpop.f32.mrb[0].mxu0
        %3937 = vdwg.mxu0
        %v3938 = vlaneseq
        %vm3939 = vcmp.ge.s32.totalorder %v3938, 0
        %vm3940 = vcmp.lt.s32.totalorder %v3938, 24
        %vm3941 = vmand %vm3939, %vm3940
        %3942 = vst.msk [vmem:[#allocation4] sm:$0x1] %vm3941, %v3935
        %v3945 = vunpack.c.l.s4 1966171168
        %v3946 = vunpack.c.0.s8 %v3945
        %v3947 = vlaneseq
        %v3948 = vshrl.u32 %v3947, 7
        %v3949 = vsub.s32 %v3946, %v3948
        %v3950 = vrot.slane %v3935, %v3949
        %v3951 = vcombine.high %v3950, %v3950
        %v3953 = vunpack.c.l.s4 1966171168
        %v3954 = vunpack.c.0.s8 %v3953
        %v3955 = vlaneseq
        %v3956 = vshrl.u32 %v3955, 7
        %v3957 = vsub.s32 %v3954, %v3956
        %v3958 = vrot.slane %v3950, %v3957
        %v3960 = vunpack.c.l.s4 1966171168
        %v3961 = vunpack.c.0.s8 %v3960
        %v3962 = vlaneseq
        %v3963 = vshrl.u32 %v3962, 7
        %v3964 = vsub.s32 %v3961, %v3963
        %v3965 = vrot.slane %v3951, %v3964
        %3966 = vrot.lane.b32.xlu0 %v3965, 24
        %v3967 = vpop.permute.xlu0 %3966
        %vm3969 = vcmp.ge.s32.totalorder %v3938, 24
        %vm3970 = vcmp.lt.s32.totalorder %v3938, 48
        %vm3971 = vmand %vm3969, %vm3970
        %3972 = vst.msk [vmem:[#allocation4] sm:$0x1] %vm3971, %v3967
        %v3973 = vcombine.high %v3958, %v3958
        %3974 = vrot.lane.b32.xlu0 %v3973, 48
        %v3975 = vpop.permute.xlu0 %3974
        %vm3977 = vcmp.ge.s32.totalorder %v3938, 48
        %vm3978 = vcmp.lt.s32.totalorder %v3938, 72
        %vm3979 = vmand %vm3977, %vm3978
        %3980 = vst.msk [vmem:[#allocation4] sm:$0x1] %vm3979, %v3975
        %v3981 = vcombine.high %v3965, %v3965
        %3982 = vrot.lane.b32.xlu0 %v3981, 72
        %v3983 = vpop.permute.xlu0 %3982
        %vm3985 = vcmp.ge.s32.totalorder %v3938, 72
        %vm3986 = vcmp.lt.s32.totalorder %v3938, 96
        %vm3987 = vmand %vm3985, %vm3986
        %3988 = vst.msk [vmem:[#allocation4] sm:$0x1] %vm3987, %v3983
        %v3989 = vcombine.high %v3935, %v3935
        %v3991 = vunpack.c.l.s4 1966171168
        %v3992 = vunpack.c.0.s8 %v3991
        %v3993 = vlaneseq
        %v3994 = vshrl.u32 %v3993, 7
        %v3995 = vsub.s32 %v3992, %v3994
        %v3996 = vrot.slane %v3989, %v3995
        %v3998 = vunpack.c.l.s4 1966171168
        %v3999 = vunpack.c.0.s8 %v3998
        %v4000 = vlaneseq
        %v4001 = vshrl.u32 %v4000, 7
        %v4002 = vsub.s32 %v3999, %v4001
        %v4003 = vrot.slane %v3996, %v4002
        %4004 = vrot.lane.b32.xlu0 %v4003, 96
        %v4005 = vpop.permute.xlu0 %4004
        %vm4007 = vcmp.ge.s32.totalorder %v3938, 96
        %vm4008 = vcmp.lt.s32.totalorder %v3938, 120
        %vm4009 = vmand %vm4007, %vm4008
        %4010 = vst.msk [vmem:[#allocation4] sm:$0x1] %vm4009, %v4005
        %v4011 = vcombine.high %v3996, %v3996
        %v4013 = vunpack.c.l.s4 1966171168
        %v4014 = vunpack.c.0.s8 %v4013
        %v4015 = vlaneseq
        %v4016 = vshrl.u32 %v4015, 7
        %v4017 = vsub.s32 %v4014, %v4016
        %v4018 = vrot.slane %v4011, %v4017
        %4019 = vrot.lane.b32.xlu0 %v4018, 120
        %v4020 = vpop.permute.xlu0 %4019
        %v4021 = vrot.slane %v4020, 7
        %vm4022 = vcmask 982016
        %v4023 = vsel %vm4022, %v4021, %v4020
        %vm4025 = vcmp.ge.s32.totalorder %v3938, 120
        %vm4026 = vcmp.lt.s32.totalorder %v3938, 144
        %vm4027 = vmand %vm4025, %vm4026
        %4028 = vst.msk [vmem:[#allocation4] sm:$0x3] %vm4027, %v4023
        %s4029 = scalar_lea.vmem [#allocation3], 16
        %v4030 = vld [vmem:[%s4029] sm:$0x3f]
        %v4031 = vld [vmem:[%s4029 + $0x8] sm:$0x3f]
        %v4033 = vsel %vm3864, %v4031, 0
        %4035 = vmatprep.subr.mxu0 0.0
        %4036 = vmatpush1.msra.mxu0 %v3831
        %4037 = vmatprep.subr.mxu0 0.0
        %4038 = vmatpush1.msra.mxu0 %v3832
        %4039 = vmatprep.subr.mxu0 0.0
        %4040 = vmatpush1.msra.mxu0 %v3833
        %4041 = vmatprep.subr.mxu0 0.0
        %4042 = vmatpush1.msra.mxu0 %v3834
        %4043 = vmatprep.subr.mxu0 0.0
        %4044 = vmatpush1.msra.mxu0 %v3835
        %4045 = vmatprep.subr.mxu0 0.0
        %4046 = vmatpush1.msra.mxu0 %v3836
        %4047 = vmatprep.subr.mxu0 0.0
        %4048 = vmatpush1.msra.mxu0 %v3837
        %4049 = vmatprep.subr.mxu0 0.0
        %4050 = vmatpush1.msra.mxu0 %v3838
        %4051 = vmatprep.subr.mxu0 0.0
        %4052 = vmatpush1.msra.mxu0 %v3839
        %4053 = vmatprep.subr.mxu0 0.0
        %4054 = vmatpush1.msra.mxu0 %v3840
        %4055 = vmatprep.subr.mxu0 0.0
        %4056 = vmatpush1.msra.mxu0 %v3841
        %4057 = vmatprep.subr.mxu0 0.0
        %4058 = vmatpush1.msra.mxu0 %v3842
        %4059 = vmatprep.subr.mxu0 0.0
        %4060 = vmatpush1.msra.mxu0 %v3843
        %4061 = vmatprep.subr.mxu0 0.0
        %4062 = vmatpush1.msra.mxu0 %v3844
        %4063 = vmatprep.subr.mxu0 0.0
        %4064 = vmatpush1.msra.mxu0 %v3845
        %4065 = vmatprep.subr.mxu0 0.0
        %4066 = vmatpush1.msra.mxu0 %v3846
        %4067 = vmatprep.subr.mxu0 0.0
        %4068 = vmatpush1.msra.mxu0 %v3847
        %4069 = vmatprep.subr.mxu0 0.0
        %4070 = vmatpush1.msra.mxu0 %v3848
        %4071 = vmatprep.subr.mxu0 0.0
        %4072 = vmatpush1.msra.mxu0 %v3849
        %4073 = vmatprep.subr.mxu0 0.0
        %4074 = vmatpush1.msra.mxu0 %v3850
        %4075 = vmatprep.subr.mxu0 0.0
        %4076 = vmatpush1.msra.mxu0 %v3851
        %4077 = vmatprep.subr.mxu0 0.0
        %4078 = vmatpush1.msra.mxu0 %v3852
        %4079 = vmatprep.subr.mxu0 0.0
        %4080 = vmatpush1.msra.mxu0 %v3853
        %4081 = vmatprep.subr.mxu0 0.0
        %4082 = vmatpush1.msra.mxu0 %v3854
        %4083 = vmatprep.subr.mxu0 0.0
        %4084 = vmatpush1.msra.mxu0 0.0
        %4085 = vmatprep.subr.mxu0 0.0
        %4086 = vmatpush1.msra.mxu0 0.0
        %4087 = vmatprep.subr.mxu0 0.0
        %4088 = vmatpush1.msra.mxu0 0.0
        %4089 = vmatprep.subr.mxu0 0.0
        %4090 = vmatpush1.msra.mxu0 0.0
        %4091 = vmatprep.subr.mxu0 0.0
        %4092 = vmatpush1.msra.mxu0 0.0
        %4093 = vmatprep.subr.mxu0 0.0
        %4094 = vmatpush1.msra.mxu0 0.0
        %4095 = vmatprep.subr.mxu0 0.0
        %4096 = vmatpush1.msra.mxu0 0.0
        %4097 = vmatprep.subr.mxu0 0.0
        %4098 = vmatpush1.msra.mxu0 0.0
        %4099 = vmatprep.mubr.f32.mxu0 %v4033
        %4100 = vmatmul.mubr.f32.gmra.mrb[0].mxu0 %v4030
        %v4101 = vpop.f32.mrb[0].mxu0
        %v4102 = vadd.f32 %v3862, %v4101
        %v4103 = vpop.f32.mrb[0].mxu0
        %4104 = vdwg.mxu0
        %v4107 = vunpack.c.l.s4 1966171168
        %v4108 = vunpack.c.0.s8 %v4107
        %v4109 = vlaneseq
        %v4110 = vshrl.u32 %v4109, 7
        %v4111 = vsub.s32 %v4108, %v4110
        %v4112 = vrot.slane %v4102, %v4111
        %v4114 = vunpack.c.l.s4 1966171168
        %v4115 = vunpack.c.0.s8 %v4114
        %v4116 = vlaneseq
        %v4117 = vshrl.u32 %v4116, 7
        %v4118 = vsub.s32 %v4115, %v4117
        %v4119 = vrot.slane %v4112, %v4118
        %4120 = vrot.lane.b32.xlu0 %v4119, 16
        %v4121 = vpop.permute.xlu0 %4120
        %vm4123 = vcmp.ge.s32.totalorder %v3938, 16
        %vm4124 = vcmp.lt.s32.totalorder %v3938, 40
        %vm4125 = vmand %vm4123, %vm4124
        %4126 = vst.msk [vmem:[#allocation4 + $0x1] sm:$0x1] %vm4125, %v4121
        %v4127 = vcombine.high %v4112, %v4112
        %v4129 = vunpack.c.l.s4 1966171168
        %v4130 = vunpack.c.0.s8 %v4129
        %v4131 = vlaneseq
        %v4132 = vshrl.u32 %v4131, 7
        %v4133 = vsub.s32 %v4130, %v4132
        %v4134 = vrot.slane %v4127, %v4133
        %4135 = vrot.lane.b32.xlu0 %v4134, 40
        %v4136 = vpop.permute.xlu0 %4135
        %vm4138 = vcmp.ge.s32.totalorder %v3938, 40
        %vm4139 = vcmp.lt.s32.totalorder %v3938, 64
        %vm4140 = vmand %vm4138, %vm4139
        %4141 = vst.msk [vmem:[#allocation4 + $0x1] sm:$0x1] %vm4140, %v4136
        %v4142 = vcombine.high %v4119, %v4119
        %4143 = vrot.lane.b32.xlu0 %v4142, 64
        %v4144 = vpop.permute.xlu0 %4143
        %vm4146 = vcmp.ge.s32.totalorder %v3938, 64
        %vm4147 = vcmp.lt.s32.totalorder %v3938, 88
        %vm4148 = vmand %vm4146, %vm4147
        %4149 = vst.msk [vmem:[#allocation4 + $0x1] sm:$0x1] %vm4148, %v4144
        %v4150 = vcombine.high %v4134, %v4134
        %4151 = vrot.lane.b32.xlu0 %v4150, 88
        %v4152 = vpop.permute.xlu0 %4151
        %vm4154 = vcmp.ge.s32.totalorder %v3938, 88
        %vm4155 = vcmp.lt.s32.totalorder %v3938, 112
        %vm4156 = vmand %vm4154, %vm4155
        %4157 = vst.msk [vmem:[#allocation4 + $0x1] sm:$0x1] %vm4156, %v4152
        %v4158 = vcombine.high %v4102, %v4102
        %v4160 = vunpack.c.l.s4 1966171168
        %v4161 = vunpack.c.0.s8 %v4160
        %v4162 = vlaneseq
        %v4163 = vshrl.u32 %v4162, 7
        %v4164 = vsub.s32 %v4161, %v4163
        %v4165 = vrot.slane %v4158, %v4164
        %v4167 = vunpack.c.l.s4 1966171168
        %v4168 = vunpack.c.0.s8 %v4167
        %v4169 = vlaneseq
        %v4170 = vshrl.u32 %v4169, 7
        %v4171 = vsub.s32 %v4168, %v4170
        %v4172 = vrot.slane %v4165, %v4171
        %4173 = vrot.lane.b32.xlu0 %v4172, 112
        %v4174 = vpop.permute.xlu0 %4173
        %v4175 = vrot.slane %v4174, 7
        %vm4176 = vcmask 916480
        %v4177 = vsel %vm4176, %v4175, %v4174
        %vm4179 = vcmp.ge.s32.totalorder %v3938, 112
        %vm4180 = vcmp.lt.s32.totalorder %v3938, 136
        %vm4181 = vmand %vm4179, %vm4180
        %4182 = vst.msk [vmem:[#allocation4 + $0x1] sm:$0x3] %vm4181, %v4177
        %v4183 = vcombine.high %v4165, %v4165
        %v4185 = vunpack.c.l.s4 1966171168
        %v4186 = vunpack.c.0.s8 %v4185
        %v4187 = vlaneseq
        %v4188 = vshrl.u32 %v4187, 7
        %v4189 = vsub.s32 %v4186, %v4188
        %v4190 = vrot.slane %v4183, %v4189
        %4191 = vrot.lane.b32.xlu0 %v4190, 8
        %v4192 = vpop.permute.xlu0 %4191
        %vm4194 = vcmp.ge.s32.totalorder %v3938, 8
        %vm4195 = vcmp.lt.s32.totalorder %v3938, 32
        %vm4196 = vmand %vm4194, %vm4195
        %4197 = vst.msk [vmem:[#allocation4 + $0x2] sm:$0x1] %vm4196, %v4192
        %s4198 = scalar_lea.vmem [#allocation3], 32
        %v4199 = vld [vmem:[%s4198] sm:$0x3f]
        %v4200 = vld [vmem:[%s4198 + $0x8] sm:$0x3f]
        %v4202 = vsel %vm3864, %v4200, 0
        %4204 = vmatprep.subr.mxu0 0.0
        %4205 = vmatpush1.msra.mxu0 %v3831
        %4206 = vmatprep.subr.mxu0 0.0
        %4207 = vmatpush1.msra.mxu0 %v3832
        %4208 = vmatprep.subr.mxu0 0.0
        %4209 = vmatpush1.msra.mxu0 %v3833
        %4210 = vmatprep.subr.mxu0 0.0
        %4211 = vmatpush1.msra.mxu0 %v3834
        %4212 = vmatprep.subr.mxu0 0.0
        %4213 = vmatpush1.msra.mxu0 %v3835
        %4214 = vmatprep.subr.mxu0 0.0
        %4215 = vmatpush1.msra.mxu0 %v3836
        %4216 = vmatprep.subr.mxu0 0.0
        %4217 = vmatpush1.msra.mxu0 %v3837
        %4218 = vmatprep.subr.mxu0 0.0
        %4219 = vmatpush1.msra.mxu0 %v3838
        %4220 = vmatprep.subr.mxu0 0.0
        %4221 = vmatpush1.msra.mxu0 %v3839
        %4222 = vmatprep.subr.mxu0 0.0
        %4223 = vmatpush1.msra.mxu0 %v3840
        %4224 = vmatprep.subr.mxu0 0.0
        %4225 = vmatpush1.msra.mxu0 %v3841
        %4226 = vmatprep.subr.mxu0 0.0
        %4227 = vmatpush1.msra.mxu0 %v3842
        %4228 = vmatprep.subr.mxu0 0.0
        %4229 = vmatpush1.msra.mxu0 %v3843
        %4230 = vmatprep.subr.mxu0 0.0
        %4231 = vmatpush1.msra.mxu0 %v3844
        %4232 = vmatprep.subr.mxu0 0.0
        %4233 = vmatpush1.msra.mxu0 %v3845
        %4234 = vmatprep.subr.mxu0 0.0
        %4235 = vmatpush1.msra.mxu0 %v3846
        %4236 = vmatprep.subr.mxu0 0.0
        %4237 = vmatpush1.msra.mxu0 %v3847
        %4238 = vmatprep.subr.mxu0 0.0
        %4239 = vmatpush1.msra.mxu0 %v3848
        %4240 = vmatprep.subr.mxu0 0.0
        %4241 = vmatpush1.msra.mxu0 %v3849
        %4242 = vmatprep.subr.mxu0 0.0
        %4243 = vmatpush1.msra.mxu0 %v3850
        %4244 = vmatprep.subr.mxu0 0.0
        %4245 = vmatpush1.msra.mxu0 %v3851
        %4246 = vmatprep.subr.mxu0 0.0
        %4247 = vmatpush1.msra.mxu0 %v3852
        %4248 = vmatprep.subr.mxu0 0.0
        %4249 = vmatpush1.msra.mxu0 %v3853
        %4250 = vmatprep.subr.mxu0 0.0
        %4251 = vmatpush1.msra.mxu0 %v3854
        %4252 = vmatprep.subr.mxu0 0.0
        %4253 = vmatpush1.msra.mxu0 0.0
        %4254 = vmatprep.subr.mxu0 0.0
        %4255 = vmatpush1.msra.mxu0 0.0
        %4256 = vmatprep.subr.mxu0 0.0
        %4257 = vmatpush1.msra.mxu0 0.0
        %4258 = vmatprep.subr.mxu0 0.0
        %4259 = vmatpush1.msra.mxu0 0.0
        %4260 = vmatprep.subr.mxu0 0.0
        %4261 = vmatpush1.msra.mxu0 0.0
        %4262 = vmatprep.subr.mxu0 0.0
        %4263 = vmatpush1.msra.mxu0 0.0
        %4264 = vmatprep.subr.mxu0 0.0
        %4265 = vmatpush1.msra.mxu0 0.0
        %4266 = vmatprep.subr.mxu0 0.0
        %4267 = vmatpush1.msra.mxu0 0.0
        %4268 = vmatprep.mubr.f32.mxu0 %v4202
        %4269 = vmatmul.mubr.f32.gmra.mrb[0].mxu0 %v4199
        %v4270 = vpop.f32.mrb[0].mxu0
        %v4271 = vadd.f32 %v3862, %v4270
        %v4272 = vpop.f32.mrb[0].mxu0
        %4273 = vdwg.mxu0
        %v4276 = vunpack.c.l.s4 1966171168
        %v4277 = vunpack.c.0.s8 %v4276
        %v4278 = vlaneseq
        %v4279 = vshrl.u32 %v4278, 7
        %v4280 = vsub.s32 %v4277, %v4279
        %v4281 = vrot.slane %v4271, %v4280
        %v4283 = vunpack.c.l.s4 1966171168
        %v4284 = vunpack.c.0.s8 %v4283
        %v4285 = vlaneseq
        %v4286 = vshrl.u32 %v4285, 7
        %v4287 = vsub.s32 %v4284, %v4286
        %v4288 = vrot.slane %v4281, %v4287
        %4289 = vrot.lane.b32.xlu0 %v4288, 32
        %v4290 = vpop.permute.xlu0 %4289
        %vm4292 = vcmp.ge.s32.totalorder %v3938, 32
        %vm4293 = vcmp.lt.s32.totalorder %v3938, 56
        %vm4294 = vmand %vm4292, %vm4293
        %4295 = vst.msk [vmem:[#allocation4 + $0x2] sm:$0x1] %vm4294, %v4290
        %v4296 = vcombine.high %v4281, %v4281
        %v4298 = vunpack.c.l.s4 1966171168
        %v4299 = vunpack.c.0.s8 %v4298
        %v4300 = vlaneseq
        %v4301 = vshrl.u32 %v4300, 7
        %v4302 = vsub.s32 %v4299, %v4301
        %v4303 = vrot.slane %v4296, %v4302
        %4304 = vrot.lane.b32.xlu0 %v4303, 56
        %v4305 = vpop.permute.xlu0 %4304
        %vm4307 = vcmp.ge.s32.totalorder %v3938, 56
        %vm4308 = vcmp.lt.s32.totalorder %v3938, 80
        %vm4309 = vmand %vm4307, %vm4308
        %4310 = vst.msk [vmem:[#allocation4 + $0x2] sm:$0x1] %vm4309, %v4305
        %v4311 = vcombine.high %v4288, %v4288
        %4312 = vrot.lane.b32.xlu0 %v4311, 80
        %v4313 = vpop.permute.xlu0 %4312
        %vm4315 = vcmp.ge.s32.totalorder %v3938, 80
        %vm4316 = vcmp.lt.s32.totalorder %v3938, 104
        %vm4317 = vmand %vm4315, %vm4316
        %4318 = vst.msk [vmem:[#allocation4 + $0x2] sm:$0x1] %vm4317, %v4313
        %v4319 = vcombine.high %v4303, %v4303
        %4320 = vrot.lane.b32.xlu0 %v4319, 104
        %v4321 = vpop.permute.xlu0 %4320
        %vm4323 = vcmp.ge.s32.totalorder %v3938, 104
        %vm4324 = vcmp.lt.s32.totalorder %v3938, 128
        %vm4325 = vmand %vm4323, %vm4324
        %4326 = vst.msk [vmem:[#allocation4 + $0x2] sm:$0x1] %vm4325, %v4321
        %v4327 = vcombine.high %v4271, %v4271
        %v4329 = vunpack.c.l.s4 1966171168
        %v4330 = vunpack.c.0.s8 %v4329
        %v4331 = vlaneseq
        %v4332 = vshrl.u32 %v4331, 7
        %v4333 = vsub.s32 %v4330, %v4332
        %v4334 = vrot.slane %v4327, %v4333
        %v4336 = vunpack.c.l.s4 1966171168
        %v4337 = vunpack.c.0.s8 %v4336
        %v4338 = vlaneseq
        %v4339 = vshrl.u32 %v4338, 7
        %v4340 = vsub.s32 %v4337, %v4339
        %v4341 = vrot.slane %v4334, %v4340
        %4343 = vst.msk [vmem:[#allocation4 + $0x3] sm:$0x1] %vm3941, %v4341
        %v4344 = vcombine.high %v4334, %v4334
        %v4346 = vunpack.c.l.s4 1966171168
        %v4347 = vunpack.c.0.s8 %v4346
        %v4348 = vlaneseq
        %v4349 = vshrl.u32 %v4348, 7
        %v4350 = vsub.s32 %v4347, %v4349
        %v4351 = vrot.slane %v4344, %v4350
        %4352 = vrot.lane.b32.xlu0 %v4351, 24
        %v4353 = vpop.permute.xlu0 %4352
        %4355 = vst.msk [vmem:[#allocation4 + $0x3] sm:$0x1] %vm3971, %v4353
        %s4356 = scalar_lea.vmem [#allocation3], 48
        %v4357 = vld [vmem:[%s4356] sm:$0x3f]
        %v4358 = vld [vmem:[%s4356 + $0x8] sm:$0x3f]
        %v4360 = vsel %vm3864, %v4358, 0
        %4362 = vmatprep.subr.mxu0 0.0
        %4363 = vmatpush1.msra.mxu0 %v3831
        %4364 = vmatprep.subr.mxu0 0.0
        %4365 = vmatpush1.msra.mxu0 %v3832
        %4366 = vmatprep.subr.mxu0 0.0
        %4367 = vmatpush1.msra.mxu0 %v3833
        %4368 = vmatprep.subr.mxu0 0.0
        %4369 = vmatpush1.msra.mxu0 %v3834
        %4370 = vmatprep.subr.mxu0 0.0
        %4371 = vmatpush1.msra.mxu0 %v3835
        %4372 = vmatprep.subr.mxu0 0.0
        %4373 = vmatpush1.msra.mxu0 %v3836
        %4374 = vmatprep.subr.mxu0 0.0
        %4375 = vmatpush1.msra.mxu0 %v3837
        %4376 = vmatprep.subr.mxu0 0.0
        %4377 = vmatpush1.msra.mxu0 %v3838
        %4378 = vmatprep.subr.mxu0 0.0
        %4379 = vmatpush1.msra.mxu0 %v3839
        %4380 = vmatprep.subr.mxu0 0.0
        %4381 = vmatpush1.msra.mxu0 %v3840
        %4382 = vmatprep.subr.mxu0 0.0
        %4383 = vmatpush1.msra.mxu0 %v3841
        %4384 = vmatprep.subr.mxu0 0.0
        %4385 = vmatpush1.msra.mxu0 %v3842
        %4386 = vmatprep.subr.mxu0 0.0
        %4387 = vmatpush1.msra.mxu0 %v3843
        %4388 = vmatprep.subr.mxu0 0.0
        %4389 = vmatpush1.msra.mxu0 %v3844
        %4390 = vmatprep.subr.mxu0 0.0
        %4391 = vmatpush1.msra.mxu0 %v3845
        %4392 = vmatprep.subr.mxu0 0.0
        %4393 = vmatpush1.msra.mxu0 %v3846
        %4394 = vmatprep.subr.mxu0 0.0
        %4395 = vmatpush1.msra.mxu0 %v3847
        %4396 = vmatprep.subr.mxu0 0.0
        %4397 = vmatpush1.msra.mxu0 %v3848
        %4398 = vmatprep.subr.mxu0 0.0
        %4399 = vmatpush1.msra.mxu0 %v3849
        %4400 = vmatprep.subr.mxu0 0.0
        %4401 = vmatpush1.msra.mxu0 %v3850
        %4402 = vmatprep.subr.mxu0 0.0
        %4403 = vmatpush1.msra.mxu0 %v3851
        %4404 = vmatprep.subr.mxu0 0.0
        %4405 = vmatpush1.msra.mxu0 %v3852
        %4406 = vmatprep.subr.mxu0 0.0
        %4407 = vmatpush1.msra.mxu0 %v3853
        %4408 = vmatprep.subr.mxu0 0.0
        %4409 = vmatpush1.msra.mxu0 %v3854
        %4410 = vmatprep.subr.mxu0 0.0
        %4411 = vmatpush1.msra.mxu0 0.0
        %4412 = vmatprep.subr.mxu0 0.0
        %4413 = vmatpush1.msra.mxu0 0.0
        %4414 = vmatprep.subr.mxu0 0.0
        %4415 = vmatpush1.msra.mxu0 0.0
        %4416 = vmatprep.subr.mxu0 0.0
        %4417 = vmatpush1.msra.mxu0 0.0
        %4418 = vmatprep.subr.mxu0 0.0
        %4419 = vmatpush1.msra.mxu0 0.0
        %4420 = vmatprep.subr.mxu0 0.0
        %4421 = vmatpush1.msra.mxu0 0.0
        %4422 = vmatprep.subr.mxu0 0.0
        %4423 = vmatpush1.msra.mxu0 0.0
        %4424 = vmatprep.subr.mxu0 0.0
        %4425 = vmatpush1.msra.mxu0 0.0
        %4426 = vmatprep.mubr.f32.mxu0 %v4360
        %4427 = vmatmul.mubr.f32.gmra.mrb[0].mxu0 %v4357
        %v4428 = vpop.f32.mrb[0].mxu0
        %v4429 = vadd.f32 %v3862, %v4428
        %v4430 = vpop.f32.mrb[0].mxu0
        %4431 = vdwg.mxu0
        %v4434 = vunpack.c.l.s4 1966171168
        %v4435 = vunpack.c.0.s8 %v4434
        %v4436 = vlaneseq
        %v4437 = vshrl.u32 %v4436, 7
        %v4438 = vsub.s32 %v4435, %v4437
        %v4439 = vrot.slane %v4429, %v4438
        %v4441 = vunpack.c.l.s4 1966171168
        %v4442 = vunpack.c.0.s8 %v4441
        %v4443 = vlaneseq
        %v4444 = vshrl.u32 %v4443, 7
        %v4445 = vsub.s32 %v4442, %v4444
        %v4446 = vrot.slane %v4439, %v4445
        %4447 = vrot.lane.b32.xlu0 %v4446, 48
        %v4448 = vpop.permute.xlu0 %4447
        %4450 = vst.msk [vmem:[#allocation4 + $0x3] sm:$0x1] %vm3979, %v4448
        %v4451 = vcombine.high %v4439, %v4439
        %v4453 = vunpack.c.l.s4 1966171168
        %v4454 = vunpack.c.0.s8 %v4453
        %v4455 = vlaneseq
        %v4456 = vshrl.u32 %v4455, 7
        %v4457 = vsub.s32 %v4454, %v4456
        %v4458 = vrot.slane %v4451, %v4457
        %4459 = vrot.lane.b32.xlu0 %v4458, 72
        %v4460 = vpop.permute.xlu0 %4459
        %4462 = vst.msk [vmem:[#allocation4 + $0x3] sm:$0x1] %vm3987, %v4460
        %v4463 = vcombine.high %v4446, %v4446
        %4464 = vrot.lane.b32.xlu0 %v4463, 96
        %v4465 = vpop.permute.xlu0 %4464
        %4467 = vst.msk [vmem:[#allocation4 + $0x3] sm:$0x1] %vm4009, %v4465
        %v4468 = vcombine.high %v4458, %v4458
        %4469 = vrot.lane.b32.xlu0 %v4468, 120
        %v4470 = vpop.permute.xlu0 %4469
        %v4471 = vrot.slane %v4470, 7
        %v4472 = vsel %vm4022, %v4471, %v4470
        %4474 = vst.msk [vmem:[#allocation4 + $0x3] sm:$0x3] %vm4027, %v4472
        %v4475 = vcombine.high %v4429, %v4429
        %v4477 = vunpack.c.l.s4 1966171168
        %v4478 = vunpack.c.0.s8 %v4477
        %v4479 = vlaneseq
        %v4480 = vshrl.u32 %v4479, 7
        %v4481 = vsub.s32 %v4478, %v4480
        %v4482 = vrot.slane %v4475, %v4481
        %v4484 = vunpack.c.l.s4 1966171168
        %v4485 = vunpack.c.0.s8 %v4484
        %v4486 = vlaneseq
        %v4487 = vshrl.u32 %v4486, 7
        %v4488 = vsub.s32 %v4485, %v4487
        %v4489 = vrot.slane %v4482, %v4488
        %4490 = vrot.lane.b32.xlu0 %v4489, 16
        %v4491 = vpop.permute.xlu0 %4490
        %4493 = vst.msk [vmem:[#allocation4 + $0x4] sm:$0x1] %vm4125, %v4491
        %v4494 = vcombine.high %v4482, %v4482
        %v4496 = vunpack.c.l.s4 1966171168
        %v4497 = vunpack.c.0.s8 %v4496
        %v4498 = vlaneseq
        %v4499 = vshrl.u32 %v4498, 7
        %v4500 = vsub.s32 %v4497, %v4499
        %v4501 = vrot.slane %v4494, %v4500
        %4502 = vrot.lane.b32.xlu0 %v4501, 40
        %v4503 = vpop.permute.xlu0 %4502
        %4505 = vst.msk [vmem:[#allocation4 + $0x4] sm:$0x1] %vm4140, %v4503
        %s4506 = scalar_lea.vmem [#allocation3], 64
        %v4507 = vld [vmem:[%s4506] sm:$0x3f]
        %v4508 = vld [vmem:[%s4506 + $0x8] sm:$0x3f]
        %v4510 = vsel %vm3864, %v4508, 0
        %4512 = vmatprep.subr.mxu0 0.0
        %4513 = vmatpush1.msra.mxu0 %v3831
        %4514 = vmatprep.subr.mxu0 0.0
        %4515 = vmatpush1.msra.mxu0 %v3832
        %4516 = vmatprep.subr.mxu0 0.0
        %4517 = vmatpush1.msra.mxu0 %v3833
        %4518 = vmatprep.subr.mxu0 0.0
        %4519 = vmatpush1.msra.mxu0 %v3834
        %4520 = vmatprep.subr.mxu0 0.0
        %4521 = vmatpush1.msra.mxu0 %v3835
        %4522 = vmatprep.subr.mxu0 0.0
        %4523 = vmatpush1.msra.mxu0 %v3836
        %4524 = vmatprep.subr.mxu0 0.0
        %4525 = vmatpush1.msra.mxu0 %v3837
        %4526 = vmatprep.subr.mxu0 0.0
        %4527 = vmatpush1.msra.mxu0 %v3838
        %4528 = vmatprep.subr.mxu0 0.0
        %4529 = vmatpush1.msra.mxu0 %v3839
        %4530 = vmatprep.subr.mxu0 0.0
        %4531 = vmatpush1.msra.mxu0 %v3840
        %4532 = vmatprep.subr.mxu0 0.0
        %4533 = vmatpush1.msra.mxu0 %v3841
        %4534 = vmatprep.subr.mxu0 0.0
        %4535 = vmatpush1.msra.mxu0 %v3842
        %4536 = vmatprep.subr.mxu0 0.0
        %4537 = vmatpush1.msra.mxu0 %v3843
        %4538 = vmatprep.subr.mxu0 0.0
        %4539 = vmatpush1.msra.mxu0 %v3844
        %4540 = vmatprep.subr.mxu0 0.0
        %4541 = vmatpush1.msra.mxu0 %v3845
        %4542 = vmatprep.subr.mxu0 0.0
        %4543 = vmatpush1.msra.mxu0 %v3846
        %4544 = vmatprep.subr.mxu0 0.0
        %4545 = vmatpush1.msra.mxu0 %v3847
        %4546 = vmatprep.subr.mxu0 0.0
        %4547 = vmatpush1.msra.mxu0 %v3848
        %4548 = vmatprep.subr.mxu0 0.0
        %4549 = vmatpush1.msra.mxu0 %v3849
        %4550 = vmatprep.subr.mxu0 0.0
        %4551 = vmatpush1.msra.mxu0 %v3850
        %4552 = vmatprep.subr.mxu0 0.0
        %4553 = vmatpush1.msra.mxu0 %v3851
        %4554 = vmatprep.subr.mxu0 0.0
        %4555 = vmatpush1.msra.mxu0 %v3852
        %4556 = vmatprep.subr.mxu0 0.0
        %4557 = vmatpush1.msra.mxu0 %v3853
        %4558 = vmatprep.subr.mxu0 0.0
        %4559 = vmatpush1.msra.mxu0 %v3854
        %4560 = vmatprep.subr.mxu0 0.0
        %4561 = vmatpush1.msra.mxu0 0.0
        %4562 = vmatprep.subr.mxu0 0.0
        %4563 = vmatpush1.msra.mxu0 0.0
        %4564 = vmatprep.subr.mxu0 0.0
        %4565 = vmatpush1.msra.mxu0 0.0
        %4566 = vmatprep.subr.mxu0 0.0
        %4567 = vmatpush1.msra.mxu0 0.0
        %4568 = vmatprep.subr.mxu0 0.0
        %4569 = vmatpush1.msra.mxu0 0.0
        %4570 = vmatprep.subr.mxu0 0.0
        %4571 = vmatpush1.msra.mxu0 0.0
        %4572 = vmatprep.subr.mxu0 0.0
        %4573 = vmatpush1.msra.mxu0 0.0
        %4574 = vmatprep.subr.mxu0 0.0
        %4575 = vmatpush1.msra.mxu0 0.0
        %4576 = vmatprep.mubr.f32.mxu0 %v4510
        %4577 = vmatmul.mubr.f32.gmra.mrb[0].mxu0 %v4507
        %v4578 = vpop.f32.mrb[0].mxu0
        %v4579 = vadd.f32 %v3862, %v4578
        %v4580 = vpop.f32.mrb[0].mxu0
        %4581 = vdwg.mxu0
        %v4584 = vunpack.c.l.s4 1966171168
        %v4585 = vunpack.c.0.s8 %v4584
        %v4586 = vlaneseq
        %v4587 = vshrl.u32 %v4586, 7
        %v4588 = vsub.s32 %v4585, %v4587
        %v4589 = vrot.slane %v4579, %v4588
        %v4591 = vunpack.c.l.s4 1966171168
        %v4592 = vunpack.c.0.s8 %v4591
        %v4593 = vlaneseq
        %v4594 = vshrl.u32 %v4593, 7
        %v4595 = vsub.s32 %v4592, %v4594
        %v4596 = vrot.slane %v4589, %v4595
        %4597 = vrot.lane.b32.xlu0 %v4596, 64
        %v4598 = vpop.permute.xlu0 %4597
        %4600 = vst.msk [vmem:[#allocation4 + $0x4] sm:$0x1] %vm4148, %v4598
        %v4601 = vcombine.high %v4589, %v4589
        %v4603 = vunpack.c.l.s4 1966171168
        %v4604 = vunpack.c.0.s8 %v4603
        %v4605 = vlaneseq
        %v4606 = vshrl.u32 %v4605, 7
        %v4607 = vsub.s32 %v4604, %v4606
        %v4608 = vrot.slane %v4601, %v4607
        %4609 = vrot.lane.b32.xlu0 %v4608, 88
        %v4610 = vpop.permute.xlu0 %4609
        %4612 = vst.msk [vmem:[#allocation4 + $0x4] sm:$0x1] %vm4156, %v4610
        %v4613 = vcombine.high %v4596, %v4596
        %4614 = vrot.lane.b32.xlu0 %v4613, 112
        %v4615 = vpop.permute.xlu0 %4614
        %v4616 = vrot.slane %v4615, 7
        %v4617 = vsel %vm4176, %v4616, %v4615
        %4619 = vst.msk [vmem:[#allocation4 + $0x4] sm:$0x3] %vm4181, %v4617
        %v4620 = vcombine.high %v4608, %v4608
        %4621 = vrot.lane.b32.xlu0 %v4620, 8
        %v4622 = vpop.permute.xlu0 %4621
        %4624 = vst.msk [vmem:[#allocation4 + $0x5] sm:$0x1] %vm4196, %v4622
        %v4625 = vcombine.high %v4579, %v4579
        %v4627 = vunpack.c.l.s4 1966171168
        %v4628 = vunpack.c.0.s8 %v4627
        %v4629 = vlaneseq
        %v4630 = vshrl.u32 %v4629, 7
        %v4631 = vsub.s32 %v4628, %v4630
        %v4632 = vrot.slane %v4625, %v4631
        %v4634 = vunpack.c.l.s4 1966171168
        %v4635 = vunpack.c.0.s8 %v4634
        %v4636 = vlaneseq
        %v4637 = vshrl.u32 %v4636, 7
        %v4638 = vsub.s32 %v4635, %v4637
        %v4639 = vrot.slane %v4632, %v4638
        %4640 = vrot.lane.b32.xlu0 %v4639, 32
        %v4641 = vpop.permute.xlu0 %4640
        %4643 = vst.msk [vmem:[#allocation4 + $0x5] sm:$0x1] %vm4294, %v4641
        %v4644 = vcombine.high %v4632, %v4632
        %v4646 = vunpack.c.l.s4 1966171168
        %v4647 = vunpack.c.0.s8 %v4646
        %v4648 = vlaneseq
        %v4649 = vshrl.u32 %v4648, 7
        %v4650 = vsub.s32 %v4647, %v4649
        %v4651 = vrot.slane %v4644, %v4650
        %4652 = vrot.lane.b32.xlu0 %v4651, 56
        %v4653 = vpop.permute.xlu0 %4652
        %4655 = vst.msk [vmem:[#allocation4 + $0x5] sm:$0x1] %vm4309, %v4653
        %s4656 = scalar_lea.vmem [#allocation3], 80
        %v4657 = vld [vmem:[%s4656] sm:$0x3f]
        %v4658 = vld [vmem:[%s4656 + $0x8] sm:$0x3f]
        %v4660 = vsel %vm3864, %v4658, 0
        %4662 = vmatprep.subr.mxu0 0.0
        %4663 = vmatpush1.msra.mxu0 %v3831
        %4664 = vmatprep.subr.mxu0 0.0
        %4665 = vmatpush1.msra.mxu0 %v3832
        %4666 = vmatprep.subr.mxu0 0.0
        %4667 = vmatpush1.msra.mxu0 %v3833
        %4668 = vmatprep.subr.mxu0 0.0
        %4669 = vmatpush1.msra.mxu0 %v3834
        %4670 = vmatprep.subr.mxu0 0.0
        %4671 = vmatpush1.msra.mxu0 %v3835
        %4672 = vmatprep.subr.mxu0 0.0
        %4673 = vmatpush1.msra.mxu0 %v3836
        %4674 = vmatprep.subr.mxu0 0.0
        %4675 = vmatpush1.msra.mxu0 %v3837
        %4676 = vmatprep.subr.mxu0 0.0
        %4677 = vmatpush1.msra.mxu0 %v3838
        %4678 = vmatprep.subr.mxu0 0.0
        %4679 = vmatpush1.msra.mxu0 %v3839
        %4680 = vmatprep.subr.mxu0 0.0
        %4681 = vmatpush1.msra.mxu0 %v3840
        %4682 = vmatprep.subr.mxu0 0.0
        %4683 = vmatpush1.msra.mxu0 %v3841
        %4684 = vmatprep.subr.mxu0 0.0
        %4685 = vmatpush1.msra.mxu0 %v3842
        %4686 = vmatprep.subr.mxu0 0.0
        %4687 = vmatpush1.msra.mxu0 %v3843
        %4688 = vmatprep.subr.mxu0 0.0
        %4689 = vmatpush1.msra.mxu0 %v3844
        %4690 = vmatprep.subr.mxu0 0.0
        %4691 = vmatpush1.msra.mxu0 %v3845
        %4692 = vmatprep.subr.mxu0 0.0
        %4693 = vmatpush1.msra.mxu0 %v3846
        %4694 = vmatprep.subr.mxu0 0.0
        %4695 = vmatpush1.msra.mxu0 %v3847
        %4696 = vmatprep.subr.mxu0 0.0
        %4697 = vmatpush1.msra.mxu0 %v3848
        %4698 = vmatprep.subr.mxu0 0.0
        %4699 = vmatpush1.msra.mxu0 %v3849
        %4700 = vmatprep.subr.mxu0 0.0
        %4701 = vmatpush1.msra.mxu0 %v3850
        %4702 = vmatprep.subr.mxu0 0.0
        %4703 = vmatpush1.msra.mxu0 %v3851
        %4704 = vmatprep.subr.mxu0 0.0
        %4705 = vmatpush1.msra.mxu0 %v3852
        %4706 = vmatprep.subr.mxu0 0.0
        %4707 = vmatpush1.msra.mxu0 %v3853
        %4708 = vmatprep.subr.mxu0 0.0
        %4709 = vmatpush1.msra.mxu0 %v3854
        %4710 = vmatprep.subr.mxu0 0.0
        %4711 = vmatpush1.msra.mxu0 0.0
        %4712 = vmatprep.subr.mxu0 0.0
        %4713 = vmatpush1.msra.mxu0 0.0
        %4714 = vmatprep.subr.mxu0 0.0
        %4715 = vmatpush1.msra.mxu0 0.0
        %4716 = vmatprep.subr.mxu0 0.0
        %4717 = vmatpush1.msra.mxu0 0.0
        %4718 = vmatprep.subr.mxu0 0.0
        %4719 = vmatpush1.msra.mxu0 0.0
        %4720 = vmatprep.subr.mxu0 0.0
        %4721 = vmatpush1.msra.mxu0 0.0
        %4722 = vmatprep.subr.mxu0 0.0
        %4723 = vmatpush1.msra.mxu0 0.0
        %4724 = vmatprep.subr.mxu0 0.0
        %4725 = vmatpush1.msra.mxu0 0.0
        %4726 = vmatprep.mubr.f32.mxu0 %v4660
        %4727 = vmatmul.mubr.f32.gmra.mrb[0].mxu0 %v4657
        %v4728 = vpop.f32.mrb[0].mxu0
        %v4729 = vadd.f32 %v3862, %v4728
        %v4730 = vpop.f32.mrb[0].mxu0
        %4731 = vdwg.mxu0
        %v4734 = vunpack.c.l.s4 1966171168
        %v4735 = vunpack.c.0.s8 %v4734
        %v4736 = vlaneseq
        %v4737 = vshrl.u32 %v4736, 7
        %v4738 = vsub.s32 %v4735, %v4737
        %v4739 = vrot.slane %v4729, %v4738
        %v4741 = vunpack.c.l.s4 1966171168
        %v4742 = vunpack.c.0.s8 %v4741
        %v4743 = vlaneseq
        %v4744 = vshrl.u32 %v4743, 7
        %v4745 = vsub.s32 %v4742, %v4744
        %v4746 = vrot.slane %v4739, %v4745
        %4747 = vrot.lane.b32.xlu0 %v4746, 80
        %v4748 = vpop.permute.xlu0 %4747
        %4750 = vst.msk [vmem:[#allocation4 + $0x5] sm:$0x1] %vm4317, %v4748
        %v4751 = vcombine.high %v4739, %v4739
        %v4753 = vunpack.c.l.s4 1966171168
        %v4754 = vunpack.c.0.s8 %v4753
        %v4755 = vlaneseq
        %v4756 = vshrl.u32 %v4755, 7
        %v4757 = vsub.s32 %v4754, %v4756
        %v4758 = vrot.slane %v4751, %v4757
        %4759 = vrot.lane.b32.xlu0 %v4758, 104
        %v4760 = vpop.permute.xlu0 %4759
        %4762 = vst.msk [vmem:[#allocation4 + $0x5] sm:$0x1] %vm4325, %v4760
        %v4763 = vcombine.high %v4746, %v4746
        %4765 = vst.msk [vmem:[#allocation4 + $0x6] sm:$0x1] %vm3941, %v4763
        %v4766 = vcombine.high %v4758, %v4758
        %4767 = vrot.lane.b32.xlu0 %v4766, 24
        %v4768 = vpop.permute.xlu0 %4767
        %4770 = vst.msk [vmem:[#allocation4 + $0x6] sm:$0x1] %vm3971, %v4768
        %v4771 = vcombine.high %v4729, %v4729
        %v4773 = vunpack.c.l.s4 1966171168
        %v4774 = vunpack.c.0.s8 %v4773
        %v4775 = vlaneseq
        %v4776 = vshrl.u32 %v4775, 7
        %v4777 = vsub.s32 %v4774, %v4776
        %v4778 = vrot.slane %v4771, %v4777
        %v4780 = vunpack.c.l.s4 1966171168
        %v4781 = vunpack.c.0.s8 %v4780
        %v4782 = vlaneseq
        %v4783 = vshrl.u32 %v4782, 7
        %v4784 = vsub.s32 %v4781, %v4783
        %v4785 = vrot.slane %v4778, %v4784
        %4786 = vrot.lane.b32.xlu0 %v4785, 48
        %v4787 = vpop.permute.xlu0 %4786
        %4789 = vst.msk [vmem:[#allocation4 + $0x6] sm:$0x1] %vm3979, %v4787
        %v4790 = vcombine.high %v4778, %v4778
        %v4792 = vunpack.c.l.s4 1966171168
        %v4793 = vunpack.c.0.s8 %v4792
        %v4794 = vlaneseq
        %v4795 = vshrl.u32 %v4794, 7
        %v4796 = vsub.s32 %v4793, %v4795
        %v4797 = vrot.slane %v4790, %v4796
        %4798 = vrot.lane.b32.xlu0 %v4797, 72
        %v4799 = vpop.permute.xlu0 %4798
        %4801 = vst.msk [vmem:[#allocation4 + $0x6] sm:$0x1] %vm3987, %v4799
        %v4802 = vld [vmem:[#allocation4] sm:$0x7f]
        %v4803 = vld [vmem:[%s5] sm:$0xff]
        %v4804 = vld [vmem:[%s5 + $0x8] sm:$0xff]
        %v4805 = vld [vmem:[%s5 + $0x10] sm:$0xff]
        %v4806 = vld [vmem:[%s5 + $0x18] sm:$0xff]
        %v4807 = vld [vmem:[%s5 + $0x20] sm:$0xff]
        %v4808 = vld [vmem:[%s5 + $0x28] sm:$0xff]
        %v4809 = vld [vmem:[%s5 + $0x30] sm:$0xff]
        %v4810 = vld [vmem:[%s5 + $0x38] sm:$0xff]
        %v4811 = vld [vmem:[%s5 + $0x40] sm:$0xff]
        %v4812 = vld [vmem:[%s5 + $0x48] sm:$0xff]
        %v4813 = vld [vmem:[%s5 + $0x50] sm:$0xff]
        %v4814 = vld [vmem:[%s5 + $0x58] sm:$0xff]
        %v4815 = vld [vmem:[%s5 + $0x60] sm:$0xff]
        %v4816 = vld [vmem:[%s5 + $0x68] sm:$0xff]
        %v4817 = vld [vmem:[%s5 + $0x70] sm:$0xff]
        %v4818 = vld [vmem:[%s5 + $0x78] sm:$0xff]
        %v4819 = vld [vmem:[%s5 + $0x80] sm:$0xff]
        %v4820 = vld [vmem:[%s5 + $0x88] sm:$0xff]
        %v4821 = vld [vmem:[%s5 + $0x90] sm:$0xff]
        %v4822 = vld [vmem:[%s5 + $0x98] sm:$0xff]
        %v4823 = vld [vmem:[%s5 + $0xa0] sm:$0xff]
        %v4824 = vld [vmem:[%s5 + $0xa8] sm:$0xff]
        %v4825 = vld [vmem:[%s5 + $0xb0] sm:$0xff]
        %v4826 = vld [vmem:[%s5 + $0xb8] sm:$0xff]
        %v4827 = vld [vmem:[%s5 + $0xc0] sm:$0xff]
        %v4828 = vld [vmem:[%s5 + $0xc8] sm:$0xff]
        %v4829 = vld [vmem:[%s5 + $0xd0] sm:$0xff]
        %v4830 = vld [vmem:[%s5 + $0xd8] sm:$0xff]
        %v4831 = vld [vmem:[%s5 + $0xe0] sm:$0xff]
        %v4832 = vld [vmem:[%s5 + $0xe8] sm:$0xff]
        %v4833 = vld [vmem:[%s5 + $0xf0] sm:$0xff]
        %v4834 = vld [vmem:[%s5 + $0xf8] sm:$0xff]
        %v4835 = vld [vmem:[%s5 + $0x100] sm:$0xff]
        %v4836 = vld [vmem:[%s5 + $0x108] sm:$0xff]
        %v4837 = vld [vmem:[%s5 + $0x110] sm:$0xff]
        %v4838 = vld [vmem:[%s5 + $0x118] sm:$0xff]
        %v4839 = vld [vmem:[%s5 + $0x120] sm:$0xff]
        %v4840 = vld [vmem:[%s5 + $0x128] sm:$0xff]
        %v4841 = vld [vmem:[%s5 + $0x130] sm:$0xff]
        %v4842 = vld [vmem:[%s5 + $0x138] sm:$0xff]
        %v4843 = vld [vmem:[%s5 + $0x140] sm:$0xff]
        %v4844 = vld [vmem:[%s5 + $0x148] sm:$0xff]
        %v4845 = vld [vmem:[%s5 + $0x150] sm:$0xff]
        %v4846 = vld [vmem:[%s5 + $0x158] sm:$0xff]
        %v4847 = vld [vmem:[%s5 + $0x160] sm:$0xff]
        %v4848 = vld [vmem:[%s5 + $0x168] sm:$0xff]
        %v4849 = vld [vmem:[%s5 + $0x170] sm:$0xff]
        %v4850 = vld [vmem:[%s5 + $0x178] sm:$0xff]
        %v4851 = vld [vmem:[%s5 + $0x180] sm:$0xff]
        %v4852 = vld [vmem:[%s5 + $0x188] sm:$0xff]
        %v4853 = vld [vmem:[%s5 + $0x190] sm:$0xff]
        %v4854 = vld [vmem:[%s5 + $0x198] sm:$0xff]
        %v4855 = vld [vmem:[%s5 + $0x1a0] sm:$0xff]
        %v4856 = vld [vmem:[%s5 + $0x1a8] sm:$0xff]
        %v4857 = vld [vmem:[%s5 + $0x1b0] sm:$0xff]
        %v4858 = vld [vmem:[%s5 + $0x1b8] sm:$0xff]
        %v4859 = vld [vmem:[%s5 + $0x1c0] sm:$0xff]
        %v4860 = vld [vmem:[%s5 + $0x1c8] sm:$0xff]
        %v4861 = vld [vmem:[%s5 + $0x1d0] sm:$0xff]
        %v4862 = vld [vmem:[%s5 + $0x1d8] sm:$0xff]
        %v4863 = vld [vmem:[%s5 + $0x1e0] sm:$0xff]
        %v4864 = vld [vmem:[%s5 + $0x1e8] sm:$0xff]
        %v4865 = vld [vmem:[%s5 + $0x1f0] sm:$0xff]
        %v4866 = vld [vmem:[%s5 + $0x1f8] sm:$0xff]
        %v4867 = vld [vmem:[%s5 + $0x200] sm:$0xff]
        %v4868 = vld [vmem:[%s5 + $0x208] sm:$0xff]
        %v4869 = vld [vmem:[%s5 + $0x210] sm:$0xff]
        %v4870 = vld [vmem:[%s5 + $0x218] sm:$0xff]
        %v4871 = vld [vmem:[%s5 + $0x220] sm:$0xff]
        %v4872 = vld [vmem:[%s5 + $0x228] sm:$0xff]
        %v4873 = vld [vmem:[%s5 + $0x230] sm:$0xff]
        %v4874 = vld [vmem:[%s5 + $0x238] sm:$0xff]
        %v4875 = vld [vmem:[%s5 + $0x240] sm:$0xff]
        %v4876 = vld [vmem:[%s5 + $0x248] sm:$0xff]
        %v4877 = vld [vmem:[%s5 + $0x250] sm:$0xff]
        %v4878 = vld [vmem:[%s5 + $0x258] sm:$0xff]
        %v4879 = vld [vmem:[%s5 + $0x260] sm:$0xff]
        %v4880 = vld [vmem:[%s5 + $0x268] sm:$0xff]
        %v4881 = vld [vmem:[%s5 + $0x270] sm:$0xff]
        %v4882 = vld [vmem:[%s5 + $0x278] sm:$0xff]
        %v4883 = vld [vmem:[%s5 + $0x280] sm:$0xff]
        %v4884 = vld [vmem:[%s5 + $0x288] sm:$0xff]
        %v4885 = vld [vmem:[%s5 + $0x290] sm:$0xff]
        %v4886 = vld [vmem:[%s5 + $0x298] sm:$0xff]
        %v4887 = vld [vmem:[%s5 + $0x2a0] sm:$0xff]
        %v4888 = vld [vmem:[%s5 + $0x2a8] sm:$0xff]
        %v4889 = vld [vmem:[%s5 + $0x2b0] sm:$0xff]
        %v4890 = vld [vmem:[%s5 + $0x2b8] sm:$0xff]
        %v4891 = vld [vmem:[%s5 + $0x2c0] sm:$0xff]
        %v4892 = vld [vmem:[%s5 + $0x2c8] sm:$0xff]
        %v4893 = vld [vmem:[%s5 + $0x2d0] sm:$0xff]
        %v4894 = vld [vmem:[%s5 + $0x2d8] sm:$0xff]
        %v4895 = vld [vmem:[%s5 + $0x2e0] sm:$0xff]
        %v4896 = vld [vmem:[%s5 + $0x2e8] sm:$0xff]
        %v4897 = vld [vmem:[%s5 + $0x2f0] sm:$0xff]
        %v4898 = vld [vmem:[%s5 + $0x2f8] sm:$0xff]
        %v4899 = vld [vmem:[%s5 + $0x300] sm:$0xff]
        %v4900 = vld [vmem:[%s5 + $0x308] sm:$0xff]
        %v4901 = vld [vmem:[%s5 + $0x310] sm:$0xff]
        %v4902 = vld [vmem:[%s5 + $0x318] sm:$0xff]
        %v4903 = vld [vmem:[%s5 + $0x320] sm:$0xff]
        %v4904 = vld [vmem:[%s5 + $0x328] sm:$0xff]
        %v4905 = vld [vmem:[%s5 + $0x330] sm:$0xff]
        %v4906 = vld [vmem:[%s5 + $0x338] sm:$0xff]
        %v4907 = vld [vmem:[%s5 + $0x340] sm:$0xff]
        %v4908 = vld [vmem:[%s5 + $0x348] sm:$0xff]
        %v4909 = vld [vmem:[%s5 + $0x350] sm:$0xff]
        %v4910 = vld [vmem:[%s5 + $0x358] sm:$0xff]
        %v4911 = vld [vmem:[%s6] sm:$0x1]
        %v4913 = vlaneseq
        %v4914 = vshrl.u32 %v4913, 7
        %v4915 = vsub.s32 0, %v4914
        %v4916 = vrot.slane %v4802, %v4915
        %v4917 = vlaneseq
        %v4918 = vshrl.u32 %v4917, 7
        %v4919 = vsub.s32 1, %v4918
        %v4920 = vrot.slane %v4802, %v4919
        %v4921 = vlaneseq
        %v4922 = vshrl.u32 %v4921, 7
        %v4923 = vsub.s32 2, %v4922
        %v4924 = vrot.slane %v4802, %v4923
        %v4925 = vlaneseq
        %v4926 = vshrl.u32 %v4925, 7
        %v4927 = vsub.s32 3, %v4926
        %v4928 = vrot.slane %v4802, %v4927
        %v4929 = vlaneseq
        %v4930 = vshrl.u32 %v4929, 7
        %v4931 = vsub.s32 4, %v4930
        %v4932 = vrot.slane %v4802, %v4931
        %v4933 = vlaneseq
        %v4934 = vshrl.u32 %v4933, 7
        %v4935 = vsub.s32 5, %v4934
        %v4936 = vrot.slane %v4802, %v4935
        %v4937 = vlaneseq
        %v4938 = vshrl.u32 %v4937, 7
        %v4939 = vsub.s32 6, %v4938
        %v4940 = vrot.slane %v4802, %v4939
        %vm4947 = vcmask 785408
        %v4948 = vsel %vm4947, %v4940, 0
        %4950 = vmatprep.subr.mxu0 0.0
        %4951 = vmatpush1.msra.mxu0 %v4803
        %4952 = vmatprep.subr.mxu0 0.0
        %4953 = vmatpush1.msra.mxu0 %v4804
        %4954 = vmatprep.subr.mxu0 0.0
        %4955 = vmatpush1.msra.mxu0 %v4805
        %4956 = vmatprep.subr.mxu0 0.0
        %4957 = vmatpush1.msra.mxu0 %v4806
        %4958 = vmatprep.subr.mxu0 0.0
        %4959 = vmatpush1.msra.mxu0 %v4807
        %4960 = vmatprep.subr.mxu0 0.0
        %4961 = vmatpush1.msra.mxu0 %v4808
        %4962 = vmatprep.subr.mxu0 0.0
        %4963 = vmatpush1.msra.mxu0 %v4809
        %4964 = vmatprep.subr.mxu0 0.0
        %4965 = vmatpush1.msra.mxu0 %v4810
        %4966 = vmatprep.subr.mxu0 0.0
        %4967 = vmatpush1.msra.mxu0 %v4811
        %4968 = vmatprep.subr.mxu0 0.0
        %4969 = vmatpush1.msra.mxu0 %v4812
        %4970 = vmatprep.subr.mxu0 0.0
        %4971 = vmatpush1.msra.mxu0 %v4813
        %4972 = vmatprep.subr.mxu0 0.0
        %4973 = vmatpush1.msra.mxu0 %v4814
        %4974 = vmatprep.subr.mxu0 0.0
        %4975 = vmatpush1.msra.mxu0 %v4815
        %4976 = vmatprep.subr.mxu0 0.0
        %4977 = vmatpush1.msra.mxu0 %v4816
        %4978 = vmatprep.subr.mxu0 0.0
        %4979 = vmatpush1.msra.mxu0 %v4817
        %4980 = vmatprep.subr.mxu0 0.0
        %4981 = vmatpush1.msra.mxu0 %v4818
        %4982 = vmatprep.subr.mxu0 0.0
        %4983 = vmatpush1.msra.mxu0 %v4819
        %4984 = vmatprep.subr.mxu0 0.0
        %4985 = vmatpush1.msra.mxu0 %v4820
        %4986 = vmatprep.subr.mxu0 0.0
        %4987 = vmatpush1.msra.mxu0 %v4821
        %4988 = vmatprep.subr.mxu0 0.0
        %4989 = vmatpush1.msra.mxu0 %v4822
        %4990 = vmatprep.subr.mxu0 0.0
        %4991 = vmatpush1.msra.mxu0 %v4823
        %4992 = vmatprep.subr.mxu0 0.0
        %4993 = vmatpush1.msra.mxu0 %v4824
        %4994 = vmatprep.subr.mxu0 0.0
        %4995 = vmatpush1.msra.mxu0 %v4825
        %4996 = vmatprep.subr.mxu0 0.0
        %4997 = vmatpush1.msra.mxu0 %v4826
        %4998 = vmatprep.subr.mxu0 0.0
        %4999 = vmatpush1.msra.mxu0 %v4827
        %5000 = vmatprep.subr.mxu0 0.0
        %5001 = vmatpush1.msra.mxu0 %v4828
        %5002 = vmatprep.subr.mxu0 0.0
        %5003 = vmatpush1.msra.mxu0 %v4829
        %5004 = vmatprep.subr.mxu0 0.0
        %5005 = vmatpush1.msra.mxu0 %v4830
        %5006 = vmatprep.subr.mxu0 0.0
        %5007 = vmatpush1.msra.mxu0 %v4831
        %5008 = vmatprep.subr.mxu0 0.0
        %5009 = vmatpush1.msra.mxu0 %v4832
        %5010 = vmatprep.subr.mxu0 0.0
        %5011 = vmatpush1.msra.mxu0 %v4833
        %5012 = vmatprep.subr.mxu0 0.0
        %5013 = vmatpush1.msra.mxu0 %v4834
        %5014 = vmatprep.mubr.f32.mxu0 %v4920
        %5015 = vmatmul.mubr.f32.gmra.mrb[0].mxu0 %v4916
        %v5016 = vpop.f32.mrb[0].mxu0
        %v5017 = vadd.f32 %v4911, %v5016
        %v5018 = vpop.f32.mrb[0].mxu0
        %5019 = vdwg.mxu0
        %5020 = vmatprep.subr.mxu0 0.0
        %5021 = vmatpush1.msra.mxu0 %v4835
        %5022 = vmatprep.subr.mxu0 0.0
        %5023 = vmatpush1.msra.mxu0 %v4836
        %5024 = vmatprep.subr.mxu0 0.0
        %5025 = vmatpush1.msra.mxu0 %v4837
        %5026 = vmatprep.subr.mxu0 0.0
        %5027 = vmatpush1.msra.mxu0 %v4838
        %5028 = vmatprep.subr.mxu0 0.0
        %5029 = vmatpush1.msra.mxu0 %v4839
        %5030 = vmatprep.subr.mxu0 0.0
        %5031 = vmatpush1.msra.mxu0 %v4840
        %5032 = vmatprep.subr.mxu0 0.0
        %5033 = vmatpush1.msra.mxu0 %v4841
        %5034 = vmatprep.subr.mxu0 0.0
        %5035 = vmatpush1.msra.mxu0 %v4842
        %5036 = vmatprep.subr.mxu0 0.0
        %5037 = vmatpush1.msra.mxu0 %v4843
        %5038 = vmatprep.subr.mxu0 0.0
        %5039 = vmatpush1.msra.mxu0 %v4844
        %5040 = vmatprep.subr.mxu0 0.0
        %5041 = vmatpush1.msra.mxu0 %v4845
        %5042 = vmatprep.subr.mxu0 0.0
        %5043 = vmatpush1.msra.mxu0 %v4846
        %5044 = vmatprep.subr.mxu0 0.0
        %5045 = vmatpush1.msra.mxu0 %v4847
        %5046 = vmatprep.subr.mxu0 0.0
        %5047 = vmatpush1.msra.mxu0 %v4848
        %5048 = vmatprep.subr.mxu0 0.0
        %5049 = vmatpush1.msra.mxu0 %v4849
        %5050 = vmatprep.subr.mxu0 0.0
        %5051 = vmatpush1.msra.mxu0 %v4850
        %5052 = vmatprep.subr.mxu0 0.0
        %5053 = vmatpush1.msra.mxu0 %v4851
        %5054 = vmatprep.subr.mxu0 0.0
        %5055 = vmatpush1.msra.mxu0 %v4852
        %5056 = vmatprep.subr.mxu0 0.0
        %5057 = vmatpush1.msra.mxu0 %v4853
        %5058 = vmatprep.subr.mxu0 0.0
        %5059 = vmatpush1.msra.mxu0 %v4854
        %5060 = vmatprep.subr.mxu0 0.0
        %5061 = vmatpush1.msra.mxu0 %v4855
        %5062 = vmatprep.subr.mxu0 0.0
        %5063 = vmatpush1.msra.mxu0 %v4856
        %5064 = vmatprep.subr.mxu0 0.0
        %5065 = vmatpush1.msra.mxu0 %v4857
        %5066 = vmatprep.subr.mxu0 0.0
        %5067 = vmatpush1.msra.mxu0 %v4858
        %5068 = vmatprep.subr.mxu0 0.0
        %5069 = vmatpush1.msra.mxu0 %v4859
        %5070 = vmatprep.subr.mxu0 0.0
        %5071 = vmatpush1.msra.mxu0 %v4860
        %5072 = vmatprep.subr.mxu0 0.0
        %5073 = vmatpush1.msra.mxu0 %v4861
        %5074 = vmatprep.subr.mxu0 0.0
        %5075 = vmatpush1.msra.mxu0 %v4862
        %5076 = vmatprep.subr.mxu0 0.0
        %5077 = vmatpush1.msra.mxu0 %v4863
        %5078 = vmatprep.subr.mxu0 0.0
        %5079 = vmatpush1.msra.mxu0 %v4864
        %5080 = vmatprep.subr.mxu0 0.0
        %5081 = vmatpush1.msra.mxu0 %v4865
        %5082 = vmatprep.subr.mxu0 0.0
        %5083 = vmatpush1.msra.mxu0 %v4866
        %5084 = vmatprep.mubr.f32.mxu0 %v4928
        %5085 = vmatmul.mubr.f32.gmra.mrb[0].mxu0 %v4924
        %v5086 = vpop.f32.mrb[0].mxu0
        %v5087 = vadd.f32 %v5017, %v5086
        %v5088 = vpop.f32.mrb[0].mxu0
        %5089 = vdwg.mxu0
        %5090 = vmatprep.subr.mxu0 0.0
        %5091 = vmatpush1.msra.mxu0 %v4867
        %5092 = vmatprep.subr.mxu0 0.0
        %5093 = vmatpush1.msra.mxu0 %v4868
        %5094 = vmatprep.subr.mxu0 0.0
        %5095 = vmatpush1.msra.mxu0 %v4869
        %5096 = vmatprep.subr.mxu0 0.0
        %5097 = vmatpush1.msra.mxu0 %v4870
        %5098 = vmatprep.subr.mxu0 0.0
        %5099 = vmatpush1.msra.mxu0 %v4871
        %5100 = vmatprep.subr.mxu0 0.0
        %5101 = vmatpush1.msra.mxu0 %v4872
        %5102 = vmatprep.subr.mxu0 0.0
        %5103 = vmatpush1.msra.mxu0 %v4873
        %5104 = vmatprep.subr.mxu0 0.0
        %5105 = vmatpush1.msra.mxu0 %v4874
        %5106 = vmatprep.subr.mxu0 0.0
        %5107 = vmatpush1.msra.mxu0 %v4875
        %5108 = vmatprep.subr.mxu0 0.0
        %5109 = vmatpush1.msra.mxu0 %v4876
        %5110 = vmatprep.subr.mxu0 0.0
        %5111 = vmatpush1.msra.mxu0 %v4877
        %5112 = vmatprep.subr.mxu0 0.0
        %5113 = vmatpush1.msra.mxu0 %v4878
        %5114 = vmatprep.subr.mxu0 0.0
        %5115 = vmatpush1.msra.mxu0 %v4879
        %5116 = vmatprep.subr.mxu0 0.0
        %5117 = vmatpush1.msra.mxu0 %v4880
        %5118 = vmatprep.subr.mxu0 0.0
        %5119 = vmatpush1.msra.mxu0 %v4881
        %5120 = vmatprep.subr.mxu0 0.0
        %5121 = vmatpush1.msra.mxu0 %v4882
        %5122 = vmatprep.subr.mxu0 0.0
        %5123 = vmatpush1.msra.mxu0 %v4883
        %5124 = vmatprep.subr.mxu0 0.0
        %5125 = vmatpush1.msra.mxu0 %v4884
        %5126 = vmatprep.subr.mxu0 0.0
        %5127 = vmatpush1.msra.mxu0 %v4885
        %5128 = vmatprep.subr.mxu0 0.0
        %5129 = vmatpush1.msra.mxu0 %v4886
        %5130 = vmatprep.subr.mxu0 0.0
        %5131 = vmatpush1.msra.mxu0 %v4887
        %5132 = vmatprep.subr.mxu0 0.0
        %5133 = vmatpush1.msra.mxu0 %v4888
        %5134 = vmatprep.subr.mxu0 0.0
        %5135 = vmatpush1.msra.mxu0 %v4889
        %5136 = vmatprep.subr.mxu0 0.0
        %5137 = vmatpush1.msra.mxu0 %v4890
        %5138 = vmatprep.subr.mxu0 0.0
        %5139 = vmatpush1.msra.mxu0 %v4891
        %5140 = vmatprep.subr.mxu0 0.0
        %5141 = vmatpush1.msra.mxu0 %v4892
        %5142 = vmatprep.subr.mxu0 0.0
        %5143 = vmatpush1.msra.mxu0 %v4893
        %5144 = vmatprep.subr.mxu0 0.0
        %5145 = vmatpush1.msra.mxu0 %v4894
        %5146 = vmatprep.subr.mxu0 0.0
        %5147 = vmatpush1.msra.mxu0 %v4895
        %5148 = vmatprep.subr.mxu0 0.0
        %5149 = vmatpush1.msra.mxu0 %v4896
        %5150 = vmatprep.subr.mxu0 0.0
        %5151 = vmatpush1.msra.mxu0 %v4897
        %5152 = vmatprep.subr.mxu0 0.0
        %5153 = vmatpush1.msra.mxu0 %v4898
        %5154 = vmatprep.mubr.f32.mxu0 %v4936
        %5155 = vmatmul.mubr.f32.gmra.mrb[0].mxu0 %v4932
        %v5156 = vpop.f32.mrb[0].mxu0
        %v5157 = vadd.f32 %v5087, %v5156
        %v5158 = vpop.f32.mrb[0].mxu0
        %5159 = vdwg.mxu0
        %5160 = vmatprep.subr.mxu0 0.0
        %5161 = vmatpush1.msra.mxu0 %v4899
        %5162 = vmatprep.subr.mxu0 0.0
        %5163 = vmatpush1.msra.mxu0 %v4900
        %5164 = vmatprep.subr.mxu0 0.0
        %5165 = vmatpush1.msra.mxu0 %v4901
        %5166 = vmatprep.subr.mxu0 0.0
        %5167 = vmatpush1.msra.mxu0 %v4902
        %5168 = vmatprep.subr.mxu0 0.0
        %5169 = vmatpush1.msra.mxu0 %v4903
        %5170 = vmatprep.subr.mxu0 0.0
        %5171 = vmatpush1.msra.mxu0 %v4904
        %5172 = vmatprep.subr.mxu0 0.0
        %5173 = vmatpush1.msra.mxu0 %v4905
        %5174 = vmatprep.subr.mxu0 0.0
        %5175 = vmatpush1.msra.mxu0 %v4906
        %5176 = vmatprep.subr.mxu0 0.0
        %5177 = vmatpush1.msra.mxu0 %v4907
        %5178 = vmatprep.subr.mxu0 0.0
        %5179 = vmatpush1.msra.mxu0 %v4908
        %5180 = vmatprep.subr.mxu0 0.0
        %5181 = vmatpush1.msra.mxu0 %v4909
        %5182 = vmatprep.subr.mxu0 0.0
        %5183 = vmatpush1.msra.mxu0 %v4910
        %5184 = vmatprep.subr.mxu0 0.0
        %5185 = vmatpush1.msra.mxu0 0.0
        %5186 = vmatprep.subr.mxu0 0.0
        %5187 = vmatpush1.msra.mxu0 0.0
        %5188 = vmatprep.subr.mxu0 0.0
        %5189 = vmatpush1.msra.mxu0 0.0
        %5190 = vmatprep.subr.mxu0 0.0
        %5191 = vmatpush1.msra.mxu0 0.0
        %5192 = vmatprep.subr.mxu0 0.0
        %5193 = vmatpush1.msra.mxu0 0.0
        %5194 = vmatprep.subr.mxu0 0.0
        %5195 = vmatpush1.msra.mxu0 0.0
        %5196 = vmatprep.subr.mxu0 0.0
        %5197 = vmatpush1.msra.mxu0 0.0
        %5198 = vmatprep.subr.mxu0 0.0
        %5199 = vmatpush1.msra.mxu0 0.0
        %5200 = vmatprep.subr.mxu0 0.0
        %5201 = vmatpush1.msra.mxu0 0.0
        %5202 = vmatprep.subr.mxu0 0.0
        %5203 = vmatpush1.msra.mxu0 0.0
        %5204 = vmatprep.subr.mxu0 0.0
        %5205 = vmatpush1.msra.mxu0 0.0
        %5206 = vmatprep.subr.mxu0 0.0
        %5207 = vmatpush1.msra.mxu0 0.0
        %5208 = vmatprep.subr.mxu0 0.0
        %5209 = vmatpush1.msra.mxu0 0.0
        %5210 = vmatprep.subr.mxu0 0.0
        %5211 = vmatpush1.msra.mxu0 0.0
        %5212 = vmatprep.subr.mxu0 0.0
        %5213 = vmatpush1.msra.mxu0 0.0
        %5214 = vmatprep.subr.mxu0 0.0
        %5215 = vmatpush1.msra.mxu0 0.0
        %5216 = vmatprep.subr.mxu0 0.0
        %5217 = vmatpush1.msra.mxu0 0.0
        %5218 = vmatprep.subr.mxu0 0.0
        %5219 = vmatpush1.msra.mxu0 0.0
        %5220 = vmatprep.subr.mxu0 0.0
        %5221 = vmatpush1.msra.mxu0 0.0
        %5222 = vmatprep.subr.mxu0 0.0
        %5223 = vmatpush1.msra.mxu0 0.0
        %5224 = vmatprep.mubr.f32.mxu0 0.0
        %5225 = vmatmul.mubr.f32.gmra.mrb[0].mxu0 %v4948
        %v5226 = vpop.f32.mrb[0].mxu0
        %v5227 = vadd.f32 %v5157, %v5226
        %v5228 = vpop.f32.mrb[0].mxu0
        %5229 = vdwg.mxu0
        %5230 = vst [vmem:[%s270] sm:$0x1] %v5227
        %s5231 = sand.u32 %s181, 1
        %s5232 = scalar_lea.sflag [#allocation6], %s5231
        %s5233 = sand.u32 %s181, 1
        %s5234 = scalar_lea.vmem [#allocation5], %s5233
        // Predicated region
        $region49: #{encoder_forward.1} parent=47 // pred_check
          %p5235 = pneg %p191
        $region50: #{encoder_forward.1} parent=47 // pred_check_branch
          %5237 = sbr.rel (%p5235) target = $region52
        $region51: #{encoder_forward.1} parent=47 // pred_region
          %s5239 = ssub.s32 16, 16
          %5240 = vsyncadd %s5232, %s5239
          %s5241 = smul.addr %s21, 16
          %s5242 = scalar_lea.hbm %s7, %s5241
          %s5244 = sshll.u32 %s5234, 4
          %s5245 = int_to_ptr.vmem [resolvable:$true] %s5244
          %5247 = dma.vmem_to_hbm [thread:$0]  %s5245, 16, %s5242, %s5232
        $region52: #{encoder_forward.1} parent=47 // pred_fallthru
          _
      $region48: #{encoder_forward.1} parent=5 // pred_fallthru
        _
      %p5248 = scmp.le.s32.totalorder 2, %s16
      // Predicated region
      $region53: #{encoder_forward.1} parent=5 // pred_check
        %p5249 = pneg %p5248
      $region54: #{encoder_forward.1} parent=5 // pred_check_branch
        %5251 = sbr.rel (%p5249) target = $region56
      $region55: #{encoder_forward.1} parent=5 // pred_region
        %s5252 = ssub.s32 %s16, 2
        // Predicated region
        $region57: #{encoder_forward.1} parent=55 // pred_check
          %p5253 = pneg %p197
        $region58: #{encoder_forward.1} parent=55 // pred_check_branch
          %5255 = sbr.rel (%p5253) target = $region60
        $region59: #{encoder_forward.1} parent=55 // pred_region
          %s5256 = sand.u32 %s182, 1
          %s5257 = scalar_lea.sflag [#allocation6], %s5256
          %s5258 = sand.u32 %s182, 1
          %s5259 = scalar_lea.vmem [#allocation5], %s5258
          %5260 = dma.done %s5257, 16
        $region60: #{encoder_forward.1} parent=55 // pred_fallthru
          _
      $region56: #{encoder_forward.1} parent=5 // pred_fallthru
        _
    $region6: #{encoder_forward.1} parent=1 // loop_footer
      %s20 = sadd.s32 1, %s16
    $region7: #{encoder_forward.1} parent=1 // loop_footer_branch
      %15 = sbr.rel target = $region3
    $region8: #{encoder_forward.1} parent=1 // loop_exit
      _
    %5261 = vsyncpa [#allocation6], 1
    %s5262 = scalar_lea.sflag [#allocation6], 1
    %5263 = vsyncpa %s5262, 1

</llo_original>
